<compile_context>
chip_gen: v7x
topology: tpu7x:2x2x1
jax: 0.10.0
libtpu: 0.0.40
codegen_flags: <defaults>
</compile_context>

<pallas_src>
import functools

import jax
import jax.numpy as jnp
from jax import lax
from jax.experimental import pallas as pl
from jax.experimental.pallas import tpu as pltpu


# ----------------------------------------------------------------------------
# Pallas kernel: GEMM + bias + optional ReLU  (used for the three conv GEMMs)
# ----------------------------------------------------------------------------
def _gemm_bias_act_kernel(x_ref, w_ref, b_ref, o_ref, *, relu):
    acc = jnp.dot(x_ref[...], w_ref[...], preferred_element_type=jnp.float32)
    acc = acc + b_ref[...]
    if relu:
        acc = jnp.maximum(acc, 0.0)
    o_ref[...] = acc.astype(o_ref.dtype)


def gemm_bias_act(x, w, b, *, relu=False, block_m=None):
    """y = act(x @ w + b).  x:(M,K)  w:(K,N)  b:(N,).  Optionally tiles M."""
    M, K = x.shape
    N = w.shape[1]
    if block_m is None or block_m <= 0 or M % block_m != 0 or block_m % 8 != 0:
        block_m = M
    return pl.pallas_call(
        functools.partial(_gemm_bias_act_kernel, relu=relu),
        grid=(M // block_m,),
        in_specs=[
            pl.BlockSpec((block_m, K), lambda i: (i, 0)),
            pl.BlockSpec((K, N), lambda i: (0, 0)),      # weight resident
            pl.BlockSpec((1, N), lambda i: (0, 0)),      # bias resident
        ],
        out_specs=pl.BlockSpec((block_m, N), lambda i: (i, 0)),
        out_shape=jax.ShapeDtypeStruct((M, N), jnp.float32),
        compiler_params=pltpu.CompilerParams(
            dimension_semantics=("parallel",)),
    )(x, w, b.reshape(1, N))


# ----------------------------------------------------------------------------
# Conv2d (VALID padding, square stride) via im2col + Pallas GEMM, NHWC layout
# ----------------------------------------------------------------------------
def conv2d_relu_nhwc(x, w, b, *, stride, block_m=None):
    """x: (B, H, W, C) NHWC.  w: PyTorch layout (O, C, kh, kw)."""
    B, H, W, C = x.shape
    O, _, kh, kw = w.shape
    Ho = (H - kh) // stride + 1
    Wo = (W - kw) // stride + 1

    # TODO(synk): patch extraction stays as a single XLA glue op; an in-kernel
    # strided-slice im2col is possible but fragile for Mosaic lowering.
    # Feature ordering of the patches is (C, kh, kw), matching the flattened
    # PyTorch (O, C, kh, kw) weight layout, so no transposes are needed.
    patches = lax.conv_general_dilated_patches(
        x, filter_shape=(kh, kw), window_strides=(stride, stride),
        padding="VALID", dimension_numbers=("NHWC", "HWIO", "NHWC"))
    patches = patches.reshape(B * Ho * Wo, C * kh * kw)

    w2 = w.reshape(O, C * kh * kw).T                       # (C*kh*kw, O)
    y = gemm_bias_act(patches, w2, b, relu=True, block_m=block_m)
    return y.reshape(B, Ho, Wo, O)                         # stays NHWC


# ----------------------------------------------------------------------------
# Fused Pallas kernel: encoder head + embedding + forward/inverse MLPs + losses
# ----------------------------------------------------------------------------
def _icm_mlp_loss_kernel(
        feat_ref, act_ref, mask_ref,                    # activations / scalars
        hw_ref, hb_ref, emb_ref,                        # head + embedding table
        f1wp_ref, f1we_ref, f1b_ref,                    # forward model L1 (split)
        f2w_ref, f2b_ref,                               # forward model L2
        i1ws_ref, i1wn_ref, i1b_ref,                    # inverse model L1 (split)
        i2w_ref, i2b_ref,                               # inverse model L2
        i3w_ref, i3b_ref,                               # inverse model L3
        ri_ref, inv_ref, fwd_ref,                       # outputs
        *, batch):
    dot = lambda a, b: jnp.dot(a, b, preferred_element_type=jnp.float32)

    # encoder head applied to [state; n_state] rows at once (no ReLU: matches
    # PyTorch's bare Linear head)
    phi = dot(feat_ref[...], hw_ref[...]) + hb_ref[...]          # (2B, 512)
    phi_s = phi[:batch]                                          # (B, 512)
    phi_next = phi[batch:]                                       # (B, 512)

    # action one-hot (shared by the embedding matmul and the CE target)
    n_act = emb_ref.shape[0]
    lane_ids = lax.broadcasted_iota(jnp.int32, (batch, n_act), 1)
    onehot = (lane_ids == act_ref[...]).astype(jnp.float32)      # (B, A)
    a_emb = dot(onehot, emb_ref[...])                            # (B, E)

    # forward model: Linear(512+E, 256) as split dots, ReLU, Linear(256, 512)
    h = dot(phi_s, f1wp_ref[...]) + dot(a_emb, f1we_ref[...]) + f1b_ref[...]
    h = jnp.maximum(h, 0.0)
    hat_phi_next = dot(h, f2w_ref[...]) + f2b_ref[...]           # (B, 512)

    # inverse model: Linear(1024, 256) as split dots, ReLU, 256->256, ReLU, ->A
    g = dot(phi_s, i1ws_ref[...]) + dot(phi_next, i1wn_ref[...]) + i1b_ref[...]
    g = jnp.maximum(g, 0.0)
    g = jnp.maximum(dot(g, i2w_ref[...]) + i2b_ref[...], 0.0)
    logits = dot(g, i3w_ref[...]) + i3b_ref[...]                 # (B, A)

    mask = mask_ref[...]                                         # (B, 1)

    # r_i = 0.5 * mean((hat - phi_next)^2, dim=1) * mask ; forward_loss = mean
    diff = hat_phi_next - phi_next
    feat_dim = diff.shape[1]
    r_i = (0.5 / feat_dim) * jnp.sum(diff * diff, axis=1, keepdims=True) * mask
    ri_ref[...] = r_i
    fwd_ref[...] = jnp.sum(r_i, axis=0, keepdims=True) / batch   # (1, 1)

    # inv_loss = mean(CrossEntropy(logits, action) * mask)
    mx = jnp.max(logits, axis=1, keepdims=True)
    lse = mx + jnp.log(jnp.sum(jnp.exp(logits - mx), axis=1, keepdims=True))
    tgt = jnp.sum(logits * onehot, axis=1, keepdims=True)
    ce = (lse - tgt) * mask
    inv_ref[...] = jnp.sum(ce, axis=0, keepdims=True) / batch    # (1, 1)


def icm_fused_mlp_loss(feat, head_w, action, mask, params, batch):
    hidden = head_w.shape[1]                               # 512
    f1w = params["fwd1_w"]                                 # (512 + E, 256)
    i1w = params["inv1_w"]                                 # (1024, 256)

    args = [
        feat,                                              # (2B, cnn_out_dim)
        action.reshape(batch, 1),                          # (B, 1) int32
        mask.reshape(batch, 1),                            # (B, 1) f32
        head_w,                                            # (cnn_out_dim, 512)
        params["head_b"].reshape(1, hidden),
        params["emb"],                                     # (A, E)
        f1w[:hidden], f1w[hidden:], params["fwd1_b"].reshape(1, -1),
        params["fwd2_w"], params["fwd2_b"].reshape(1, -1),
        i1w[:hidden], i1w[hidden:], params["inv1_b"].reshape(1, -1),
        params["inv2_w"], params["inv2_b"].reshape(1, -1),
        params["inv3_w"], params["inv3_b"].reshape(1, -1),
    ]

    def full_spec(a):
        return pl.BlockSpec(tuple(a.shape), lambda i: (0, 0))

    return pl.pallas_call(
        functools.partial(_icm_mlp_loss_kernel, batch=batch),
        grid=(1,),
        in_specs=[full_spec(a) for a in args],
        out_specs=[
            pl.BlockSpec((batch, 1), lambda i: (0, 0)),
            pl.BlockSpec((1, 1), lambda i: (0, 0)),
            pl.BlockSpec((1, 1), lambda i: (0, 0)),
        ],
        out_shape=[
            jax.ShapeDtypeStruct((batch, 1), jnp.float32),   # r_i
            jax.ShapeDtypeStruct((1, 1), jnp.float32),       # inv_loss
            jax.ShapeDtypeStruct((1, 1), jnp.float32),       # forward_loss
        ],
        compiler_params=pltpu.CompilerParams(
            dimension_semantics=("arbitrary",)),
    )(*args)


# ----------------------------------------------------------------------------
# cnnICM model
# ----------------------------------------------------------------------------
def init_params(key, channel_dim, state_dim, action_dim):
    def nrm(k, shape, scale=0.1):
        return scale * jax.random.normal(k, shape, dtype=jnp.float32)

    keys = jax.random.split(key, 16)
    c = channel_dim

    h1 = (state_dim - 8) // 4 + 1
    h2 = (h1 - 4) // 2 + 1
    h3 = h2 - 3 + 1
    cnn_out_dim = (c * 32) * h3 * h3
    emb_dim = 4

    params = {
        # conv weights in PyTorch layout (O, C, kh, kw); conv biases = 0
        "conv1_w": nrm(keys[0], (c * 8, c, 8, 8)),
        "conv1_b": jnp.zeros((c * 8,), jnp.float32),
        "conv2_w": nrm(keys[1], (c * 16, c * 8, 4, 4)),
        "conv2_b": jnp.zeros((c * 16,), jnp.float32),
        "conv3_w": nrm(keys[2], (c * 32, c * 16, 3, 3)),
        "conv3_b": jnp.zeros((c * 32,), jnp.float32),
        # linear weights stored as (in, out); head rows in PyTorch (C,H,W) order
        "head_w": nrm(keys[3], (cnn_out_dim, 512)),
        "head_b": nrm(keys[4], (512,), 0.01),
        "emb": nrm(keys[5], (action_dim, emb_dim)),
        "fwd1_w": nrm(keys[6], (512 + emb_dim, 256)),
        "fwd1_b": nrm(keys[7], (256,), 0.01),
        "fwd2_w": nrm(keys[8], (256, 512)),
        "fwd2_b": nrm(keys[9], (512,), 0.01),
        "inv1_w": nrm(keys[10], (512 + 512, 256)),
        "inv1_b": nrm(keys[11], (256,), 0.01),
        "inv2_w": nrm(keys[12], (256, 256)),
        "inv2_b": nrm(keys[13], (256,), 0.01),
        "inv3_w": nrm(keys[14], (256, action_dim)),
        "inv3_b": nrm(keys[15], (action_dim,), 0.01),
    }
    return params


def encode_batch(params, x_nchw):
    """One batched encoder pass: (B', C, H, W) -> (B', cnn_out_dim) features."""
    x = jnp.transpose(x_nchw, (0, 2, 3, 1))                # single NCHW -> NHWC
    x = conv2d_relu_nhwc(x, params["conv1_w"], params["conv1_b"],
                         stride=4, block_m=128)
    x = conv2d_relu_nhwc(x, params["conv2_w"], params["conv2_b"], stride=2)
    x = conv2d_relu_nhwc(x, params["conv3_w"], params["conv3_b"], stride=1)
    b2, h3, w3, o3 = x.shape
    return x.reshape(b2, h3 * w3 * o3), (h3, w3, o3)       # (H, W, C) flatten


def cnn_icm_forward(params, state, n_state, action, mask):
    action = action.reshape(-1).astype(jnp.int32)
    batch = state.shape[0]

    # batched encoder: one pass over [state; n_state]
    feat, (h3, w3, o3) = encode_batch(
        params, jnp.concatenate([state, n_state], axis=0))

    # PyTorch's Flatten is (C, H, W)-ordered; our NHWC features are (H, W, C)-
    # ordered, so permute the head-weight rows once (a no-op when h3==w3==1).
    hidden = params["head_w"].shape[1]
    head_w = params["head_w"].reshape(o3, h3, w3, hidden)
    head_w = head_w.transpose(1, 2, 0, 3).reshape(o3 * h3 * w3, hidden)

    r_i, inv_loss, forward_loss = icm_fused_mlp_loss(
        feat, head_w, action, mask.astype(jnp.float32), params, batch)
    return r_i[:, 0], inv_loss[0, 0], forward_loss[0, 0]


# ----------------------------------------------------------------------------
if __name__ == "__main__":
    channel_dim, state_dim, action_dim = 4, 36, 6   # 36 -> 8 -> 3 -> 1 spatial
    batch = 2

    key = jax.random.PRNGKey(0)
    k_param, k_s, k_ns, k_a = jax.random.split(key, 4)

    params = init_params(k_param, channel_dim, state_dim, action_dim)

    state = jax.random.normal(
        k_s, (batch, channel_dim, state_dim, state_dim), dtype=jnp.float32)
    n_state = jax.random.normal(
        k_ns, (batch, channel_dim, state_dim, state_dim), dtype=jnp.float32)
    action = jax.random.randint(k_a, (batch,), 0, action_dim, dtype=jnp.int32)
    mask = jnp.array([1.0, 1.0], dtype=jnp.float32)

    fwd_fn = jax.jit(cnn_icm_forward)
    r_i, inv_loss, forward_loss = fwd_fn(params, state, n_state, action, mask)
    jax.block_until_ready((r_i, inv_loss, forward_loss))

    assert r_i.shape == (batch,)
    assert inv_loss.shape == ()
    assert forward_loss.shape == ()
    print("KERNEL_OK")
</pallas_src>

<mosaic_0001>
module attributes {stable_mosaic.version = 11 : i64} {
  func.func @_gemm_bias_act_kernel(%arg0: i32, %arg1: memref<128x256xf32, #tpu.memory_space<vmem>>, %arg2: memref<256x32xf32, #tpu.memory_space<vmem>>, %arg3: memref<1x32xf32, #tpu.memory_space<vmem>>, %arg4: memref<128x32xf32, #tpu.memory_space<vmem>>) attributes {dimension_semantics = [#tpu.dimension_semantics<parallel>], iteration_bounds = array<i64: 2>, scalar_prefetch = 0 : i64, scratch_operands = 0 : i64, tpu.core_type = #tpu.core_type<tc>, window_params = [{transform_indices = @transform_0, window_bounds = array<i64: 128, 256>}, {pipeline_mode = #tpu.pipeline_mode<synchronous>, transform_indices = @transform_1, window_bounds = array<i64: 256, 32>}, {pipeline_mode = #tpu.pipeline_mode<synchronous>, transform_indices = @transform_2, window_bounds = array<i64: 1, 32>}, {transform_indices = @transform_3, window_bounds = array<i64: 128, 32>}]} {
    %c0 = arith.constant 0 : index
    %c0_0 = arith.constant 0 : index
    %0 = vector.load %arg1[%c0, %c0_0] : memref<128x256xf32, #tpu.memory_space<vmem>>, vector<128x256xf32>
    %c0_1 = arith.constant 0 : index
    %c0_2 = arith.constant 0 : index
    %1 = vector.load %arg2[%c0_1, %c0_2] : memref<256x32xf32, #tpu.memory_space<vmem>>, vector<256x32xf32>
    %cst = arith.constant dense<0.000000e+00> : vector<128x32xf32>
    %2 = tpu.matmul %0, %1, %cst {dimension_numbers = #tpu.dot_dimension_numbers<[1], [0], [0], [1], [0, 0, 1, 1], [], []>} : vector<128x256xf32>, vector<256x32xf32>, vector<128x32xf32> -> vector<128x32xf32>
    %c0_3 = arith.constant 0 : index
    %c0_4 = arith.constant 0 : index
    %3 = vector.load %arg3[%c0_3, %c0_4] : memref<1x32xf32, #tpu.memory_space<vmem>>, vector<1x32xf32>
    %4 = vector.broadcast %3 : vector<1x32xf32> to vector<128x32xf32>
    %5 = arith.addf %2, %4 : vector<128x32xf32>
    %cst_5 = arith.constant 0.000000e+00 : f32
    %6 = vector.broadcast %cst_5 : f32 to vector<128x32xf32>
    %7 = arith.maximumf %5, %6 : vector<128x32xf32>
    %c0_6 = arith.constant 0 : index
    %c0_7 = arith.constant 0 : index
    %8 = vector.load %arg4[%c0_6, %c0_7] : memref<128x32xf32, #tpu.memory_space<vmem>>, vector<128x32xf32>
    tpu.vector_store %arg4[%c0_6, %c0_7], %7 {strides = array<i32>} : memref<128x32xf32, #tpu.memory_space<vmem>>, vector<128x32xf32>,
    return
  }
  func.func @transform_0(%arg0: i32) -> (i32, i32) {
    %c0_i32 = arith.constant 0 : i32
    %c0_i32_0 = arith.constant 0 : i32
    return %arg0, %c0_i32 : i32, i32
  }
  func.func @transform_1(%arg0: i32) -> (i32, i32) {
    %c0_i32 = arith.constant 0 : i32
    %c0_i32_0 = arith.constant 0 : i32
    %c0_i32_1 = arith.constant 0 : i32
    return %c0_i32, %c0_i32_0 : i32, i32
  }
  func.func @transform_2(%arg0: i32) -> (i32, i32) {
    %c0_i32 = arith.constant 0 : i32
    %c0_i32_0 = arith.constant 0 : i32
    %c0_i32_1 = arith.constant 0 : i32
    return %c0_i32, %c0_i32_0 : i32, i32
  }
  func.func @transform_3(%arg0: i32) -> (i32, i32) {
    %c0_i32 = arith.constant 0 : i32
    %c0_i32_0 = arith.constant 0 : i32
    return %arg0, %c0_i32 : i32, i32
  }
}

module attributes {stable_mosaic.version = 11 : i64} {
  func.func @_gemm_bias_act_kernel(%arg0: i32, %arg1: memref<36x512xf32, #tpu.memory_space<vmem>>, %arg2: memref<512x64xf32, #tpu.memory_space<vmem>>, %arg3: memref<1x64xf32, #tpu.memory_space<vmem>>, %arg4: memref<36x64xf32, #tpu.memory_space<vmem>>) attributes {dimension_semantics = [#tpu.dimension_semantics<parallel>], iteration_bounds = array<i64: 1>, scalar_prefetch = 0 : i64, scratch_operands = 0 : i64, tpu.core_type = #tpu.core_type<tc>, window_params = [{transform_indices = @transform_0, window_bounds = array<i64: 36, 512>}, {pipeline_mode = #tpu.pipeline_mode<synchronous>, transform_indices = @transform_1, window_bounds = array<i64: 512, 64>}, {pipeline_mode = #tpu.pipeline_mode<synchronous>, transform_indices = @transform_2, window_bounds = array<i64: 1, 64>}, {transform_indices = @transform_3, window_bounds = array<i64: 36, 64>}]} {
    %c0 = arith.constant 0 : index
    %c0_0 = arith.constant 0 : index
    %0 = vector.load %arg1[%c0, %c0_0] : memref<36x512xf32, #tpu.memory_space<vmem>>, vector<36x512xf32>
    %c0_1 = arith.constant 0 : index
    %c0_2 = arith.constant 0 : index
    %1 = vector.load %arg2[%c0_1, %c0_2] : memref<512x64xf32, #tpu.memory_space<vmem>>, vector<512x64xf32>
    %cst = arith.constant dense<0.000000e+00> : vector<36x64xf32>
    %2 = tpu.matmul %0, %1, %cst {dimension_numbers = #tpu.dot_dimension_numbers<[1], [0], [0], [1], [0, 0, 1, 1], [], []>} : vector<36x512xf32>, vector<512x64xf32>, vector<36x64xf32> -> vector<36x64xf32>
    %c0_3 = arith.constant 0 : index
    %c0_4 = arith.constant 0 : index
    %3 = vector.load %arg3[%c0_3, %c0_4] : memref<1x64xf32, #tpu.memory_space<vmem>>, vector<1x64xf32>
    %4 = vector.broadcast %3 : vector<1x64xf32> to vector<36x64xf32>
    %5 = arith.addf %2, %4 : vector<36x64xf32>
    %cst_5 = arith.constant 0.000000e+00 : f32
    %6 = vector.broadcast %cst_5 : f32 to vector<36x64xf32>
    %7 = arith.maximumf %5, %6 : vector<36x64xf32>
    %c0_6 = arith.constant 0 : index
    %c0_7 = arith.constant 0 : index
    %8 = vector.load %arg4[%c0_6, %c0_7] : memref<36x64xf32, #tpu.memory_space<vmem>>, vector<36x64xf32>
    tpu.vector_store %arg4[%c0_6, %c0_7], %7 {strides = array<i32>} : memref<36x64xf32, #tpu.memory_space<vmem>>, vector<36x64xf32>,
    return
  }
  func.func @transform_0(%arg0: i32) -> (i32, i32) {
    %c0_i32 = arith.constant 0 : i32
    %c0_i32_0 = arith.constant 0 : i32
    return %arg0, %c0_i32 : i32, i32
  }
  func.func @transform_1(%arg0: i32) -> (i32, i32) {
    %c0_i32 = arith.constant 0 : i32
    %c0_i32_0 = arith.constant 0 : i32
    %c0_i32_1 = arith.constant 0 : i32
    return %c0_i32, %c0_i32_0 : i32, i32
  }
  func.func @transform_2(%arg0: i32) -> (i32, i32) {
    %c0_i32 = arith.constant 0 : i32
    %c0_i32_0 = arith.constant 0 : i32
    %c0_i32_1 = arith.constant 0 : i32
    return %c0_i32, %c0_i32_0 : i32, i32
  }
  func.func @transform_3(%arg0: i32) -> (i32, i32) {
    %c0_i32 = arith.constant 0 : i32
    %c0_i32_0 = arith.constant 0 : i32
    return %arg0, %c0_i32 : i32, i32
  }
}

module attributes {stable_mosaic.version = 11 : i64} {
  func.func @_gemm_bias_act_kernel(%arg0: i32, %arg1: memref<4x576xf32, #tpu.memory_space<vmem>>, %arg2: memref<576x128xf32, #tpu.memory_space<vmem>>, %arg3: memref<1x128xf32, #tpu.memory_space<vmem>>, %arg4: memref<4x128xf32, #tpu.memory_space<vmem>>) attributes {dimension_semantics = [#tpu.dimension_semantics<parallel>], iteration_bounds = array<i64: 1>, scalar_prefetch = 0 : i64, scratch_operands = 0 : i64, tpu.core_type = #tpu.core_type<tc>, window_params = [{transform_indices = @transform_0, window_bounds = array<i64: 4, 576>}, {pipeline_mode = #tpu.pipeline_mode<synchronous>, transform_indices = @transform_1, window_bounds = array<i64: 576, 128>}, {pipeline_mode = #tpu.pipeline_mode<synchronous>, transform_indices = @transform_2, window_bounds = array<i64: 1, 128>}, {transform_indices = @transform_3, window_bounds = array<i64: 4, 128>}]} {
    %c0 = arith.constant 0 : index
    %c0_0 = arith.constant 0 : index
    %0 = vector.load %arg1[%c0, %c0_0] : memref<4x576xf32, #tpu.memory_space<vmem>>, vector<4x576xf32>
    %c0_1 = arith.constant 0 : index
    %c0_2 = arith.constant 0 : index
    %1 = vector.load %arg2[%c0_1, %c0_2] : memref<576x128xf32, #tpu.memory_space<vmem>>, vector<576x128xf32>
    %cst = arith.constant dense<0.000000e+00> : vector<4x128xf32>
    %2 = tpu.matmul %0, %1, %cst {dimension_numbers = #tpu.dot_dimension_numbers<[1], [0], [0], [1], [0, 0, 1, 1], [], []>} : vector<4x576xf32>, vector<576x128xf32>, vector<4x128xf32> -> vector<4x128xf32>
    %c0_3 = arith.constant 0 : index
    %c0_4 = arith.constant 0 : index
    %3 = vector.load %arg3[%c0_3, %c0_4] : memref<1x128xf32, #tpu.memory_space<vmem>>, vector<1x128xf32>
    %4 = vector.broadcast %3 : vector<1x128xf32> to vector<4x128xf32>
    %5 = arith.addf %2, %4 : vector<4x128xf32>
    %cst_5 = arith.constant 0.000000e+00 : f32
    %6 = vector.broadcast %cst_5 : f32 to vector<4x128xf32>
    %7 = arith.maximumf %5, %6 : vector<4x128xf32>
    %c0_6 = arith.constant 0 : index
    %c0_7 = arith.constant 0 : index
    %8 = vector.load %arg4[%c0_6, %c0_7] : memref<4x128xf32, #tpu.memory_space<vmem>>, vector<4x128xf32>
    tpu.vector_store %arg4[%c0_6, %c0_7], %7 {strides = array<i32>} : memref<4x128xf32, #tpu.memory_space<vmem>>, vector<4x128xf32>,
    return
  }
  func.func @transform_0(%arg0: i32) -> (i32, i32) {
    %c0_i32 = arith.constant 0 : i32
    %c0_i32_0 = arith.constant 0 : i32
    return %arg0, %c0_i32 : i32, i32
  }
  func.func @transform_1(%arg0: i32) -> (i32, i32) {
    %c0_i32 = arith.constant 0 : i32
    %c0_i32_0 = arith.constant 0 : i32
    %c0_i32_1 = arith.constant 0 : i32
    return %c0_i32, %c0_i32_0 : i32, i32
  }
  func.func @transform_2(%arg0: i32) -> (i32, i32) {
    %c0_i32 = arith.constant 0 : i32
    %c0_i32_0 = arith.constant 0 : i32
    %c0_i32_1 = arith.constant 0 : i32
    return %c0_i32, %c0_i32_0 : i32, i32
  }
  func.func @transform_3(%arg0: i32) -> (i32, i32) {
    %c0_i32 = arith.constant 0 : i32
    %c0_i32_0 = arith.constant 0 : i32
    return %arg0, %c0_i32 : i32, i32
  }
}

module attributes {stable_mosaic.version = 11 : i64} {
  func.func @_icm_mlp_loss_kernel(%arg0: i32, %arg1: memref<4x128xf32, #tpu.memory_space<vmem>>, %arg2: memref<2x1xi32, #tpu.memory_space<vmem>>, %arg3: memref<2x1xf32, #tpu.memory_space<vmem>>, %arg4: memref<128x512xf32, #tpu.memory_space<vmem>>, %arg5: memref<1x512xf32, #tpu.memory_space<vmem>>, %arg6: memref<6x4xf32, #tpu.memory_space<vmem>>, %arg7: memref<512x256xf32, #tpu.memory_space<vmem>>, %arg8: memref<4x256xf32, #tpu.memory_space<vmem>>, %arg9: memref<1x256xf32, #tpu.memory_space<vmem>>, %arg10: memref<256x512xf32, #tpu.memory_space<vmem>>, %arg11: memref<1x512xf32, #tpu.memory_space<vmem>>, %arg12: memref<512x256xf32, #tpu.memory_space<vmem>>, %arg13: memref<512x256xf32, #tpu.memory_space<vmem>>, %arg14: memref<1x256xf32, #tpu.memory_space<vmem>>, %arg15: memref<256x256xf32, #tpu.memory_space<vmem>>, %arg16: memref<1x256xf32, #tpu.memory_space<vmem>>, %arg17: memref<256x6xf32, #tpu.memory_space<vmem>>, %arg18: memref<1x6xf32, #tpu.memory_space<vmem>>, %arg19: memref<2x1xf32, #tpu.memory_space<vmem>>, %arg20: memref<1x1xf32, #tpu.memory_space<vmem>>, %arg21: memref<1x1xf32, #tpu.memory_space<vmem>>) attributes {dimension_semantics = [#tpu.dimension_semantics<arbitrary>], iteration_bounds = array<i64: 1>, scalar_prefetch = 0 : i64, scratch_operands = 0 : i64, tpu.core_type = #tpu.core_type<tc>, window_params = [{pipeline_mode = #tpu.pipeline_mode<synchronous>, transform_indices = @transform_0, window_bounds = array<i64: 4, 128>}, {pipeline_mode = #tpu.pipeline_mode<synchronous>, transform_indices = @transform_1, window_bounds = array<i64: 2, 1>}, {pipeline_mode = #tpu.pipeline_mode<synchronous>, transform_indices = @transform_2, window_bounds = array<i64: 2, 1>}, {pipeline_mode = #tpu.pipeline_mode<synchronous>, transform_indices = @transform_3, window_bounds = array<i64: 128, 512>}, {pipeline_mode = #tpu.pipeline_mode<synchronous>, transform_indices = @transform_4, window_bounds = array<i64: 1, 512>}, {pipeline_mode = #tpu.pipeline_mode<synchronous>, transform_indices = @transform_5, window_bounds = array<i64: 6, 4>}, {pipeline_mode = #tpu.pipeline_mode<synchronous>, transform_indices = @transform_6, window_bounds = array<i64: 512, 256>}, {pipeline_mode = #tpu.pipeline_mode<synchronous>, transform_indices = @transform_7, window_bounds = array<i64: 4, 256>}, {pipeline_mode = #tpu.pipeline_mode<synchronous>, transform_indices = @transform_8, window_bounds = array<i64: 1, 256>}, {pipeline_mode = #tpu.pipeline_mode<synchronous>, transform_indices = @transform_9, window_bounds = array<i64: 256, 512>}, {pipeline_mode = #tpu.pipeline_mode<synchronous>, transform_indices = @transform_10, window_bounds = array<i64: 1, 512>}, {pipeline_mode = #tpu.pipeline_mode<synchronous>, transform_indices = @transform_11, window_bounds = array<i64: 512, 256>}, {pipeline_mode = #tpu.pipeline_mode<synchronous>, transform_indices = @transform_12, window_bounds = array<i64: 512, 256>}, {pipeline_mode = #tpu.pipeline_mode<synchronous>, transform_indices = @transform_13, window_bounds = array<i64: 1, 256>}, {pipeline_mode = #tpu.pipeline_mode<synchronous>, transform_indices = @transform_14, window_bounds = array<i64: 256, 256>}, {pipeline_mode = #tpu.pipeline_mode<synchronous>, transform_indices = @transform_15, window_bounds = array<i64: 1, 256>}, {pipeline_mode = #tpu.pipeline_mode<synchronous>, transform_indices = @transform_16, window_bounds = array<i64: 256, 6>}, {pipeline_mode = #tpu.pipeline_mode<synchronous>, transform_indices = @transform_17, window_bounds = array<i64: 1, 6>}, {pipeline_mode = #tpu.pipeline_mode<synchronous>, transform_indices = @transform_18, window_bounds = array<i64: 2, 1>}, {pipeline_mode = #tpu.pipeline_mode<synchronous>, transform_indices = @transform_19, window_bounds = array<i64: 1, 1>}, {pipeline_mode = #tpu.pipeline_mode<synchronous>, transform_indices = @transform_20, window_bounds = array<i64: 1, 1>}]} {
    %c0 = arith.constant 0 : index
    %c0_0 = arith.constant 0 : index
    %0 = vector.load %arg1[%c0, %c0_0] : memref<4x128xf32, #tpu.memory_space<vmem>>, vector<4x128xf32>
    %c0_1 = arith.constant 0 : index
    %c0_2 = arith.constant 0 : index
    %1 = vector.load %arg4[%c0_1, %c0_2] : memref<128x512xf32, #tpu.memory_space<vmem>>, vector<128x512xf32>
    %cst = arith.constant dense<0.000000e+00> : vector<4x512xf32>
    %2 = tpu.matmul %0, %1, %cst {dimension_numbers = #tpu.dot_dimension_numbers<[1], [0], [0], [1], [0, 0, 1, 1], [], []>} : vector<4x128xf32>, vector<128x512xf32>, vector<4x512xf32> -> vector<4x512xf32>
    %c0_3 = arith.constant 0 : index
    %c0_4 = arith.constant 0 : index
    %3 = vector.load %arg5[%c0_3, %c0_4] : memref<1x512xf32, #tpu.memory_space<vmem>>, vector<1x512xf32>
    %4 = vector.broadcast %3 : vector<1x512xf32> to vector<4x512xf32>
    %5 = arith.addf %2, %4 : vector<4x512xf32>
    %6 = vector.extract_strided_slice %5 {offsets = [0, 0], sizes = [2, 512], strides = [1, 1]} : vector<4x512xf32> to vector<2x512xf32>
    %7 = vector.extract_strided_slice %5 {offsets = [2, 0], sizes = [2, 512], strides = [1, 1]} : vector<4x512xf32> to vector<2x512xf32>
    %8 = tpu.iota {dimensions = array<i32: 1>} : vector<2x6xi32>
    %c0_5 = arith.constant 0 : index
    %c0_6 = arith.constant 0 : index
    %9 = vector.load %arg2[%c0_5, %c0_6] : memref<2x1xi32, #tpu.memory_space<vmem>>, vector<2x1xi32>
    %10 = vector.broadcast %9 : vector<2x1xi32> to vector<2x6xi32>
    %11 = arith.cmpi eq, %8, %10 : vector<2x6xi32>
    %12 = arith.extui %11 : vector<2x6xi1> to vector<2x6xi32>
    %13 = arith.sitofp %12 : vector<2x6xi32> to vector<2x6xf32>
    %c0_7 = arith.constant 0 : index
    %c0_8 = arith.constant 0 : index
    %14 = vector.load %arg6[%c0_7, %c0_8] : memref<6x4xf32, #tpu.memory_space<vmem>>, vector<6x4xf32>
    %cst_9 = arith.constant dense<0.000000e+00> : vector<2x4xf32>
    %15 = tpu.matmul %13, %14, %cst_9 {dimension_numbers = #tpu.dot_dimension_numbers<[1], [0], [0], [1], [0, 0, 1, 1], [], []>} : vector<2x6xf32>, vector<6x4xf32>, vector<2x4xf32> -> vector<2x4xf32>
    %c0_10 = arith.constant 0 : index
    %c0_11 = arith.constant 0 : index
    %16 = vector.load %arg7[%c0_10, %c0_11] : memref<512x256xf32, #tpu.memory_space<vmem>>, vector<512x256xf32>
    %cst_12 = arith.constant dense<0.000000e+00> : vector<2x256xf32>
    %17 = tpu.matmul %6, %16, %cst_12 {dimension_numbers = #tpu.dot_dimension_numbers<[1], [0], [0], [1], [0, 0, 1, 1], [], []>} : vector<2x512xf32>, vector<512x256xf32>, vector<2x256xf32> -> vector<2x256xf32>
    %c0_13 = arith.constant 0 : index
    %c0_14 = arith.constant 0 : index
    %18 = vector.load %arg8[%c0_13, %c0_14] : memref<4x256xf32, #tpu.memory_space<vmem>>, vector<4x256xf32>
    %cst_15 = arith.constant dense<0.000000e+00> : vector<2x256xf32>
    %19 = tpu.matmul %15, %18, %cst_15 {dimension_numbers = #tpu.dot_dimension_numbers<[1], [0], [0], [1], [0, 0, 1, 1], [], []>} : vector<2x4xf32>, vector<4x256xf32>, vector<2x256xf32> -> vector<2x256xf32>
    %20 = arith.addf %17, %19 : vector<2x256xf32>
    %c0_16 = arith.constant 0 : index
    %c0_17 = arith.constant 0 : index
    %21 = vector.load %arg9[%c0_16, %c0_17] : memref<1x256xf32, #tpu.memory_space<vmem>>, vector<1x256xf32>
    %22 = vector.broadcast %21 : vector<1x256xf32> to vector<2x256xf32>
    %23 = arith.addf %20, %22 : vector<2x256xf32>
    %cst_18 = arith.constant 0.000000e+00 : f32
    %24 = vector.broadcast %cst_18 : f32 to vector<2x256xf32>
    %25 = arith.maximumf %23, %24 : vector<2x256xf32>
    %c0_19 = arith.constant 0 : index
    %c0_20 = arith.constant 0 : index
    %26 = vector.load %arg10[%c0_19, %c0_20] : memref<256x512xf32, #tpu.memory_space<vmem>>, vector<256x512xf32>
    %cst_21 = arith.constant dense<0.000000e+00> : vector<2x512xf32>
    %27 = tpu.matmul %25, %26, %cst_21 {dimension_numbers = #tpu.dot_dimension_numbers<[1], [0], [0], [1], [0, 0, 1, 1], [], []>} : vector<2x256xf32>, vector<256x512xf32>, vector<2x512xf32> -> vector<2x512xf32>
    %c0_22 = arith.constant 0 : index
    %c0_23 = arith.constant 0 : index
    %28 = vector.load %arg11[%c0_22, %c0_23] : memref<1x512xf32, #tpu.memory_space<vmem>>, vector<1x512xf32>
    %29 = vector.broadcast %28 : vector<1x512xf32> to vector<2x512xf32>
    %30 = arith.addf %27, %29 : vector<2x512xf32>
    %c0_24 = arith.constant 0 : index
    %c0_25 = arith.constant 0 : index
    %31 = vector.load %arg12[%c0_24, %c0_25] : memref<512x256xf32, #tpu.memory_space<vmem>>, vector<512x256xf32>
    %cst_26 = arith.constant dense<0.000000e+00> : vector<2x256xf32>
    %32 = tpu.matmul %6, %31, %cst_26 {dimension_numbers = #tpu.dot_dimension_numbers<[1], [0], [0], [1], [0, 0, 1, 1], [], []>} : vector<2x512xf32>, vector<512x256xf32>, vector<2x256xf32> -> vector<2x256xf32>
    %c0_27 = arith.constant 0 : index
    %c0_28 = arith.constant 0 : index
    %33 = vector.load %arg13[%c0_27, %c0_28] : memref<512x256xf32, #tpu.memory_space<vmem>>, vector<512x256xf32>
    %cst_29 = arith.constant dense<0.000000e+00> : vector<2x256xf32>
    %34 = tpu.matmul %7, %33, %cst_29 {dimension_numbers = #tpu.dot_dimension_numbers<[1], [0], [0], [1], [0, 0, 1, 1], [], []>} : vector<2x512xf32>, vector<512x256xf32>, vector<2x256xf32> -> vector<2x256xf32>
    %35 = arith.addf %32, %34 : vector<2x256xf32>
    %c0_30 = arith.constant 0 : index
    %c0_31 = arith.constant 0 : index
    %36 = vector.load %arg14[%c0_30, %c0_31] : memref<1x256xf32, #tpu.memory_space<vmem>>, vector<1x256xf32>
    %37 = vector.broadcast %36 : vector<1x256xf32> to vector<2x256xf32>
    %38 = arith.addf %35, %37 : vector<2x256xf32>
    %cst_32 = arith.constant 0.000000e+00 : f32
    %39 = vector.broadcast %cst_32 : f32 to vector<2x256xf32>
    %40 = arith.maximumf %38, %39 : vector<2x256xf32>
    %c0_33 = arith.constant 0 : index
    %c0_34 = arith.constant 0 : index
    %41 = vector.load %arg15[%c0_33, %c0_34] : memref<256x256xf32, #tpu.memory_space<vmem>>, vector<256x256xf32>
    %cst_35 = arith.constant dense<0.000000e+00> : vector<2x256xf32>
    %42 = tpu.matmul %40, %41, %cst_35 {dimension_numbers = #tpu.dot_dimension_numbers<[1], [0], [0], [1], [0, 0, 1, 1], [], []>} : vector<2x256xf32>, vector<256x256xf32>, vector<2x256xf32> -> vector<2x256xf32>
    %c0_36 = arith.constant 0 : index
    %c0_37 = arith.constant 0 : index
    %43 = vector.load %arg16[%c0_36, %c0_37] : memref<1x256xf32, #tpu.memory_space<vmem>>, vector<1x256xf32>
    %44 = vector.broadcast %43 : vector<1x256xf32> to vector<2x256xf32>
    %45 = arith.addf %42, %44 : vector<2x256xf32>
    %cst_38 = arith.constant 0.000000e+00 : f32
    %46 = vector.broadcast %cst_38 : f32 to vector<2x256xf32>
    %47 = arith.maximumf %45, %46 : vector<2x256xf32>
    %c0_39 = arith.constant 0 : index
    %c0_40 = arith.constant 0 : index
    %48 = vector.load %arg17[%c0_39, %c0_40] : memref<256x6xf32, #tpu.memory_space<vmem>>, vector<256x6xf32>
    %cst_41 = arith.constant dense<0.000000e+00> : vector<2x6xf32>
    %49 = tpu.matmul %47, %48, %cst_41 {dimension_numbers = #tpu.dot_dimension_numbers<[1], [0], [0], [1], [0, 0, 1, 1], [], []>} : vector<2x256xf32>, vector<256x6xf32>, vector<2x6xf32> -> vector<2x6xf32>
    %c0_42 = arith.constant 0 : index
    %c0_43 = arith.constant 0 : index
    %50 = vector.load %arg18[%c0_42, %c0_43] : memref<1x6xf32, #tpu.memory_space<vmem>>, vector<1x6xf32>
    %51 = vector.broadcast %50 : vector<1x6xf32> to vector<2x6xf32>
    %52 = arith.addf %49, %51 : vector<2x6xf32>
    %c0_44 = arith.constant 0 : index
    %c0_45 = arith.constant 0 : index
    %53 = vector.load %arg3[%c0_44, %c0_45] : memref<2x1xf32, #tpu.memory_space<vmem>>, vector<2x1xf32>
    %54 = arith.subf %30, %7 : vector<2x512xf32>
    %55 = arith.mulf %54, %54 : vector<2x512xf32>
    %cst_46 = arith.constant dense<0.000000e+00> : vector<2xf32>
    %56 = vector.multi_reduction <add>, %55, %cst_46 [1] : vector<2x512xf32> to vector<2xf32>
    %57 = vector.shape_cast %56 : vector<2xf32> to vector<2x1xf32>
    %cst_47 = arith.constant 9.765625E-4 : f32
    %58 = vector.broadcast %cst_47 : f32 to vector<2x1xf32>
    %59 = arith.mulf %58, %57 : vector<2x1xf32>
    %60 = arith.mulf %59, %53 : vector<2x1xf32>
    %c0_48 = arith.constant 0 : index
    %c0_49 = arith.constant 0 : index
    %61 = vector.load %arg19[%c0_48, %c0_49] : memref<2x1xf32, #tpu.memory_space<vmem>>, vector<2x1xf32>
    tpu.vector_store %arg19[%c0_48, %c0_49], %60 {strides = array<i32>} : memref<2x1xf32, #tpu.memory_space<vmem>>, vector<2x1xf32>,
    %cst_50 = arith.constant dense<0.000000e+00> : vector<1xf32>
    %62 = vector.multi_reduction <add>, %60, %cst_50 [0] : vector<2x1xf32> to vector<1xf32>
    %63 = vector.shape_cast %62 : vector<1xf32> to vector<1x1xf32>
    %cst_51 = arith.constant 2.000000e+00 : f32
    %64 = vector.broadcast %cst_51 : f32 to vector<1x1xf32>
    %65 = arith.divf %63, %64 : vector<1x1xf32>
    %c0_52 = arith.constant 0 : index
    %c0_53 = arith.constant 0 : index
    %66 = vector.load %arg21[%c0_52, %c0_53] : memref<1x1xf32, #tpu.memory_space<vmem>>, vector<1x1xf32>
    tpu.vector_store %arg21[%c0_52, %c0_53], %65 {strides = array<i32>} : memref<1x1xf32, #tpu.memory_space<vmem>>, vector<1x1xf32>,
    %cst_54 = arith.constant dense<0xFF800000> : vector<2xf32>
    %67 = vector.multi_reduction <maximumf>, %52, %cst_54 [1] : vector<2x6xf32> to vector<2xf32>
    %68 = vector.shape_cast %67 : vector<2xf32> to vector<2x1xf32>
    %69 = vector.broadcast %68 : vector<2x1xf32> to vector<2x6xf32>
    %70 = arith.subf %52, %69 : vector<2x6xf32>
    %71 = math.exp %70 : vector<2x6xf32>
    %cst_55 = arith.constant dense<0.000000e+00> : vector<2xf32>
    %72 = vector.multi_reduction <add>, %71, %cst_55 [1] : vector<2x6xf32> to vector<2xf32>
    %73 = vector.shape_cast %72 : vector<2xf32> to vector<2x1xf32>
    %74 = math.log %73 : vector<2x1xf32>
    %75 = arith.addf %68, %74 : vector<2x1xf32>
    %76 = arith.mulf %52, %13 : vector<2x6xf32>
    %cst_56 = arith.constant dense<0.000000e+00> : vector<2xf32>
    %77 = vector.multi_reduction <add>, %76, %cst_56 [1] : vector<2x6xf32> to vector<2xf32>
    %78 = vector.shape_cast %77 : vector<2xf32> to vector<2x1xf32>
    %79 = arith.subf %75, %78 : vector<2x1xf32>
    %80 = arith.mulf %79, %53 : vector<2x1xf32>
    %cst_57 = arith.constant dense<0.000000e+00> : vector<1xf32>
    %81 = vector.multi_reduction <add>, %80, %cst_57 [0] : vector<2x1xf32> to vector<1xf32>
    %82 = vector.shape_cast %81 : vector<1xf32> to vector<1x1xf32>
    %cst_58 = arith.constant 2.000000e+00 : f32
    %83 = vector.broadcast %cst_58 : f32 to vector<1x1xf32>
    %84 = arith.divf %82, %83 : vector<1x1xf32>
    %c0_59 = arith.constant 0 : index
    %c0_60 = arith.constant 0 : index
    %85 = vector.load %arg20[%c0_59, %c0_60] : memref<1x1xf32, #tpu.memory_space<vmem>>, vector<1x1xf32>
    tpu.vector_store %arg20[%c0_59, %c0_60], %84 {strides = array<i32>} : memref<1x1xf32, #tpu.memory_space<vmem>>, vector<1x1xf32>,
    return
  }
  func.func @transform_0(%arg0: i32) -> (i32, i32) {
    %c0_i32 = arith.constant 0 : i32
    %c0_i32_0 = arith.constant 0 : i32
    %c0_i32_1 = arith.constant 0 : i32
    return %c0_i32, %c0_i32_0 : i32, i32
  }
  func.func @transform_1(%arg0: i32) -> (i32, i32) {
    %c0_i32 = arith.constant 0 : i32
    %c0_i32_0 = arith.constant 0 : i32
    %c0_i32_1 = arith.constant 0 : i32
    return %c0_i32, %c0_i32_0 : i32, i32
  }
  func.func @transform_2(%arg0: i32) -> (i32, i32) {
    %c0_i32 = arith.constant 0 : i32
    %c0_i32_0 = arith.constant 0 : i32
    %c0_i32_1 = arith.constant 0 : i32
    return %c0_i32, %c0_i32_0 : i32, i32
  }
  func.func @transform_3(%arg0: i32) -> (i32, i32) {
    %c0_i32 = arith.constant 0 : i32
    %c0_i32_0 = arith.constant 0 : i32
    %c0_i32_1 = arith.constant 0 : i32
    return %c0_i32, %c0_i32_0 : i32, i32
  }
  func.func @transform_4(%arg0: i32) -> (i32, i32) {
    %c0_i32 = arith.constant 0 : i32
    %c0_i32_0 = arith.constant 0 : i32
    %c0_i32_1 = arith.constant 0 : i32
    return %c0_i32, %c0_i32_0 : i32, i32
  }
  func.func @transform_5(%arg0: i32) -> (i32, i32) {
    %c0_i32 = arith.constant 0 : i32
    %c0_i32_0 = arith.constant 0 : i32
    %c0_i32_1 = arith.constant 0 : i32
    return %c0_i32, %c0_i32_0 : i32, i32
  }
  func.func @transform_6(%arg0: i32) -> (i32, i32) {
    %c0_i32 = arith.constant 0 : i32
    %c0_i32_0 = arith.constant 0 : i32
    %c0_i32_1 = arith.constant 0 : i32
    return %c0_i32, %c0_i32_0 : i32, i32
  }
  func.func @transform_7(%arg0: i32) -> (i32, i32) {
    %c0_i32 = arith.constant 0 : i32
    %c0_i32_0 = arith.constant 0 : i32
    %c0_i32_1 = arith.constant 0 : i32
    return %c0_i32, %c0_i32_0 : i32, i32
  }
  func.func @transform_8(%arg0: i32) -> (i32, i32) {
    %c0_i32 = arith.constant 0 : i32
    %c0_i32_0 = arith.constant 0 : i32
    %c0_i32_1 = arith.constant 0 : i32
    return %c0_i32, %c0_i32_0 : i32, i32
  }
  func.func @transform_9(%arg0: i32) -> (i32, i32) {
    %c0_i32 = arith.constant 0 : i32
    %c0_i32_0 = arith.constant 0 : i32
    %c0_i32_1 = arith.constant 0 : i32
    return %c0_i32, %c0_i32_0 : i32, i32
  }
  func.func @transform_10(%arg0: i32) -> (i32, i32) {
    %c0_i32 = arith.constant 0 : i32
    %c0_i32_0 = arith.constant 0 : i32
    %c0_i32_1 = arith.constant 0 : i32
    return %c0_i32, %c0_i32_0 : i32, i32
  }
  func.func @transform_11(%arg0: i32) -> (i32, i32) {
    %c0_i32 = arith.constant 0 : i32
    %c0_i32_0 = arith.constant 0 : i32
    %c0_i32_1 = arith.constant 0 : i32
    return %c0_i32, %c0_i32_0 : i32, i32
  }
  func.func @transform_12(%arg0: i32) -> (i32, i32) {
    %c0_i32 = arith.constant 0 : i32
    %c0_i32_0 = arith.constant 0 : i32
    %c0_i32_1 = arith.constant 0 : i32
    return %c0_i32, %c0_i32_0 : i32, i32
  }
  func.func @transform_13(%arg0: i32) -> (i32, i32) {
    %c0_i32 = arith.constant 0 : i32
    %c0_i32_0 = arith.constant 0 : i32
    %c0_i32_1 = arith.constant 0 : i32
    return %c0_i32, %c0_i32_0 : i32, i32
  }
  func.func @transform_14(%arg0: i32) -> (i32, i32) {
    %c0_i32 = arith.constant 0 : i32
    %c0_i32_0 = arith.constant 0 : i32
    %c0_i32_1 = arith.constant 0 : i32
    return %c0_i32, %c0_i32_0 : i32, i32
  }
  func.func @transform_15(%arg0: i32) -> (i32, i32) {
    %c0_i32 = arith.constant 0 : i32
    %c0_i32_0 = arith.constant 0 : i32
    %c0_i32_1 = arith.constant 0 : i32
    return %c0_i32, %c0_i32_0 : i32, i32
  }
  func.func @transform_16(%arg0: i32) -> (i32, i32) {
    %c0_i32 = arith.constant 0 : i32
    %c0_i32_0 = arith.constant 0 : i32
    %c0_i32_1 = arith.constant 0 : i32
    return %c0_i32, %c0_i32_0 : i32, i32
  }
  func.func @transform_17(%arg0: i32) -> (i32, i32) {
    %c0_i32 = arith.constant 0 : i32
    %c0_i32_0 = arith.constant 0 : i32
    %c0_i32_1 = arith.constant 0 : i32
    return %c0_i32, %c0_i32_0 : i32, i32
  }
  func.func @transform_18(%arg0: i32) -> (i32, i32) {
    %c0_i32 = arith.constant 0 : i32
    %c0_i32_0 = arith.constant 0 : i32
    %c0_i32_1 = arith.constant 0 : i32
    return %c0_i32, %c0_i32_0 : i32, i32
  }
  func.func @transform_19(%arg0: i32) -> (i32, i32) {
    %c0_i32 = arith.constant 0 : i32
    %c0_i32_0 = arith.constant 0 : i32
    %c0_i32_1 = arith.constant 0 : i32
    return %c0_i32, %c0_i32_0 : i32, i32
  }
  func.func @transform_20(%arg0: i32) -> (i32, i32) {
    %c0_i32 = arith.constant 0 : i32
    %c0_i32_0 = arith.constant 0 : i32
    %c0_i32_1 = arith.constant 0 : i32
    return %c0_i32, %c0_i32_0 : i32, i32
  }
}

</mosaic_0001>

<llo_original>
// kernel: cnn_icm_forward.4
$region0: #{cnn_icm_forward.4}
  #allocation0 [shape = 'u32[]', space=smem, size = 0x4, offset = 0x4, fixed_abs, tag = 'smem constant byte address 0x4 - core index']
  #allocation1 [shape = 'u32[144,128]{1,0:T(1,128)}', space=vmem, size = 0x12000, scoped, tag = 'internal scratch']
  %s0 = inlined_call_operand.vmem [shape: f32[256,256], index: 0, kind: input, shape index: {}]
  %s1 = inlined_call_operand.vmem [shape: f32[256,32], index: 1, kind: input, shape index: {}]
  %s2 = inlined_call_operand.vmem [shape: f32[1,32], index: 2, kind: input, shape index: {}]
  %s3 = inlined_call_operand.vmem [shape: f32[256,32], index: 3, kind: output, shape index: {}]
  %s4 = sld [smem:[#allocation0]]
  $region45: #{cnn_icm_forward.4} parent=0
    _
  %s6 = ssub.s32 1, %s4
  %s7 = scalar_select 0, %s6, %s4
  loop: start=0, step=1, limit=4
  $region2: #{cnn_icm_forward.4} parent=0 // loop_pre_header
    _
  $region3: #{cnn_icm_forward.4} parent=0 // loop_header
    %s9 = sphi 0, %s13
    %p10 = scmp.ge.s32.totalorder %s9, 4
    %s19 = sphi 0, %s21
    %s22 = sphi 0, %s19
    %s23 = sphi 0, %s22
    %s39 = sphi 0, %s23
    %s43 = sphi 0, %s43
    %s45 = sphi 0, %s43
    %s46 = sphi 0, %s45
    %s60 = sphi 0, %s46
    %s64 = sphi 0, %s64
    %s66 = sphi 0, %s64
    %s67 = sphi 0, %s66
    %s81 = sphi 0, %s67
    %s87 = sphi 0, %s89
    %s90 = sphi 0, %s87
    %s91 = sphi 0, %s90
    %s107 = sphi 0, %s91
  $region4: #{cnn_icm_forward.4} parent=0 // loop_header_branch
    %12 = sbr.rel (%p10) target = $region8
  $region5: #{cnn_icm_forward.4} parent=0 // loop_body
    %s14 = ssub.s32 %s9, 1
    %s15 = ssub.s32 %s9, 2
    %s16 = sadd.s32 %s9, 1
    %s17 = ssub.s32 %s9, %s16
    %p18 = scmp.eq.s32.totalorder %s17, 0
    %s20 = sadd.s32 %s19, 1
    %s21 = scalar_select %p18, %s19, %s20
    %p24 = pneg %p18
    %p25 = scmp.eq.s32.totalorder %s9, 1
    %p26 = por %p24, %p25
    %p27 = scmp.ne.s32.totalorder %s19, %s22
    %p28 = scmp.eq.s32.totalorder %s9, 0
    %p29 = por %p27, %p28
    %p30 = scmp.ne.s32.totalorder %s19, %s22
    %p31 = scmp.eq.s32.totalorder %s14, 1
    %p32 = por %p30, %p31
    %p33 = scmp.ne.s32.totalorder %s22, %s23
    %p34 = scmp.eq.s32.totalorder %s14, 0
    %p35 = por %p33, %p34
    %p36 = scmp.ne.s32.totalorder %s22, %s23
    %p37 = scmp.eq.s32.totalorder %s15, 1
    %p38 = por %p36, %p37
    %p40 = scmp.ne.s32.totalorder %s23, %s39
    %p41 = scmp.eq.s32.totalorder %s15, 0
    %p42 = por %p40, %p41
    %s44 = sadd.s32 %s43, 1
    %p47 = scmp.eq.s32.totalorder %s9, 1
    %p48 = scmp.ne.s32.totalorder %s43, %s45
    %p49 = scmp.eq.s32.totalorder %s9, 0
    %p50 = por %p48, %p49
    %p51 = scmp.ne.s32.totalorder %s43, %s45
    %p52 = scmp.eq.s32.totalorder %s14, 1
    %p53 = por %p51, %p52
    %p54 = scmp.ne.s32.totalorder %s45, %s46
    %p55 = scmp.eq.s32.totalorder %s14, 0
    %p56 = por %p54, %p55
    %p57 = scmp.ne.s32.totalorder %s45, %s46
    %p58 = scmp.eq.s32.totalorder %s15, 1
    %p59 = por %p57, %p58
    %p61 = scmp.ne.s32.totalorder %s46, %s60
    %p62 = scmp.eq.s32.totalorder %s15, 0
    %p63 = por %p61, %p62
    %s65 = sadd.s32 %s64, 1
    %p68 = scmp.eq.s32.totalorder %s9, 1
    %p69 = scmp.ne.s32.totalorder %s64, %s66
    %p70 = scmp.eq.s32.totalorder %s9, 0
    %p71 = por %p69, %p70
    %p72 = scmp.ne.s32.totalorder %s64, %s66
    %p73 = scmp.eq.s32.totalorder %s14, 1
    %p74 = por %p72, %p73
    %p75 = scmp.ne.s32.totalorder %s66, %s67
    %p76 = scmp.eq.s32.totalorder %s14, 0
    %p77 = por %p75, %p76
    %p78 = scmp.ne.s32.totalorder %s66, %s67
    %p79 = scmp.eq.s32.totalorder %s15, 1
    %p80 = por %p78, %p79
    %p82 = scmp.ne.s32.totalorder %s67, %s81
    %p83 = scmp.eq.s32.totalorder %s15, 0
    %p84 = por %p82, %p83
    %s85 = ssub.s32 %s9, %s16
    %p86 = scmp.eq.s32.totalorder %s85, 0
    %s88 = sadd.s32 %s87, 1
    %s89 = scalar_select %p86, %s87, %s88
    %p92 = pneg %p86
    %p93 = scmp.eq.s32.totalorder %s9, 1
    %p94 = por %p92, %p93
    %p95 = scmp.ne.s32.totalorder %s87, %s90
    %p96 = scmp.eq.s32.totalorder %s9, 0
    %p97 = por %p95, %p96
    %p98 = scmp.ne.s32.totalorder %s87, %s90
    %p99 = scmp.eq.s32.totalorder %s14, 1
    %p100 = por %p98, %p99
    %p101 = scmp.ne.s32.totalorder %s90, %s91
    %p102 = scmp.eq.s32.totalorder %s14, 0
    %p103 = por %p101, %p102
    %p104 = scmp.ne.s32.totalorder %s90, %s91
    %p105 = scmp.eq.s32.totalorder %s15, 1
    %p106 = por %p104, %p105
    %p108 = scmp.ne.s32.totalorder %s91, %s107
    %p109 = scmp.eq.s32.totalorder %s15, 0
    %p110 = por %p108, %p109
    %p111 = scmp.le.s32.totalorder 1, %s9
    %p112 = scmp.lt.s32.totalorder %s9, 3
    %p113 = pnand %p111, %p112
    %p114 = pneg %p113
    // Predicated region
    $region9: #{cnn_icm_forward.4} parent=5 // pred_check
      _
    $region10: #{cnn_icm_forward.4} parent=5 // pred_check_branch
      %116 = sbr.rel (%p113) target = $region12
    $region11: #{cnn_icm_forward.4} parent=5 // pred_region
      %s117 = ssub.s32 %s9, 1
      // Predicated region
      $region13: #{cnn_icm_forward.4} parent=11 // pred_check
        %p118 = pneg %p56
      $region14: #{cnn_icm_forward.4} parent=11 // pred_check_branch
        %120 = sbr.rel (%p118) target = $region16
      $region15: #{cnn_icm_forward.4} parent=11 // pred_region
        _
      $region16: #{cnn_icm_forward.4} parent=11 // pred_fallthru
        _
      // Predicated region
      $region17: #{cnn_icm_forward.4} parent=11 // pred_check
        %p121 = pneg %p77
      $region18: #{cnn_icm_forward.4} parent=11 // pred_check_branch
        %123 = sbr.rel (%p121) target = $region20
      $region19: #{cnn_icm_forward.4} parent=11 // pred_region
        _
      $region20: #{cnn_icm_forward.4} parent=11 // pred_fallthru
        _
    $region12: #{cnn_icm_forward.4} parent=5 // pred_fallthru
      _
    %p124 = scmp.lt.s32.totalorder %s9, 2
    // Predicated region
    $region21: #{cnn_icm_forward.4} parent=5 // pred_check
      %p125 = pneg %p124
    $region22: #{cnn_icm_forward.4} parent=5 // pred_check_branch
      %127 = sbr.rel (%p125) target = $region24
    $region23: #{cnn_icm_forward.4} parent=5 // pred_region
      // Predicated region
      $region25: #{cnn_icm_forward.4} parent=23 // pred_check
        %p128 = pneg %p29
      $region26: #{cnn_icm_forward.4} parent=23 // pred_check_branch
        %130 = sbr.rel (%p128) target = $region28
      $region27: #{cnn_icm_forward.4} parent=23 // pred_region
        %s131 = smul.u32 16, %s9
        %p132 = scmp.lt.s32.totalorder %s131, 31
        %s133 = scalar_select %p132, %s131, 31
        %s134 = smul.addr %s133, 2
        %s135 = smul.addr %s134, 8
        %s136 = scalar_lea.vmem %s0, %s135
        %s137 = smul.u32 16, %s9
      $region28: #{cnn_icm_forward.4} parent=23 // pred_fallthru
        _
    $region24: #{cnn_icm_forward.4} parent=5 // pred_fallthru
      _
    %p138 = scmp.le.s32.totalorder 1, %s9
    %p139 = scmp.lt.s32.totalorder %s9, 3
    %p140 = pnand %p138, %p139
    %p141 = pneg %p140
    // Predicated region
    $region29: #{cnn_icm_forward.4} parent=5 // pred_check
      _
    $region30: #{cnn_icm_forward.4} parent=5 // pred_check_branch
      %143 = sbr.rel (%p140) target = $region32
    $region31: #{cnn_icm_forward.4} parent=5 // pred_region
      %s144 = ssub.s32 %s9, 1
      %s145 = smul.u32 16, %s14
      %p146 = scmp.lt.s32.totalorder %s145, 31
      %s147 = scalar_select %p146, %s145, 31
      %s148 = smul.addr %s147, 2
      %s149 = smul.addr %s148, 8
      %s150 = scalar_lea.vmem %s0, %s149
      %p151 = pneg %p35
      %p152 = pneg %p32
      %p153 = pneg %p56
      %p154 = pneg %p53
      %p155 = pneg %p77
      %p156 = pneg %p74
      %p157 = pneg %p103
      %p158 = pneg %p100
      %s159 = smul.u32 16, %s14
      %p160 = scmp.lt.s32.totalorder %s159, 31
      %s161 = scalar_select %p160, %s159, 31
      %s162 = smul.addr %s161, 8
      %s163 = scalar_lea.vmem %s3, %s162
      %s164 = smul.u32 16, %s14
      %p165 = scmp.lt.s32.totalorder %s164, 31
      %s166 = scalar_select %p165, %s164, 31
      %s167 = smul.addr %s166, 2
      %s168 = smul.addr %s167, 8
      %s169 = scalar_lea.vmem %s0, %s168
      %s170 = smul.u32 16, %s14
      %s171 = smul.u32 16, %s14
      %p172 = scmp.lt.s32.totalorder %s171, 31
      %s173 = scalar_select %p172, %s171, 31
      %s174 = smul.addr %s173, 8
      %s175 = scalar_lea.vmem %s3, %s174
      %s176 = smul.u32 16, %s14
      %v177 = vld [vmem:[%s169] sm:$0xff]
      %v178 = vld [vmem:[%s169 + $0x8] sm:$0xff]
      %v179 = vld [vmem:[%s169 + $0x10] sm:$0xff]
      %v180 = vld [vmem:[%s169 + $0x18] sm:$0xff]
      %v181 = vld [vmem:[%s169 + $0x20] sm:$0xff]
      %v182 = vld [vmem:[%s169 + $0x28] sm:$0xff]
      %v183 = vld [vmem:[%s169 + $0x30] sm:$0xff]
      %v184 = vld [vmem:[%s169 + $0x38] sm:$0xff]
      %v185 = vld [vmem:[%s169 + $0x40] sm:$0xff]
      %v186 = vld [vmem:[%s169 + $0x48] sm:$0xff]
      %v187 = vld [vmem:[%s169 + $0x50] sm:$0xff]
      %v188 = vld [vmem:[%s169 + $0x58] sm:$0xff]
      %v189 = vld [vmem:[%s169 + $0x60] sm:$0xff]
      %v190 = vld [vmem:[%s169 + $0x68] sm:$0xff]
      %v191 = vld [vmem:[%s169 + $0x70] sm:$0xff]
      %v192 = vld [vmem:[%s169 + $0x78] sm:$0xff]
      %v193 = vld [vmem:[%s169 + $0x80] sm:$0xff]
      %v194 = vld [vmem:[%s169 + $0x88] sm:$0xff]
      %v195 = vld [vmem:[%s169 + $0x90] sm:$0xff]
      %v196 = vld [vmem:[%s169 + $0x98] sm:$0xff]
      %v197 = vld [vmem:[%s169 + $0xa0] sm:$0xff]
      %v198 = vld [vmem:[%s169 + $0xa8] sm:$0xff]
      %v199 = vld [vmem:[%s169 + $0xb0] sm:$0xff]
      %v200 = vld [vmem:[%s169 + $0xb8] sm:$0xff]
      %v201 = vld [vmem:[%s169 + $0xc0] sm:$0xff]
      %v202 = vld [vmem:[%s169 + $0xc8] sm:$0xff]
      %v203 = vld [vmem:[%s169 + $0xd0] sm:$0xff]
      %v204 = vld [vmem:[%s169 + $0xd8] sm:$0xff]
      %v205 = vld [vmem:[%s169 + $0xe0] sm:$0xff]
      %v206 = vld [vmem:[%s169 + $0xe8] sm:$0xff]
      %v207 = vld [vmem:[%s169 + $0xf0] sm:$0xff]
      %v208 = vld [vmem:[%s169 + $0xf8] sm:$0xff]
      %v209 = vld [vmem:[%s1] sm:$0xff]
      %v210 = vld [vmem:[%s1 + $0x8] sm:$0xff]
      %v211 = vld [vmem:[%s1 + $0x10] sm:$0xff]
      %v212 = vld [vmem:[%s1 + $0x18] sm:$0xff]
      %v213 = vld [vmem:[%s1 + $0x20] sm:$0xff]
      %v214 = vld [vmem:[%s1 + $0x28] sm:$0xff]
      %v215 = vld [vmem:[%s1 + $0x30] sm:$0xff]
      %v216 = vld [vmem:[%s1 + $0x38] sm:$0xff]
      %v217 = vld [vmem:[%s1 + $0x40] sm:$0xff]
      %v218 = vld [vmem:[%s1 + $0x48] sm:$0xff]
      %v219 = vld [vmem:[%s1 + $0x50] sm:$0xff]
      %v220 = vld [vmem:[%s1 + $0x58] sm:$0xff]
      %v221 = vld [vmem:[%s1 + $0x60] sm:$0xff]
      %v222 = vld [vmem:[%s1 + $0x68] sm:$0xff]
      %v223 = vld [vmem:[%s1 + $0x70] sm:$0xff]
      %v224 = vld [vmem:[%s1 + $0x78] sm:$0xff]
      %v225 = vld [vmem:[%s1 + $0x80] sm:$0xff]
      %v226 = vld [vmem:[%s1 + $0x88] sm:$0xff]
      %v227 = vld [vmem:[%s1 + $0x90] sm:$0xff]
      %v228 = vld [vmem:[%s1 + $0x98] sm:$0xff]
      %v229 = vld [vmem:[%s1 + $0xa0] sm:$0xff]
      %v230 = vld [vmem:[%s1 + $0xa8] sm:$0xff]
      %v231 = vld [vmem:[%s1 + $0xb0] sm:$0xff]
      %v232 = vld [vmem:[%s1 + $0xb8] sm:$0xff]
      %v233 = vld [vmem:[%s1 + $0xc0] sm:$0xff]
      %v234 = vld [vmem:[%s1 + $0xc8] sm:$0xff]
      %v235 = vld [vmem:[%s1 + $0xd0] sm:$0xff]
      %v236 = vld [vmem:[%s1 + $0xd8] sm:$0xff]
      %v237 = vld [vmem:[%s1 + $0xe0] sm:$0xff]
      %v238 = vld [vmem:[%s1 + $0xe8] sm:$0xff]
      %v239 = vld [vmem:[%s1 + $0xf0] sm:$0xff]
      %v240 = vld [vmem:[%s1 + $0xf8] sm:$0xff]
      %v241 = vld [vmem:[%s2] sm:$0x1]
      %v243 = vlaneseq
      %v244 = vshrl.u32 %v243, 7
      %v245 = vsub.s32 0, %v244
      %v246 = vrot.slane %v241, %v245
      %248 = vmatprep.subr.mxu0 0.0
      %249 = vmatpush1.msra.mxu0 %v209
      %250 = vmatprep.subr.mxu0 0.0
      %251 = vmatpush1.msra.mxu0 %v210
      %252 = vmatprep.subr.mxu0 0.0
      %253 = vmatpush1.msra.mxu0 %v211
      %254 = vmatprep.subr.mxu0 0.0
      %255 = vmatpush1.msra.mxu0 %v212
      %256 = vmatprep.subr.mxu0 0.0
      %257 = vmatpush1.msra.mxu0 %v213
      %258 = vmatprep.subr.mxu0 0.0
      %259 = vmatpush1.msra.mxu0 %v214
      %260 = vmatprep.subr.mxu0 0.0
      %261 = vmatpush1.msra.mxu0 %v215
      %262 = vmatprep.subr.mxu0 0.0
      %263 = vmatpush1.msra.mxu0 %v216
      %264 = vmatprep.subr.mxu0 0.0
      %265 = vmatpush1.msra.mxu0 %v217
      %266 = vmatprep.subr.mxu0 0.0
      %267 = vmatpush1.msra.mxu0 %v218
      %268 = vmatprep.subr.mxu0 0.0
      %269 = vmatpush1.msra.mxu0 %v219
      %270 = vmatprep.subr.mxu0 0.0
      %271 = vmatpush1.msra.mxu0 %v220
      %272 = vmatprep.subr.mxu0 0.0
      %273 = vmatpush1.msra.mxu0 %v221
      %274 = vmatprep.subr.mxu0 0.0
      %275 = vmatpush1.msra.mxu0 %v222
      %276 = vmatprep.subr.mxu0 0.0
      %277 = vmatpush1.msra.mxu0 %v223
      %278 = vmatprep.subr.mxu0 0.0
      %279 = vmatpush1.msra.mxu0 %v224
      %280 = vmatprep.subr.mxu0 0.0
      %281 = vmatpush1.msra.mxu0 %v225
      %282 = vmatprep.subr.mxu0 0.0
      %283 = vmatpush1.msra.mxu0 %v226
      %284 = vmatprep.subr.mxu0 0.0
      %285 = vmatpush1.msra.mxu0 %v227
      %286 = vmatprep.subr.mxu0 0.0
      %287 = vmatpush1.msra.mxu0 %v228
      %288 = vmatprep.subr.mxu0 0.0
      %289 = vmatpush1.msra.mxu0 %v229
      %290 = vmatprep.subr.mxu0 0.0
      %291 = vmatpush1.msra.mxu0 %v230
      %292 = vmatprep.subr.mxu0 0.0
      %293 = vmatpush1.msra.mxu0 %v231
      %294 = vmatprep.subr.mxu0 0.0
      %295 = vmatpush1.msra.mxu0 %v232
      %296 = vmatprep.subr.mxu0 0.0
      %297 = vmatpush1.msra.mxu0 %v233
      %298 = vmatprep.subr.mxu0 0.0
      %299 = vmatpush1.msra.mxu0 %v234
      %300 = vmatprep.subr.mxu0 0.0
      %301 = vmatpush1.msra.mxu0 %v235
      %302 = vmatprep.subr.mxu0 0.0
      %303 = vmatpush1.msra.mxu0 %v236
      %304 = vmatprep.subr.mxu0 0.0
      %305 = vmatpush1.msra.mxu0 %v237
      %306 = vmatprep.subr.mxu0 0.0
      %307 = vmatpush1.msra.mxu0 %v238
      %308 = vmatprep.subr.mxu0 0.0
      %309 = vmatpush1.msra.mxu0 %v239
      %310 = vmatprep.subr.mxu0 0.0
      %311 = vmatpush1.msra.mxu0 %v240
      %312 = vmatprep.mubr.f32.mxu0 %v178
      %313 = vmatmul.mubr.f32.gmra.mrb[0].mxu0 %v177
      %v314 = vpop.f32.mrb[0].mxu0
      %v315 = vadd.f32 %v246, %v314
      %v316 = vpop.f32.mrb[0].mxu0
      %317 = vmatprep.mubr.f32.mxu0 %v180
      %318 = vmatmul.mubr.f32.gmra.mrb[0].mxu0 %v179
      %v319 = vpop.f32.mrb[0].mxu0
      %v320 = vadd.f32 %v246, %v319
      %v321 = vpop.f32.mrb[0].mxu0
      %322 = vmatprep.mubr.f32.mxu0 %v182
      %323 = vmatmul.mubr.f32.gmra.mrb[0].mxu0 %v181
      %v324 = vpop.f32.mrb[0].mxu0
      %v325 = vadd.f32 %v246, %v324
      %v326 = vpop.f32.mrb[0].mxu0
      %327 = vmatprep.mubr.f32.mxu0 %v184
      %328 = vmatmul.mubr.f32.gmra.mrb[0].mxu0 %v183
      %v329 = vpop.f32.mrb[0].mxu0
      %v330 = vadd.f32 %v246, %v329
      %v331 = vpop.f32.mrb[0].mxu0
      %332 = vmatprep.mubr.f32.mxu0 %v186
      %333 = vmatmul.mubr.f32.gmra.mrb[0].mxu0 %v185
      %v334 = vpop.f32.mrb[0].mxu0
      %v335 = vadd.f32 %v246, %v334
      %v336 = vpop.f32.mrb[0].mxu0
      %337 = vmatprep.mubr.f32.mxu0 %v188
      %338 = vmatmul.mubr.f32.gmra.mrb[0].mxu0 %v187
      %v339 = vpop.f32.mrb[0].mxu0
      %v340 = vadd.f32 %v246, %v339
      %v341 = vpop.f32.mrb[0].mxu0
      %342 = vmatprep.mubr.f32.mxu0 %v190
      %343 = vmatmul.mubr.f32.gmra.mrb[0].mxu0 %v189
      %v344 = vpop.f32.mrb[0].mxu0
      %v345 = vadd.f32 %v246, %v344
      %v346 = vpop.f32.mrb[0].mxu0
      %347 = vmatprep.mubr.f32.mxu0 %v192
      %348 = vmatmul.mubr.f32.gmra.mrb[0].mxu0 %v191
      %v349 = vpop.f32.mrb[0].mxu0
      %v350 = vadd.f32 %v246, %v349
      %v351 = vpop.f32.mrb[0].mxu0
      %352 = vmatprep.mubr.f32.mxu0 %v194
      %353 = vmatmul.mubr.f32.gmra.mrb[0].mxu0 %v193
      %v354 = vpop.f32.mrb[0].mxu0
      %v355 = vadd.f32 %v246, %v354
      %v356 = vpop.f32.mrb[0].mxu0
      %357 = vmatprep.mubr.f32.mxu0 %v196
      %358 = vmatmul.mubr.f32.gmra.mrb[0].mxu0 %v195
      %v359 = vpop.f32.mrb[0].mxu0
      %v360 = vadd.f32 %v246, %v359
      %v361 = vpop.f32.mrb[0].mxu0
      %362 = vmatprep.mubr.f32.mxu0 %v198
      %363 = vmatmul.mubr.f32.gmra.mrb[0].mxu0 %v197
      %v364 = vpop.f32.mrb[0].mxu0
      %v365 = vadd.f32 %v246, %v364
      %v366 = vpop.f32.mrb[0].mxu0
      %367 = vmatprep.mubr.f32.mxu0 %v200
      %368 = vmatmul.mubr.f32.gmra.mrb[0].mxu0 %v199
      %v369 = vpop.f32.mrb[0].mxu0
      %v370 = vadd.f32 %v246, %v369
      %v371 = vpop.f32.mrb[0].mxu0
      %372 = vmatprep.mubr.f32.mxu0 %v202
      %373 = vmatmul.mubr.f32.gmra.mrb[0].mxu0 %v201
      %v374 = vpop.f32.mrb[0].mxu0
      %v375 = vadd.f32 %v246, %v374
      %v376 = vpop.f32.mrb[0].mxu0
      %377 = vmatprep.mubr.f32.mxu0 %v204
      %378 = vmatmul.mubr.f32.gmra.mrb[0].mxu0 %v203
      %v379 = vpop.f32.mrb[0].mxu0
      %v380 = vadd.f32 %v246, %v379
      %v381 = vpop.f32.mrb[0].mxu0
      %382 = vmatprep.mubr.f32.mxu0 %v206
      %383 = vmatmul.mubr.f32.gmra.mrb[0].mxu0 %v205
      %v384 = vpop.f32.mrb[0].mxu0
      %v385 = vadd.f32 %v246, %v384
      %v386 = vpop.f32.mrb[0].mxu0
      %387 = vmatprep.mubr.f32.mxu0 %v208
      %388 = vmatmul.mubr.f32.gmra.mrb[0].mxu0 %v207
      %v389 = vpop.f32.mrb[0].mxu0
      %v390 = vadd.f32 %v246, %v389
      %v391 = vpop.f32.mrb[0].mxu0
      %392 = vdwg.mxu0
      %v393 = vmax.f32 %v315, 0.0
      %v394 = vmax.f32 %v320, 0.0
      %v395 = vmax.f32 %v325, 0.0
      %v396 = vmax.f32 %v330, 0.0
      %v397 = vmax.f32 %v335, 0.0
      %v398 = vmax.f32 %v340, 0.0
      %v399 = vmax.f32 %v345, 0.0
      %v400 = vmax.f32 %v350, 0.0
      %v401 = vmax.f32 %v355, 0.0
      %v402 = vmax.f32 %v360, 0.0
      %v403 = vmax.f32 %v365, 0.0
      %v404 = vmax.f32 %v370, 0.0
      %v405 = vmax.f32 %v375, 0.0
      %v406 = vmax.f32 %v380, 0.0
      %v407 = vmax.f32 %v385, 0.0
      %v408 = vmax.f32 %v390, 0.0
      %vm409 = vcmask 261120
      %410 = vst.msk [vmem:[%s175] sm:$0xff] %vm409, %v393
      %411 = vst.msk [vmem:[%s175 + $0x8] sm:$0xff] %vm409, %v394
      %412 = vst.msk [vmem:[%s175 + $0x10] sm:$0xff] %vm409, %v395
      %413 = vst.msk [vmem:[%s175 + $0x18] sm:$0xff] %vm409, %v396
      %414 = vst.msk [vmem:[%s175 + $0x20] sm:$0xff] %vm409, %v397
      %415 = vst.msk [vmem:[%s175 + $0x28] sm:$0xff] %vm409, %v398
      %416 = vst.msk [vmem:[%s175 + $0x30] sm:$0xff] %vm409, %v399
      %417 = vst.msk [vmem:[%s175 + $0x38] sm:$0xff] %vm409, %v400
      %418 = vst.msk [vmem:[%s175 + $0x40] sm:$0xff] %vm409, %v401
      %419 = vst.msk [vmem:[%s175 + $0x48] sm:$0xff] %vm409, %v402
      %420 = vst.msk [vmem:[%s175 + $0x50] sm:$0xff] %vm409, %v403
      %421 = vst.msk [vmem:[%s175 + $0x58] sm:$0xff] %vm409, %v404
      %422 = vst.msk [vmem:[%s175 + $0x60] sm:$0xff] %vm409, %v405
      %423 = vst.msk [vmem:[%s175 + $0x68] sm:$0xff] %vm409, %v406
      %424 = vst.msk [vmem:[%s175 + $0x70] sm:$0xff] %vm409, %v407
      %425 = vst.msk [vmem:[%s175 + $0x78] sm:$0xff] %vm409, %v408
      %s426 = smul.u32 16, %s14
      %p427 = scmp.lt.s32.totalorder %s426, 31
      %s428 = scalar_select %p427, %s426, 31
      %s429 = smul.addr %s428, 8
      %s430 = scalar_lea.vmem %s3, %s429
      // Predicated region
      $region33: #{cnn_icm_forward.4} parent=31 // pred_check
        %p431 = pneg %p100
      $region34: #{cnn_icm_forward.4} parent=31 // pred_check_branch
        %433 = sbr.rel (%p431) target = $region36
      $region35: #{cnn_icm_forward.4} parent=31 // pred_region
        %s434 = smul.u32 16, %s14
      $region36: #{cnn_icm_forward.4} parent=31 // pred_fallthru
        _
    $region32: #{cnn_icm_forward.4} parent=5 // pred_fallthru
      _
    %p435 = scmp.le.s32.totalorder 2, %s9
    // Predicated region
    $region37: #{cnn_icm_forward.4} parent=5 // pred_check
      %p436 = pneg %p435
    $region38: #{cnn_icm_forward.4} parent=5 // pred_check_branch
      %438 = sbr.rel (%p436) target = $region40
    $region39: #{cnn_icm_forward.4} parent=5 // pred_region
      %s439 = ssub.s32 %s9, 2
      // Predicated region
      $region41: #{cnn_icm_forward.4} parent=39 // pred_check
        %p440 = pneg %p106
      $region42: #{cnn_icm_forward.4} parent=39 // pred_check_branch
        %442 = sbr.rel (%p440) target = $region44
      $region43: #{cnn_icm_forward.4} parent=39 // pred_region
        %s443 = smul.u32 16, %s15
        %p444 = scmp.lt.s32.totalorder %s443, 31
        %s445 = scalar_select %p444, %s443, 31
        %s446 = smul.addr %s445, 8
        %s447 = scalar_lea.vmem %s3, %s446
      $region44: #{cnn_icm_forward.4} parent=39 // pred_fallthru
        _
    $region40: #{cnn_icm_forward.4} parent=5 // pred_fallthru
      _
  $region6: #{cnn_icm_forward.4} parent=0 // loop_footer
    %s13 = sadd.s32 1, %s9
  $region7: #{cnn_icm_forward.4} parent=0 // loop_footer_branch
    %8 = sbr.rel target = $region3
  $region8: #{cnn_icm_forward.4} parent=0 // loop_exit
    _

// kernel: cnn_icm_forward.5
$region0: #{cnn_icm_forward.5}
  #allocation0 [shape = 'u32[]', space=smem, size = 0x4, offset = 0x4, fixed_abs, tag = 'smem constant byte address 0x4 - core index']
  #allocation1 [shape = 'u32[144,128]{1,0:T(1,128)}', space=vmem, size = 0x12000, scoped, tag = 'internal scratch']
  %s0 = inlined_call_operand.vmem [shape: f32[36,512], index: 0, kind: input, shape index: {}]
  %s1 = inlined_call_operand.vmem [shape: f32[512,64], index: 1, kind: input, shape index: {}]
  %s2 = inlined_call_operand.vmem [shape: f32[1,64], index: 2, kind: input, shape index: {}]
  %s3 = inlined_call_operand.vmem [shape: f32[36,64], index: 3, kind: output, shape index: {}]
  %s4 = sld [smem:[#allocation0]]
  $region22: #{cnn_icm_forward.5} parent=0
    _
  %s6 = ssub.s32 1, %s4
  %s7 = scalar_select 0, %s6, %s4
  // Predicated region
  $region2: #{cnn_icm_forward.5} parent=0 // pred_check
    _
  $region3: #{cnn_icm_forward.5} parent=0 // pred_check_branch
    %9 = sbr.rel (0) target = $region5
  $region4: #{cnn_icm_forward.5} parent=0 // pred_region
    _
  $region5: #{cnn_icm_forward.5} parent=0 // pred_fallthru
    _
  // Predicated region
  $region6: #{cnn_icm_forward.5} parent=0 // pred_check
    _
  $region7: #{cnn_icm_forward.5} parent=0 // pred_check_branch
    %11 = sbr.rel (0) target = $region9
  $region8: #{cnn_icm_forward.5} parent=0 // pred_region
    _
  $region9: #{cnn_icm_forward.5} parent=0 // pred_fallthru
    _
  // Predicated region
  $region10: #{cnn_icm_forward.5} parent=0 // pred_check
    _
  $region11: #{cnn_icm_forward.5} parent=0 // pred_check_branch
    %13 = sbr.rel (0) target = $region13
  $region12: #{cnn_icm_forward.5} parent=0 // pred_region
    _
  $region13: #{cnn_icm_forward.5} parent=0 // pred_fallthru
    _
  %v14 = vld [vmem:[%s0] sm:$0xff]
  %v15 = vld [vmem:[%s0 + $0x8] sm:$0xff]
  %v16 = vld [vmem:[%s0 + $0x10] sm:$0xff]
  %v17 = vld [vmem:[%s0 + $0x18] sm:$0xff]
  %v18 = vld [vmem:[%s0 + $0x20] sm:$0xff]
  %v19 = vld [vmem:[%s0 + $0x28] sm:$0xff]
  %v20 = vld [vmem:[%s0 + $0x30] sm:$0xff]
  %v21 = vld [vmem:[%s0 + $0x38] sm:$0xff]
  %v22 = vld [vmem:[%s0 + $0x40] sm:$0xff]
  %v23 = vld [vmem:[%s0 + $0x48] sm:$0xff]
  %v24 = vld [vmem:[%s0 + $0x50] sm:$0xff]
  %v25 = vld [vmem:[%s0 + $0x58] sm:$0xff]
  %v26 = vld [vmem:[%s0 + $0x60] sm:$0xff]
  %v27 = vld [vmem:[%s0 + $0x68] sm:$0xff]
  %v28 = vld [vmem:[%s0 + $0x70] sm:$0xff]
  %v29 = vld [vmem:[%s0 + $0x78] sm:$0xff]
  %v30 = vld [vmem:[%s0 + $0x80] sm:$0xf]
  %v31 = vld [vmem:[%s0 + $0x88] sm:$0xf]
  %v32 = vld [vmem:[%s0 + $0x90] sm:$0xf]
  %v33 = vld [vmem:[%s0 + $0x98] sm:$0xf]
  %v34 = vld [vmem:[%s1] sm:$0xff]
  %v35 = vld [vmem:[%s1 + $0x8] sm:$0xff]
  %v36 = vld [vmem:[%s1 + $0x10] sm:$0xff]
  %v37 = vld [vmem:[%s1 + $0x18] sm:$0xff]
  %v38 = vld [vmem:[%s1 + $0x20] sm:$0xff]
  %v39 = vld [vmem:[%s1 + $0x28] sm:$0xff]
  %v40 = vld [vmem:[%s1 + $0x30] sm:$0xff]
  %v41 = vld [vmem:[%s1 + $0x38] sm:$0xff]
  %v42 = vld [vmem:[%s1 + $0x40] sm:$0xff]
  %v43 = vld [vmem:[%s1 + $0x48] sm:$0xff]
  %v44 = vld [vmem:[%s1 + $0x50] sm:$0xff]
  %v45 = vld [vmem:[%s1 + $0x58] sm:$0xff]
  %v46 = vld [vmem:[%s1 + $0x60] sm:$0xff]
  %v47 = vld [vmem:[%s1 + $0x68] sm:$0xff]
  %v48 = vld [vmem:[%s1 + $0x70] sm:$0xff]
  %v49 = vld [vmem:[%s1 + $0x78] sm:$0xff]
  %v50 = vld [vmem:[%s1 + $0x80] sm:$0xff]
  %v51 = vld [vmem:[%s1 + $0x88] sm:$0xff]
  %v52 = vld [vmem:[%s1 + $0x90] sm:$0xff]
  %v53 = vld [vmem:[%s1 + $0x98] sm:$0xff]
  %v54 = vld [vmem:[%s1 + $0xa0] sm:$0xff]
  %v55 = vld [vmem:[%s1 + $0xa8] sm:$0xff]
  %v56 = vld [vmem:[%s1 + $0xb0] sm:$0xff]
  %v57 = vld [vmem:[%s1 + $0xb8] sm:$0xff]
  %v58 = vld [vmem:[%s1 + $0xc0] sm:$0xff]
  %v59 = vld [vmem:[%s1 + $0xc8] sm:$0xff]
  %v60 = vld [vmem:[%s1 + $0xd0] sm:$0xff]
  %v61 = vld [vmem:[%s1 + $0xd8] sm:$0xff]
  %v62 = vld [vmem:[%s1 + $0xe0] sm:$0xff]
  %v63 = vld [vmem:[%s1 + $0xe8] sm:$0xff]
  %v64 = vld [vmem:[%s1 + $0xf0] sm:$0xff]
  %v65 = vld [vmem:[%s1 + $0xf8] sm:$0xff]
  %v66 = vld [vmem:[%s1 + $0x100] sm:$0xff]
  %v67 = vld [vmem:[%s1 + $0x108] sm:$0xff]
  %v68 = vld [vmem:[%s1 + $0x110] sm:$0xff]
  %v69 = vld [vmem:[%s1 + $0x118] sm:$0xff]
  %v70 = vld [vmem:[%s1 + $0x120] sm:$0xff]
  %v71 = vld [vmem:[%s1 + $0x128] sm:$0xff]
  %v72 = vld [vmem:[%s1 + $0x130] sm:$0xff]
  %v73 = vld [vmem:[%s1 + $0x138] sm:$0xff]
  %v74 = vld [vmem:[%s1 + $0x140] sm:$0xff]
  %v75 = vld [vmem:[%s1 + $0x148] sm:$0xff]
  %v76 = vld [vmem:[%s1 + $0x150] sm:$0xff]
  %v77 = vld [vmem:[%s1 + $0x158] sm:$0xff]
  %v78 = vld [vmem:[%s1 + $0x160] sm:$0xff]
  %v79 = vld [vmem:[%s1 + $0x168] sm:$0xff]
  %v80 = vld [vmem:[%s1 + $0x170] sm:$0xff]
  %v81 = vld [vmem:[%s1 + $0x178] sm:$0xff]
  %v82 = vld [vmem:[%s1 + $0x180] sm:$0xff]
  %v83 = vld [vmem:[%s1 + $0x188] sm:$0xff]
  %v84 = vld [vmem:[%s1 + $0x190] sm:$0xff]
  %v85 = vld [vmem:[%s1 + $0x198] sm:$0xff]
  %v86 = vld [vmem:[%s1 + $0x1a0] sm:$0xff]
  %v87 = vld [vmem:[%s1 + $0x1a8] sm:$0xff]
  %v88 = vld [vmem:[%s1 + $0x1b0] sm:$0xff]
  %v89 = vld [vmem:[%s1 + $0x1b8] sm:$0xff]
  %v90 = vld [vmem:[%s1 + $0x1c0] sm:$0xff]
  %v91 = vld [vmem:[%s1 + $0x1c8] sm:$0xff]
  %v92 = vld [vmem:[%s1 + $0x1d0] sm:$0xff]
  %v93 = vld [vmem:[%s1 + $0x1d8] sm:$0xff]
  %v94 = vld [vmem:[%s1 + $0x1e0] sm:$0xff]
  %v95 = vld [vmem:[%s1 + $0x1e8] sm:$0xff]
  %v96 = vld [vmem:[%s1 + $0x1f0] sm:$0xff]
  %v97 = vld [vmem:[%s1 + $0x1f8] sm:$0xff]
  %v98 = vld [vmem:[%s2] sm:$0x1]
  %v100 = vlaneseq
  %v101 = vshrl.u32 %v100, 7
  %v102 = vsub.s32 0, %v101
  %v103 = vrot.slane %v98, %v102
  %105 = vmatprep.subr.mxu0 0.0
  %106 = vmatpush1.msra.mxu0 %v34
  %107 = vmatprep.subr.mxu0 0.0
  %108 = vmatpush1.msra.mxu0 %v35
  %109 = vmatprep.subr.mxu0 0.0
  %110 = vmatpush1.msra.mxu0 %v36
  %111 = vmatprep.subr.mxu0 0.0
  %112 = vmatpush1.msra.mxu0 %v37
  %113 = vmatprep.subr.mxu0 0.0
  %114 = vmatpush1.msra.mxu0 %v38
  %115 = vmatprep.subr.mxu0 0.0
  %116 = vmatpush1.msra.mxu0 %v39
  %117 = vmatprep.subr.mxu0 0.0
  %118 = vmatpush1.msra.mxu0 %v40
  %119 = vmatprep.subr.mxu0 0.0
  %120 = vmatpush1.msra.mxu0 %v41
  %121 = vmatprep.subr.mxu0 0.0
  %122 = vmatpush1.msra.mxu0 %v42
  %123 = vmatprep.subr.mxu0 0.0
  %124 = vmatpush1.msra.mxu0 %v43
  %125 = vmatprep.subr.mxu0 0.0
  %126 = vmatpush1.msra.mxu0 %v44
  %127 = vmatprep.subr.mxu0 0.0
  %128 = vmatpush1.msra.mxu0 %v45
  %129 = vmatprep.subr.mxu0 0.0
  %130 = vmatpush1.msra.mxu0 %v46
  %131 = vmatprep.subr.mxu0 0.0
  %132 = vmatpush1.msra.mxu0 %v47
  %133 = vmatprep.subr.mxu0 0.0
  %134 = vmatpush1.msra.mxu0 %v48
  %135 = vmatprep.subr.mxu0 0.0
  %136 = vmatpush1.msra.mxu0 %v49
  %137 = vmatprep.subr.mxu0 0.0
  %138 = vmatpush1.msra.mxu0 %v50
  %139 = vmatprep.subr.mxu0 0.0
  %140 = vmatpush1.msra.mxu0 %v51
  %141 = vmatprep.subr.mxu0 0.0
  %142 = vmatpush1.msra.mxu0 %v52
  %143 = vmatprep.subr.mxu0 0.0
  %144 = vmatpush1.msra.mxu0 %v53
  %145 = vmatprep.subr.mxu0 0.0
  %146 = vmatpush1.msra.mxu0 %v54
  %147 = vmatprep.subr.mxu0 0.0
  %148 = vmatpush1.msra.mxu0 %v55
  %149 = vmatprep.subr.mxu0 0.0
  %150 = vmatpush1.msra.mxu0 %v56
  %151 = vmatprep.subr.mxu0 0.0
  %152 = vmatpush1.msra.mxu0 %v57
  %153 = vmatprep.subr.mxu0 0.0
  %154 = vmatpush1.msra.mxu0 %v58
  %155 = vmatprep.subr.mxu0 0.0
  %156 = vmatpush1.msra.mxu0 %v59
  %157 = vmatprep.subr.mxu0 0.0
  %158 = vmatpush1.msra.mxu0 %v60
  %159 = vmatprep.subr.mxu0 0.0
  %160 = vmatpush1.msra.mxu0 %v61
  %161 = vmatprep.subr.mxu0 0.0
  %162 = vmatpush1.msra.mxu0 %v62
  %163 = vmatprep.subr.mxu0 0.0
  %164 = vmatpush1.msra.mxu0 %v63
  %165 = vmatprep.subr.mxu0 0.0
  %166 = vmatpush1.msra.mxu0 %v64
  %167 = vmatprep.subr.mxu0 0.0
  %168 = vmatpush1.msra.mxu0 %v65
  %169 = vmatprep.mubr.f32.mxu0 %v15
  %170 = vmatmul.mubr.f32.gmra.mrb[0].mxu0 %v14
  %v171 = vpop.f32.mrb[0].mxu0
  %v172 = vadd.f32 %v103, %v171
  %v173 = vpop.f32.mrb[0].mxu0
  %174 = vmatprep.mubr.f32.mxu0 %v19
  %175 = vmatmul.mubr.f32.gmra.mrb[0].mxu0 %v18
  %v176 = vpop.f32.mrb[0].mxu0
  %v177 = vadd.f32 %v103, %v176
  %v178 = vpop.f32.mrb[0].mxu0
  %179 = vmatprep.mubr.f32.mxu0 %v23
  %180 = vmatmul.mubr.f32.gmra.mrb[0].mxu0 %v22
  %v181 = vpop.f32.mrb[0].mxu0
  %v182 = vadd.f32 %v103, %v181
  %v183 = vpop.f32.mrb[0].mxu0
  %184 = vmatprep.mubr.f32.mxu0 %v27
  %185 = vmatmul.mubr.f32.gmra.mrb[0].mxu0 %v26
  %v186 = vpop.f32.mrb[0].mxu0
  %v187 = vadd.f32 %v103, %v186
  %v188 = vpop.f32.mrb[0].mxu0
  %189 = vmatprep.mubr.f32.mxu0 %v31
  %190 = vmatmul.mubr.f32.gmra.mrb[0].mxu0 %v30
  %v191 = vpop.f32.mrb[0].mxu0
  %v192 = vadd.f32 %v103, %v191
  %v193 = vpop.f32.mrb[0].mxu0
  %194 = vdwg.mxu0
  %195 = vmatprep.subr.mxu0 0.0
  %196 = vmatpush1.msra.mxu0 %v66
  %197 = vmatprep.subr.mxu0 0.0
  %198 = vmatpush1.msra.mxu0 %v67
  %199 = vmatprep.subr.mxu0 0.0
  %200 = vmatpush1.msra.mxu0 %v68
  %201 = vmatprep.subr.mxu0 0.0
  %202 = vmatpush1.msra.mxu0 %v69
  %203 = vmatprep.subr.mxu0 0.0
  %204 = vmatpush1.msra.mxu0 %v70
  %205 = vmatprep.subr.mxu0 0.0
  %206 = vmatpush1.msra.mxu0 %v71
  %207 = vmatprep.subr.mxu0 0.0
  %208 = vmatpush1.msra.mxu0 %v72
  %209 = vmatprep.subr.mxu0 0.0
  %210 = vmatpush1.msra.mxu0 %v73
  %211 = vmatprep.subr.mxu0 0.0
  %212 = vmatpush1.msra.mxu0 %v74
  %213 = vmatprep.subr.mxu0 0.0
  %214 = vmatpush1.msra.mxu0 %v75
  %215 = vmatprep.subr.mxu0 0.0
  %216 = vmatpush1.msra.mxu0 %v76
  %217 = vmatprep.subr.mxu0 0.0
  %218 = vmatpush1.msra.mxu0 %v77
  %219 = vmatprep.subr.mxu0 0.0
  %220 = vmatpush1.msra.mxu0 %v78
  %221 = vmatprep.subr.mxu0 0.0
  %222 = vmatpush1.msra.mxu0 %v79
  %223 = vmatprep.subr.mxu0 0.0
  %224 = vmatpush1.msra.mxu0 %v80
  %225 = vmatprep.subr.mxu0 0.0
  %226 = vmatpush1.msra.mxu0 %v81
  %227 = vmatprep.subr.mxu0 0.0
  %228 = vmatpush1.msra.mxu0 %v82
  %229 = vmatprep.subr.mxu0 0.0
  %230 = vmatpush1.msra.mxu0 %v83
  %231 = vmatprep.subr.mxu0 0.0
  %232 = vmatpush1.msra.mxu0 %v84
  %233 = vmatprep.subr.mxu0 0.0
  %234 = vmatpush1.msra.mxu0 %v85
  %235 = vmatprep.subr.mxu0 0.0
  %236 = vmatpush1.msra.mxu0 %v86
  %237 = vmatprep.subr.mxu0 0.0
  %238 = vmatpush1.msra.mxu0 %v87
  %239 = vmatprep.subr.mxu0 0.0
  %240 = vmatpush1.msra.mxu0 %v88
  %241 = vmatprep.subr.mxu0 0.0
  %242 = vmatpush1.msra.mxu0 %v89
  %243 = vmatprep.subr.mxu0 0.0
  %244 = vmatpush1.msra.mxu0 %v90
  %245 = vmatprep.subr.mxu0 0.0
  %246 = vmatpush1.msra.mxu0 %v91
  %247 = vmatprep.subr.mxu0 0.0
  %248 = vmatpush1.msra.mxu0 %v92
  %249 = vmatprep.subr.mxu0 0.0
  %250 = vmatpush1.msra.mxu0 %v93
  %251 = vmatprep.subr.mxu0 0.0
  %252 = vmatpush1.msra.mxu0 %v94
  %253 = vmatprep.subr.mxu0 0.0
  %254 = vmatpush1.msra.mxu0 %v95
  %255 = vmatprep.subr.mxu0 0.0
  %256 = vmatpush1.msra.mxu0 %v96
  %257 = vmatprep.subr.mxu0 0.0
  %258 = vmatpush1.msra.mxu0 %v97
  %259 = vmatprep.mubr.f32.mxu0 %v17
  %260 = vmatmul.mubr.f32.gmra.mrb[0].mxu0 %v16
  %v261 = vpop.f32.mrb[0].mxu0
  %v262 = vadd.f32 %v172, %v261
  %v263 = vpop.f32.mrb[0].mxu0
  %264 = vmatprep.mubr.f32.mxu0 %v21
  %265 = vmatmul.mubr.f32.gmra.mrb[0].mxu0 %v20
  %v266 = vpop.f32.mrb[0].mxu0
  %v267 = vadd.f32 %v177, %v266
  %v268 = vpop.f32.mrb[0].mxu0
  %269 = vmatprep.mubr.f32.mxu0 %v25
  %270 = vmatmul.mubr.f32.gmra.mrb[0].mxu0 %v24
  %v271 = vpop.f32.mrb[0].mxu0
  %v272 = vadd.f32 %v182, %v271
  %v273 = vpop.f32.mrb[0].mxu0
  %274 = vmatprep.mubr.f32.mxu0 %v29
  %275 = vmatmul.mubr.f32.gmra.mrb[0].mxu0 %v28
  %v276 = vpop.f32.mrb[0].mxu0
  %v277 = vadd.f32 %v187, %v276
  %v278 = vpop.f32.mrb[0].mxu0
  %279 = vmatprep.mubr.f32.mxu0 %v33
  %280 = vmatmul.mubr.f32.gmra.mrb[0].mxu0 %v32
  %v281 = vpop.f32.mrb[0].mxu0
  %v282 = vadd.f32 %v192, %v281
  %v283 = vpop.f32.mrb[0].mxu0
  %284 = vdwg.mxu0
  %v285 = vmax.f32 %v262, 0.0
  %v286 = vmax.f32 %v267, 0.0
  %v287 = vmax.f32 %v272, 0.0
  %v288 = vmax.f32 %v277, 0.0
  %v289 = vmax.f32 %v282, 0.0
  %vm290 = vcmask 523264
  %291 = vst.msk [vmem:[%s3] sm:$0xff] %vm290, %v285
  %292 = vst.msk [vmem:[%s3 + $0x8] sm:$0xff] %vm290, %v286
  %293 = vst.msk [vmem:[%s3 + $0x10] sm:$0xff] %vm290, %v287
  %294 = vst.msk [vmem:[%s3 + $0x18] sm:$0xff] %vm290, %v288
  %vm295 = vcmask 519168
  %296 = vst.msk [vmem:[%s3 + $0x20] sm:$0xf] %vm295, %v289
  // Predicated region
  $region14: #{cnn_icm_forward.5} parent=0 // pred_check
    _
  $region15: #{cnn_icm_forward.5} parent=0 // pred_check_branch
    %298 = sbr.rel (0) target = $region17
  $region16: #{cnn_icm_forward.5} parent=0 // pred_region
    _
  $region17: #{cnn_icm_forward.5} parent=0 // pred_fallthru
    _
  // Predicated region
  $region18: #{cnn_icm_forward.5} parent=0 // pred_check
    _
  $region19: #{cnn_icm_forward.5} parent=0 // pred_check_branch
    %300 = sbr.rel (0) target = $region21
  $region20: #{cnn_icm_forward.5} parent=0 // pred_region
    _
  $region21: #{cnn_icm_forward.5} parent=0 // pred_fallthru
    _

// kernel: cnn_icm_forward.6
$region0: #{cnn_icm_forward.6}
  #allocation0 [shape = 'u32[]', space=smem, size = 0x4, offset = 0x4, fixed_abs, tag = 'smem constant byte address 0x4 - core index']
  #allocation1 [shape = 'u32[144,128]{1,0:T(1,128)}', space=vmem, size = 0x12000, scoped, tag = 'internal scratch']
  %s0 = inlined_call_operand.vmem [shape: f32[4,576], index: 0, kind: input, shape index: {}]
  %s1 = inlined_call_operand.vmem [shape: f32[576,128], index: 1, kind: input, shape index: {}]
  %s2 = inlined_call_operand.vmem [shape: f32[1,128], index: 2, kind: input, shape index: {}]
  %s3 = inlined_call_operand.vmem [shape: f32[4,128], index: 3, kind: output, shape index: {}]
  %s4 = sld [smem:[#allocation0]]
  $region22: #{cnn_icm_forward.6} parent=0
    _
  %s6 = ssub.s32 1, %s4
  %s7 = scalar_select 0, %s6, %s4
  // Predicated region
  $region2: #{cnn_icm_forward.6} parent=0 // pred_check
    _
  $region3: #{cnn_icm_forward.6} parent=0 // pred_check_branch
    %9 = sbr.rel (0) target = $region5
  $region4: #{cnn_icm_forward.6} parent=0 // pred_region
    _
  $region5: #{cnn_icm_forward.6} parent=0 // pred_fallthru
    _
  // Predicated region
  $region6: #{cnn_icm_forward.6} parent=0 // pred_check
    _
  $region7: #{cnn_icm_forward.6} parent=0 // pred_check_branch
    %11 = sbr.rel (0) target = $region9
  $region8: #{cnn_icm_forward.6} parent=0 // pred_region
    _
  $region9: #{cnn_icm_forward.6} parent=0 // pred_fallthru
    _
  // Predicated region
  $region10: #{cnn_icm_forward.6} parent=0 // pred_check
    _
  $region11: #{cnn_icm_forward.6} parent=0 // pred_check_branch
    %13 = sbr.rel (0) target = $region13
  $region12: #{cnn_icm_forward.6} parent=0 // pred_region
    _
  $region13: #{cnn_icm_forward.6} parent=0 // pred_fallthru
    _
  %v14 = vld [vmem:[%s0] sm:$0xff]
  %v15 = vld [vmem:[%s0 + $0x8] sm:$0xff]
  %v16 = vld [vmem:[%s0 + $0x10] sm:$0xf]
  %v17 = vld [vmem:[%s1] sm:$0xff]
  %v18 = vld [vmem:[%s1 + $0x8] sm:$0xff]
  %v19 = vld [vmem:[%s1 + $0x10] sm:$0xff]
  %v20 = vld [vmem:[%s1 + $0x18] sm:$0xff]
  %v21 = vld [vmem:[%s1 + $0x20] sm:$0xff]
  %v22 = vld [vmem:[%s1 + $0x28] sm:$0xff]
  %v23 = vld [vmem:[%s1 + $0x30] sm:$0xff]
  %v24 = vld [vmem:[%s1 + $0x38] sm:$0xff]
  %v25 = vld [vmem:[%s1 + $0x40] sm:$0xff]
  %v26 = vld [vmem:[%s1 + $0x48] sm:$0xff]
  %v27 = vld [vmem:[%s1 + $0x50] sm:$0xff]
  %v28 = vld [vmem:[%s1 + $0x58] sm:$0xff]
  %v29 = vld [vmem:[%s1 + $0x60] sm:$0xff]
  %v30 = vld [vmem:[%s1 + $0x68] sm:$0xff]
  %v31 = vld [vmem:[%s1 + $0x70] sm:$0xff]
  %v32 = vld [vmem:[%s1 + $0x78] sm:$0xff]
  %v33 = vld [vmem:[%s1 + $0x80] sm:$0xff]
  %v34 = vld [vmem:[%s1 + $0x88] sm:$0xff]
  %v35 = vld [vmem:[%s1 + $0x90] sm:$0xff]
  %v36 = vld [vmem:[%s1 + $0x98] sm:$0xff]
  %v37 = vld [vmem:[%s1 + $0xa0] sm:$0xff]
  %v38 = vld [vmem:[%s1 + $0xa8] sm:$0xff]
  %v39 = vld [vmem:[%s1 + $0xb0] sm:$0xff]
  %v40 = vld [vmem:[%s1 + $0xb8] sm:$0xff]
  %v41 = vld [vmem:[%s1 + $0xc0] sm:$0xff]
  %v42 = vld [vmem:[%s1 + $0xc8] sm:$0xff]
  %v43 = vld [vmem:[%s1 + $0xd0] sm:$0xff]
  %v44 = vld [vmem:[%s1 + $0xd8] sm:$0xff]
  %v45 = vld [vmem:[%s1 + $0xe0] sm:$0xff]
  %v46 = vld [vmem:[%s1 + $0xe8] sm:$0xff]
  %v47 = vld [vmem:[%s1 + $0xf0] sm:$0xff]
  %v48 = vld [vmem:[%s1 + $0xf8] sm:$0xff]
  %v49 = vld [vmem:[%s1 + $0x100] sm:$0xff]
  %v50 = vld [vmem:[%s1 + $0x108] sm:$0xff]
  %v51 = vld [vmem:[%s1 + $0x110] sm:$0xff]
  %v52 = vld [vmem:[%s1 + $0x118] sm:$0xff]
  %v53 = vld [vmem:[%s1 + $0x120] sm:$0xff]
  %v54 = vld [vmem:[%s1 + $0x128] sm:$0xff]
  %v55 = vld [vmem:[%s1 + $0x130] sm:$0xff]
  %v56 = vld [vmem:[%s1 + $0x138] sm:$0xff]
  %v57 = vld [vmem:[%s1 + $0x140] sm:$0xff]
  %v58 = vld [vmem:[%s1 + $0x148] sm:$0xff]
  %v59 = vld [vmem:[%s1 + $0x150] sm:$0xff]
  %v60 = vld [vmem:[%s1 + $0x158] sm:$0xff]
  %v61 = vld [vmem:[%s1 + $0x160] sm:$0xff]
  %v62 = vld [vmem:[%s1 + $0x168] sm:$0xff]
  %v63 = vld [vmem:[%s1 + $0x170] sm:$0xff]
  %v64 = vld [vmem:[%s1 + $0x178] sm:$0xff]
  %v65 = vld [vmem:[%s1 + $0x180] sm:$0xff]
  %v66 = vld [vmem:[%s1 + $0x188] sm:$0xff]
  %v67 = vld [vmem:[%s1 + $0x190] sm:$0xff]
  %v68 = vld [vmem:[%s1 + $0x198] sm:$0xff]
  %v69 = vld [vmem:[%s1 + $0x1a0] sm:$0xff]
  %v70 = vld [vmem:[%s1 + $0x1a8] sm:$0xff]
  %v71 = vld [vmem:[%s1 + $0x1b0] sm:$0xff]
  %v72 = vld [vmem:[%s1 + $0x1b8] sm:$0xff]
  %v73 = vld [vmem:[%s1 + $0x1c0] sm:$0xff]
  %v74 = vld [vmem:[%s1 + $0x1c8] sm:$0xff]
  %v75 = vld [vmem:[%s1 + $0x1d0] sm:$0xff]
  %v76 = vld [vmem:[%s1 + $0x1d8] sm:$0xff]
  %v77 = vld [vmem:[%s1 + $0x1e0] sm:$0xff]
  %v78 = vld [vmem:[%s1 + $0x1e8] sm:$0xff]
  %v79 = vld [vmem:[%s1 + $0x1f0] sm:$0xff]
  %v80 = vld [vmem:[%s1 + $0x1f8] sm:$0xff]
  %v81 = vld [vmem:[%s1 + $0x200] sm:$0xff]
  %v82 = vld [vmem:[%s1 + $0x208] sm:$0xff]
  %v83 = vld [vmem:[%s1 + $0x210] sm:$0xff]
  %v84 = vld [vmem:[%s1 + $0x218] sm:$0xff]
  %v85 = vld [vmem:[%s1 + $0x220] sm:$0xff]
  %v86 = vld [vmem:[%s1 + $0x228] sm:$0xff]
  %v87 = vld [vmem:[%s1 + $0x230] sm:$0xff]
  %v88 = vld [vmem:[%s1 + $0x238] sm:$0xff]
  %v89 = vld [vmem:[%s2] sm:$0x1]
  %v91 = vlaneseq
  %v92 = vshrl.u32 %v91, 7
  %v93 = vsub.s32 0, %v92
  %v94 = vrot.slane %v89, %v93
  %v99 = vcombine.high %v14, %v14
  %v100 = vcombine.high %v15, %v15
  %vm103 = vcmask 523264
  %v104 = vsel %vm103, %v16, 0
  %106 = vmatprep.subr.mxu0 0.0
  %107 = vmatpush1.msra.mxu0 %v17
  %108 = vmatprep.subr.mxu0 0.0
  %109 = vmatpush1.msra.mxu0 %v18
  %110 = vmatprep.subr.mxu0 0.0
  %111 = vmatpush1.msra.mxu0 %v19
  %112 = vmatprep.subr.mxu0 0.0
  %113 = vmatpush1.msra.mxu0 %v20
  %114 = vmatprep.subr.mxu0 0.0
  %115 = vmatpush1.msra.mxu0 %v21
  %116 = vmatprep.subr.mxu0 0.0
  %117 = vmatpush1.msra.mxu0 %v22
  %118 = vmatprep.subr.mxu0 0.0
  %119 = vmatpush1.msra.mxu0 %v23
  %120 = vmatprep.subr.mxu0 0.0
  %121 = vmatpush1.msra.mxu0 %v24
  %122 = vmatprep.subr.mxu0 0.0
  %123 = vmatpush1.msra.mxu0 %v25
  %124 = vmatprep.subr.mxu0 0.0
  %125 = vmatpush1.msra.mxu0 %v26
  %126 = vmatprep.subr.mxu0 0.0
  %127 = vmatpush1.msra.mxu0 %v27
  %128 = vmatprep.subr.mxu0 0.0
  %129 = vmatpush1.msra.mxu0 %v28
  %130 = vmatprep.subr.mxu0 0.0
  %131 = vmatpush1.msra.mxu0 %v29
  %132 = vmatprep.subr.mxu0 0.0
  %133 = vmatpush1.msra.mxu0 %v30
  %134 = vmatprep.subr.mxu0 0.0
  %135 = vmatpush1.msra.mxu0 %v31
  %136 = vmatprep.subr.mxu0 0.0
  %137 = vmatpush1.msra.mxu0 %v32
  %138 = vmatprep.subr.mxu0 0.0
  %139 = vmatpush1.msra.mxu0 %v33
  %140 = vmatprep.subr.mxu0 0.0
  %141 = vmatpush1.msra.mxu0 %v34
  %142 = vmatprep.subr.mxu0 0.0
  %143 = vmatpush1.msra.mxu0 %v35
  %144 = vmatprep.subr.mxu0 0.0
  %145 = vmatpush1.msra.mxu0 %v36
  %146 = vmatprep.subr.mxu0 0.0
  %147 = vmatpush1.msra.mxu0 %v37
  %148 = vmatprep.subr.mxu0 0.0
  %149 = vmatpush1.msra.mxu0 %v38
  %150 = vmatprep.subr.mxu0 0.0
  %151 = vmatpush1.msra.mxu0 %v39
  %152 = vmatprep.subr.mxu0 0.0
  %153 = vmatpush1.msra.mxu0 %v40
  %154 = vmatprep.subr.mxu0 0.0
  %155 = vmatpush1.msra.mxu0 %v41
  %156 = vmatprep.subr.mxu0 0.0
  %157 = vmatpush1.msra.mxu0 %v42
  %158 = vmatprep.subr.mxu0 0.0
  %159 = vmatpush1.msra.mxu0 %v43
  %160 = vmatprep.subr.mxu0 0.0
  %161 = vmatpush1.msra.mxu0 %v44
  %162 = vmatprep.subr.mxu0 0.0
  %163 = vmatpush1.msra.mxu0 %v45
  %164 = vmatprep.subr.mxu0 0.0
  %165 = vmatpush1.msra.mxu0 %v46
  %166 = vmatprep.subr.mxu0 0.0
  %167 = vmatpush1.msra.mxu0 %v47
  %168 = vmatprep.subr.mxu0 0.0
  %169 = vmatpush1.msra.mxu0 %v48
  %170 = vmatprep.mubr.f32.mxu0 %v99
  %171 = vmatmul.mubr.f32.gmra.mrb[0].mxu0 %v14
  %v172 = vpop.f32.mrb[0].mxu0
  %v173 = vadd.f32 %v94, %v172
  %v174 = vpop.f32.mrb[0].mxu0
  %175 = vdwg.mxu0
  %176 = vmatprep.subr.mxu0 0.0
  %177 = vmatpush1.msra.mxu0 %v49
  %178 = vmatprep.subr.mxu0 0.0
  %179 = vmatpush1.msra.mxu0 %v50
  %180 = vmatprep.subr.mxu0 0.0
  %181 = vmatpush1.msra.mxu0 %v51
  %182 = vmatprep.subr.mxu0 0.0
  %183 = vmatpush1.msra.mxu0 %v52
  %184 = vmatprep.subr.mxu0 0.0
  %185 = vmatpush1.msra.mxu0 %v53
  %186 = vmatprep.subr.mxu0 0.0
  %187 = vmatpush1.msra.mxu0 %v54
  %188 = vmatprep.subr.mxu0 0.0
  %189 = vmatpush1.msra.mxu0 %v55
  %190 = vmatprep.subr.mxu0 0.0
  %191 = vmatpush1.msra.mxu0 %v56
  %192 = vmatprep.subr.mxu0 0.0
  %193 = vmatpush1.msra.mxu0 %v57
  %194 = vmatprep.subr.mxu0 0.0
  %195 = vmatpush1.msra.mxu0 %v58
  %196 = vmatprep.subr.mxu0 0.0
  %197 = vmatpush1.msra.mxu0 %v59
  %198 = vmatprep.subr.mxu0 0.0
  %199 = vmatpush1.msra.mxu0 %v60
  %200 = vmatprep.subr.mxu0 0.0
  %201 = vmatpush1.msra.mxu0 %v61
  %202 = vmatprep.subr.mxu0 0.0
  %203 = vmatpush1.msra.mxu0 %v62
  %204 = vmatprep.subr.mxu0 0.0
  %205 = vmatpush1.msra.mxu0 %v63
  %206 = vmatprep.subr.mxu0 0.0
  %207 = vmatpush1.msra.mxu0 %v64
  %208 = vmatprep.subr.mxu0 0.0
  %209 = vmatpush1.msra.mxu0 %v65
  %210 = vmatprep.subr.mxu0 0.0
  %211 = vmatpush1.msra.mxu0 %v66
  %212 = vmatprep.subr.mxu0 0.0
  %213 = vmatpush1.msra.mxu0 %v67
  %214 = vmatprep.subr.mxu0 0.0
  %215 = vmatpush1.msra.mxu0 %v68
  %216 = vmatprep.subr.mxu0 0.0
  %217 = vmatpush1.msra.mxu0 %v69
  %218 = vmatprep.subr.mxu0 0.0
  %219 = vmatpush1.msra.mxu0 %v70
  %220 = vmatprep.subr.mxu0 0.0
  %221 = vmatpush1.msra.mxu0 %v71
  %222 = vmatprep.subr.mxu0 0.0
  %223 = vmatpush1.msra.mxu0 %v72
  %224 = vmatprep.subr.mxu0 0.0
  %225 = vmatpush1.msra.mxu0 %v73
  %226 = vmatprep.subr.mxu0 0.0
  %227 = vmatpush1.msra.mxu0 %v74
  %228 = vmatprep.subr.mxu0 0.0
  %229 = vmatpush1.msra.mxu0 %v75
  %230 = vmatprep.subr.mxu0 0.0
  %231 = vmatpush1.msra.mxu0 %v76
  %232 = vmatprep.subr.mxu0 0.0
  %233 = vmatpush1.msra.mxu0 %v77
  %234 = vmatprep.subr.mxu0 0.0
  %235 = vmatpush1.msra.mxu0 %v78
  %236 = vmatprep.subr.mxu0 0.0
  %237 = vmatpush1.msra.mxu0 %v79
  %238 = vmatprep.subr.mxu0 0.0
  %239 = vmatpush1.msra.mxu0 %v80
  %240 = vmatprep.mubr.f32.mxu0 %v100
  %241 = vmatmul.mubr.f32.gmra.mrb[0].mxu0 %v15
  %v242 = vpop.f32.mrb[0].mxu0
  %v243 = vadd.f32 %v173, %v242
  %v244 = vpop.f32.mrb[0].mxu0
  %245 = vdwg.mxu0
  %246 = vmatprep.subr.mxu0 0.0
  %247 = vmatpush1.msra.mxu0 %v81
  %248 = vmatprep.subr.mxu0 0.0
  %249 = vmatpush1.msra.mxu0 %v82
  %250 = vmatprep.subr.mxu0 0.0
  %251 = vmatpush1.msra.mxu0 %v83
  %252 = vmatprep.subr.mxu0 0.0
  %253 = vmatpush1.msra.mxu0 %v84
  %254 = vmatprep.subr.mxu0 0.0
  %255 = vmatpush1.msra.mxu0 %v85
  %256 = vmatprep.subr.mxu0 0.0
  %257 = vmatpush1.msra.mxu0 %v86
  %258 = vmatprep.subr.mxu0 0.0
  %259 = vmatpush1.msra.mxu0 %v87
  %260 = vmatprep.subr.mxu0 0.0
  %261 = vmatpush1.msra.mxu0 %v88
  %262 = vmatprep.subr.mxu0 0.0
  %263 = vmatpush1.msra.mxu0 0.0
  %264 = vmatprep.subr.mxu0 0.0
  %265 = vmatpush1.msra.mxu0 0.0
  %266 = vmatprep.subr.mxu0 0.0
  %267 = vmatpush1.msra.mxu0 0.0
  %268 = vmatprep.subr.mxu0 0.0
  %269 = vmatpush1.msra.mxu0 0.0
  %270 = vmatprep.subr.mxu0 0.0
  %271 = vmatpush1.msra.mxu0 0.0
  %272 = vmatprep.subr.mxu0 0.0
  %273 = vmatpush1.msra.mxu0 0.0
  %274 = vmatprep.subr.mxu0 0.0
  %275 = vmatpush1.msra.mxu0 0.0
  %276 = vmatprep.subr.mxu0 0.0
  %277 = vmatpush1.msra.mxu0 0.0
  %278 = vmatprep.subr.mxu0 0.0
  %279 = vmatpush1.msra.mxu0 0.0
  %280 = vmatprep.subr.mxu0 0.0
  %281 = vmatpush1.msra.mxu0 0.0
  %282 = vmatprep.subr.mxu0 0.0
  %283 = vmatpush1.msra.mxu0 0.0
  %284 = vmatprep.subr.mxu0 0.0
  %285 = vmatpush1.msra.mxu0 0.0
  %286 = vmatprep.subr.mxu0 0.0
  %287 = vmatpush1.msra.mxu0 0.0
  %288 = vmatprep.subr.mxu0 0.0
  %289 = vmatpush1.msra.mxu0 0.0
  %290 = vmatprep.subr.mxu0 0.0
  %291 = vmatpush1.msra.mxu0 0.0
  %292 = vmatprep.subr.mxu0 0.0
  %293 = vmatpush1.msra.mxu0 0.0
  %294 = vmatprep.subr.mxu0 0.0
  %295 = vmatpush1.msra.mxu0 0.0
  %296 = vmatprep.subr.mxu0 0.0
  %297 = vmatpush1.msra.mxu0 0.0
  %298 = vmatprep.subr.mxu0 0.0
  %299 = vmatpush1.msra.mxu0 0.0
  %300 = vmatprep.subr.mxu0 0.0
  %301 = vmatpush1.msra.mxu0 0.0
  %302 = vmatprep.subr.mxu0 0.0
  %303 = vmatpush1.msra.mxu0 0.0
  %304 = vmatprep.subr.mxu0 0.0
  %305 = vmatpush1.msra.mxu0 0.0
  %306 = vmatprep.subr.mxu0 0.0
  %307 = vmatpush1.msra.mxu0 0.0
  %308 = vmatprep.subr.mxu0 0.0
  %309 = vmatpush1.msra.mxu0 0.0
  %310 = vmatprep.mubr.f32.mxu0 0.0
  %311 = vmatmul.mubr.f32.gmra.mrb[0].mxu0 %v104
  %v312 = vpop.f32.mrb[0].mxu0
  %v313 = vadd.f32 %v243, %v312
  %v314 = vpop.f32.mrb[0].mxu0
  %315 = vdwg.mxu0
  %v316 = vmax.f32 %v313, 0.0
  %317 = vst [vmem:[%s3] sm:$0xf] %v316
  // Predicated region
  $region14: #{cnn_icm_forward.6} parent=0 // pred_check
    _
  $region15: #{cnn_icm_forward.6} parent=0 // pred_check_branch
    %319 = sbr.rel (0) target = $region17
  $region16: #{cnn_icm_forward.6} parent=0 // pred_region
    _
  $region17: #{cnn_icm_forward.6} parent=0 // pred_fallthru
    _
  // Predicated region
  $region18: #{cnn_icm_forward.6} parent=0 // pred_check
    _
  $region19: #{cnn_icm_forward.6} parent=0 // pred_check_branch
    %321 = sbr.rel (0) target = $region21
  $region20: #{cnn_icm_forward.6} parent=0 // pred_region
    _
  $region21: #{cnn_icm_forward.6} parent=0 // pred_fallthru
    _

// kernel: cnn_icm_forward.7
$region0: #{cnn_icm_forward.7}
  #allocation0 [shape = 'u32[]', space=smem, size = 0x4, offset = 0x4, fixed_abs, tag = 'smem constant byte address 0x4 - core index']
  #allocation1 [shape = 'u32[144,128]{1,0:T(1,128)}', space=vmem, size = 0x12000, scoped, tag = 'internal scratch']
  %s0 = inlined_call_operand.vmem [shape: f32[4,128], index: 0, kind: input, shape index: {}]
  %s1 = inlined_call_operand.vmem [shape: s32[2,1], index: 1, kind: input, shape index: {}]
  %s2 = inlined_call_operand.vmem [shape: f32[2,1], index: 2, kind: input, shape index: {}]
  %s3 = inlined_call_operand.vmem [shape: f32[128,512], index: 3, kind: input, shape index: {}]
  %s4 = inlined_call_operand.vmem [shape: f32[1,512], index: 4, kind: input, shape index: {}]
  %s5 = inlined_call_operand.vmem [shape: f32[6,4], index: 5, kind: input, shape index: {}]
  %s6 = inlined_call_operand.vmem [shape: f32[512,256], index: 6, kind: input, shape index: {}]
  %s7 = inlined_call_operand.vmem [shape: f32[4,256], index: 7, kind: input, shape index: {}]
  %s8 = inlined_call_operand.vmem [shape: f32[1,256], index: 8, kind: input, shape index: {}]
  %s9 = inlined_call_operand.vmem [shape: f32[256,512], index: 9, kind: input, shape index: {}]
  %s10 = inlined_call_operand.vmem [shape: f32[1,512], index: 10, kind: input, shape index: {}]
  %s11 = inlined_call_operand.vmem [shape: f32[512,256], index: 11, kind: input, shape index: {}]
  %s12 = inlined_call_operand.vmem [shape: f32[512,256], index: 12, kind: input, shape index: {}]
  %s13 = inlined_call_operand.vmem [shape: f32[1,256], index: 13, kind: input, shape index: {}]
  %s14 = inlined_call_operand.vmem [shape: f32[256,256], index: 14, kind: input, shape index: {}]
  %s15 = inlined_call_operand.vmem [shape: f32[1,256], index: 15, kind: input, shape index: {}]
  %s16 = inlined_call_operand.vmem [shape: f32[256,6], index: 16, kind: input, shape index: {}]
  %s17 = inlined_call_operand.vmem [shape: f32[1,6], index: 17, kind: input, shape index: {}]
  %s18 = inlined_call_operand.vmem [shape: f32[2,1], index: 18, kind: output, shape index: {0}]
  %s19 = inlined_call_operand.hbm [shape: f32[1,1], index: 19, kind: output, shape index: {1}]
  %s20 = inlined_call_operand.hbm [shape: f32[1,1], index: 20, kind: output, shape index: {2}]
  %21 = xla_tuple %s18, %s19, %s20
  %s22 = sld [smem:[#allocation0]]
  $region98: #{cnn_icm_forward.7} parent=0
    _
  %s24 = ssub.s32 1, %s22
  %s25 = scalar_select 0, %s24, %s22
  $region1: #{cnn_icm_forward.7} parent=0
    #allocation2 [shape = 'u8[512]{0}', space=vmem, size = 0x400, scoped, tag = 'output window, operand 1, single buffered']
    #allocation3 [shape = 's32[1]{0}', space=sflag, size = 0x4, scoped, tag = 'scoped memory for cnn_icm_forward.7']
    #allocation4 [shape = 'u8[512]{0}', space=vmem, size = 0x400, scoped, tag = 'output window, operand 2, single buffered']
    #allocation5 [shape = 's32[1]{0}', space=sflag, size = 0x4, scoped, tag = 'scoped memory for cnn_icm_forward.7']
    %26 = vsyncpa [#allocation3], 0
    %27 = vsyncpa [#allocation5], 0
    // Predicated region
    $region2: #{cnn_icm_forward.7} parent=1 // pred_check
      _
    $region3: #{cnn_icm_forward.7} parent=1 // pred_check_branch
      %29 = sbr.rel (0) target = $region5
    $region4: #{cnn_icm_forward.7} parent=1 // pred_region
      _
    $region5: #{cnn_icm_forward.7} parent=1 // pred_fallthru
      _
    // Predicated region
    $region6: #{cnn_icm_forward.7} parent=1 // pred_check
      _
    $region7: #{cnn_icm_forward.7} parent=1 // pred_check_branch
      %31 = sbr.rel (0) target = $region9
    $region8: #{cnn_icm_forward.7} parent=1 // pred_region
      _
    $region9: #{cnn_icm_forward.7} parent=1 // pred_fallthru
      _
    // Predicated region
    $region10: #{cnn_icm_forward.7} parent=1 // pred_check
      _
    $region11: #{cnn_icm_forward.7} parent=1 // pred_check_branch
      %33 = sbr.rel (0) target = $region13
    $region12: #{cnn_icm_forward.7} parent=1 // pred_region
      _
    $region13: #{cnn_icm_forward.7} parent=1 // pred_fallthru
      _
    // Predicated region
    $region14: #{cnn_icm_forward.7} parent=1 // pred_check
      _
    $region15: #{cnn_icm_forward.7} parent=1 // pred_check_branch
      %35 = sbr.rel (0) target = $region17
    $region16: #{cnn_icm_forward.7} parent=1 // pred_region
      _
    $region17: #{cnn_icm_forward.7} parent=1 // pred_fallthru
      _
    // Predicated region
    $region18: #{cnn_icm_forward.7} parent=1 // pred_check
      _
    $region19: #{cnn_icm_forward.7} parent=1 // pred_check_branch
      %37 = sbr.rel (0) target = $region21
    $region20: #{cnn_icm_forward.7} parent=1 // pred_region
      _
    $region21: #{cnn_icm_forward.7} parent=1 // pred_fallthru
      _
    // Predicated region
    $region22: #{cnn_icm_forward.7} parent=1 // pred_check
      _
    $region23: #{cnn_icm_forward.7} parent=1 // pred_check_branch
      %39 = sbr.rel (0) target = $region25
    $region24: #{cnn_icm_forward.7} parent=1 // pred_region
      _
    $region25: #{cnn_icm_forward.7} parent=1 // pred_fallthru
      _
    // Predicated region
    $region26: #{cnn_icm_forward.7} parent=1 // pred_check
      _
    $region27: #{cnn_icm_forward.7} parent=1 // pred_check_branch
      %41 = sbr.rel (0) target = $region29
    $region28: #{cnn_icm_forward.7} parent=1 // pred_region
      _
    $region29: #{cnn_icm_forward.7} parent=1 // pred_fallthru
      _
    // Predicated region
    $region30: #{cnn_icm_forward.7} parent=1 // pred_check
      _
    $region31: #{cnn_icm_forward.7} parent=1 // pred_check_branch
      %43 = sbr.rel (0) target = $region33
    $region32: #{cnn_icm_forward.7} parent=1 // pred_region
      _
    $region33: #{cnn_icm_forward.7} parent=1 // pred_fallthru
      _
    // Predicated region
    $region34: #{cnn_icm_forward.7} parent=1 // pred_check
      _
    $region35: #{cnn_icm_forward.7} parent=1 // pred_check_branch
      %45 = sbr.rel (0) target = $region37
    $region36: #{cnn_icm_forward.7} parent=1 // pred_region
      _
    $region37: #{cnn_icm_forward.7} parent=1 // pred_fallthru
      _
    // Predicated region
    $region38: #{cnn_icm_forward.7} parent=1 // pred_check
      _
    $region39: #{cnn_icm_forward.7} parent=1 // pred_check_branch
      %47 = sbr.rel (0) target = $region41
    $region40: #{cnn_icm_forward.7} parent=1 // pred_region
      _
    $region41: #{cnn_icm_forward.7} parent=1 // pred_fallthru
      _
    // Predicated region
    $region42: #{cnn_icm_forward.7} parent=1 // pred_check
      _
    $region43: #{cnn_icm_forward.7} parent=1 // pred_check_branch
      %49 = sbr.rel (0) target = $region45
    $region44: #{cnn_icm_forward.7} parent=1 // pred_region
      _
    $region45: #{cnn_icm_forward.7} parent=1 // pred_fallthru
      _
    // Predicated region
    $region46: #{cnn_icm_forward.7} parent=1 // pred_check
      _
    $region47: #{cnn_icm_forward.7} parent=1 // pred_check_branch
      %51 = sbr.rel (0) target = $region49
    $region48: #{cnn_icm_forward.7} parent=1 // pred_region
      _
    $region49: #{cnn_icm_forward.7} parent=1 // pred_fallthru
      _
    // Predicated region
    $region50: #{cnn_icm_forward.7} parent=1 // pred_check
      _
    $region51: #{cnn_icm_forward.7} parent=1 // pred_check_branch
      %53 = sbr.rel (0) target = $region53
    $region52: #{cnn_icm_forward.7} parent=1 // pred_region
      _
    $region53: #{cnn_icm_forward.7} parent=1 // pred_fallthru
      _
    // Predicated region
    $region54: #{cnn_icm_forward.7} parent=1 // pred_check
      _
    $region55: #{cnn_icm_forward.7} parent=1 // pred_check_branch
      %55 = sbr.rel (0) target = $region57
    $region56: #{cnn_icm_forward.7} parent=1 // pred_region
      _
    $region57: #{cnn_icm_forward.7} parent=1 // pred_fallthru
      _
    // Predicated region
    $region58: #{cnn_icm_forward.7} parent=1 // pred_check
      _
    $region59: #{cnn_icm_forward.7} parent=1 // pred_check_branch
      %57 = sbr.rel (0) target = $region61
    $region60: #{cnn_icm_forward.7} parent=1 // pred_region
      _
    $region61: #{cnn_icm_forward.7} parent=1 // pred_fallthru
      _
    // Predicated region
    $region62: #{cnn_icm_forward.7} parent=1 // pred_check
      _
    $region63: #{cnn_icm_forward.7} parent=1 // pred_check_branch
      %59 = sbr.rel (0) target = $region65
    $region64: #{cnn_icm_forward.7} parent=1 // pred_region
      _
    $region65: #{cnn_icm_forward.7} parent=1 // pred_fallthru
      _
    // Predicated region
    $region66: #{cnn_icm_forward.7} parent=1 // pred_check
      _
    $region67: #{cnn_icm_forward.7} parent=1 // pred_check_branch
      %61 = sbr.rel (0) target = $region69
    $region68: #{cnn_icm_forward.7} parent=1 // pred_region
      _
    $region69: #{cnn_icm_forward.7} parent=1 // pred_fallthru
      _
    // Predicated region
    $region70: #{cnn_icm_forward.7} parent=1 // pred_check
      _
    $region71: #{cnn_icm_forward.7} parent=1 // pred_check_branch
      %63 = sbr.rel (0) target = $region73
    $region72: #{cnn_icm_forward.7} parent=1 // pred_region
      _
    $region73: #{cnn_icm_forward.7} parent=1 // pred_fallthru
      _
    %v64 = vld [vmem:[%s0] sm:$0xf]
    %v65 = vld [vmem:[%s3] sm:$0xff]
    %v66 = vld [vmem:[%s3 + $0x8] sm:$0xff]
    %v67 = vld [vmem:[%s3 + $0x10] sm:$0xff]
    %v68 = vld [vmem:[%s3 + $0x18] sm:$0xff]
    %v69 = vld [vmem:[%s3 + $0x20] sm:$0xff]
    %v70 = vld [vmem:[%s3 + $0x28] sm:$0xff]
    %v71 = vld [vmem:[%s3 + $0x30] sm:$0xff]
    %v72 = vld [vmem:[%s3 + $0x38] sm:$0xff]
    %v73 = vld [vmem:[%s3 + $0x40] sm:$0xff]
    %v74 = vld [vmem:[%s3 + $0x48] sm:$0xff]
    %v75 = vld [vmem:[%s3 + $0x50] sm:$0xff]
    %v76 = vld [vmem:[%s3 + $0x58] sm:$0xff]
    %v77 = vld [vmem:[%s3 + $0x60] sm:$0xff]
    %v78 = vld [vmem:[%s3 + $0x68] sm:$0xff]
    %v79 = vld [vmem:[%s3 + $0x70] sm:$0xff]
    %v80 = vld [vmem:[%s3 + $0x78] sm:$0xff]
    %v81 = vld [vmem:[%s3 + $0x80] sm:$0xff]
    %v82 = vld [vmem:[%s3 + $0x88] sm:$0xff]
    %v83 = vld [vmem:[%s3 + $0x90] sm:$0xff]
    %v84 = vld [vmem:[%s3 + $0x98] sm:$0xff]
    %v85 = vld [vmem:[%s3 + $0xa0] sm:$0xff]
    %v86 = vld [vmem:[%s3 + $0xa8] sm:$0xff]
    %v87 = vld [vmem:[%s3 + $0xb0] sm:$0xff]
    %v88 = vld [vmem:[%s3 + $0xb8] sm:$0xff]
    %v89 = vld [vmem:[%s3 + $0xc0] sm:$0xff]
    %v90 = vld [vmem:[%s3 + $0xc8] sm:$0xff]
    %v91 = vld [vmem:[%s3 + $0xd0] sm:$0xff]
    %v92 = vld [vmem:[%s3 + $0xd8] sm:$0xff]
    %v93 = vld [vmem:[%s3 + $0xe0] sm:$0xff]
    %v94 = vld [vmem:[%s3 + $0xe8] sm:$0xff]
    %v95 = vld [vmem:[%s3 + $0xf0] sm:$0xff]
    %v96 = vld [vmem:[%s3 + $0xf8] sm:$0xff]
    %v97 = vld [vmem:[%s3 + $0x100] sm:$0xff]
    %v98 = vld [vmem:[%s3 + $0x108] sm:$0xff]
    %v99 = vld [vmem:[%s3 + $0x110] sm:$0xff]
    %v100 = vld [vmem:[%s3 + $0x118] sm:$0xff]
    %v101 = vld [vmem:[%s3 + $0x120] sm:$0xff]
    %v102 = vld [vmem:[%s3 + $0x128] sm:$0xff]
    %v103 = vld [vmem:[%s3 + $0x130] sm:$0xff]
    %v104 = vld [vmem:[%s3 + $0x138] sm:$0xff]
    %v105 = vld [vmem:[%s3 + $0x140] sm:$0xff]
    %v106 = vld [vmem:[%s3 + $0x148] sm:$0xff]
    %v107 = vld [vmem:[%s3 + $0x150] sm:$0xff]
    %v108 = vld [vmem:[%s3 + $0x158] sm:$0xff]
    %v109 = vld [vmem:[%s3 + $0x160] sm:$0xff]
    %v110 = vld [vmem:[%s3 + $0x168] sm:$0xff]
    %v111 = vld [vmem:[%s3 + $0x170] sm:$0xff]
    %v112 = vld [vmem:[%s3 + $0x178] sm:$0xff]
    %v113 = vld [vmem:[%s3 + $0x180] sm:$0xff]
    %v114 = vld [vmem:[%s3 + $0x188] sm:$0xff]
    %v115 = vld [vmem:[%s3 + $0x190] sm:$0xff]
    %v116 = vld [vmem:[%s3 + $0x198] sm:$0xff]
    %v117 = vld [vmem:[%s3 + $0x1a0] sm:$0xff]
    %v118 = vld [vmem:[%s3 + $0x1a8] sm:$0xff]
    %v119 = vld [vmem:[%s3 + $0x1b0] sm:$0xff]
    %v120 = vld [vmem:[%s3 + $0x1b8] sm:$0xff]
    %v121 = vld [vmem:[%s3 + $0x1c0] sm:$0xff]
    %v122 = vld [vmem:[%s3 + $0x1c8] sm:$0xff]
    %v123 = vld [vmem:[%s3 + $0x1d0] sm:$0xff]
    %v124 = vld [vmem:[%s3 + $0x1d8] sm:$0xff]
    %v125 = vld [vmem:[%s3 + $0x1e0] sm:$0xff]
    %v126 = vld [vmem:[%s3 + $0x1e8] sm:$0xff]
    %v127 = vld [vmem:[%s3 + $0x1f0] sm:$0xff]
    %v128 = vld [vmem:[%s3 + $0x1f8] sm:$0xff]
    %v129 = vld [vmem:[%s4] sm:$0xf]
    %v131 = vlaneseq
    %v132 = vshrl.u32 %v131, 7
    %v133 = vsub.s32 0, %v132
    %v134 = vrot.slane %v129, %v133
    %v135 = vlaneseq
    %v136 = vshrl.u32 %v135, 7
    %v137 = vsub.s32 1, %v136
    %v138 = vrot.slane %v129, %v137
    %v139 = vlaneseq
    %v140 = vshrl.u32 %v139, 7
    %v141 = vsub.s32 2, %v140
    %v142 = vrot.slane %v129, %v141
    %v143 = vlaneseq
    %v144 = vshrl.u32 %v143, 7
    %v145 = vsub.s32 3, %v144
    %v146 = vrot.slane %v129, %v145
    %151 = vmatprep.subr.mxu0 %v66
    %152 = vmatpush1.msra.mxu0 %v65
    %153 = vmatprep.subr.mxu0 %v70
    %154 = vmatpush1.msra.mxu0 %v69
    %155 = vmatprep.subr.mxu0 %v74
    %156 = vmatpush1.msra.mxu0 %v73
    %157 = vmatprep.subr.mxu0 %v78
    %158 = vmatpush1.msra.mxu0 %v77
    %159 = vmatprep.subr.mxu0 %v82
    %160 = vmatpush1.msra.mxu0 %v81
    %161 = vmatprep.subr.mxu0 %v86
    %162 = vmatpush1.msra.mxu0 %v85
    %163 = vmatprep.subr.mxu0 %v90
    %164 = vmatpush1.msra.mxu0 %v89
    %165 = vmatprep.subr.mxu0 %v94
    %166 = vmatpush1.msra.mxu0 %v93
    %167 = vmatprep.subr.mxu0 %v98
    %168 = vmatpush1.msra.mxu0 %v97
    %169 = vmatprep.subr.mxu0 %v102
    %170 = vmatpush1.msra.mxu0 %v101
    %171 = vmatprep.subr.mxu0 %v106
    %172 = vmatpush1.msra.mxu0 %v105
    %173 = vmatprep.subr.mxu0 %v110
    %174 = vmatpush1.msra.mxu0 %v109
    %175 = vmatprep.subr.mxu0 %v114
    %176 = vmatpush1.msra.mxu0 %v113
    %177 = vmatprep.subr.mxu0 %v118
    %178 = vmatpush1.msra.mxu0 %v117
    %179 = vmatprep.subr.mxu0 %v122
    %180 = vmatpush1.msra.mxu0 %v121
    %181 = vmatprep.subr.mxu0 %v126
    %182 = vmatpush1.msra.mxu0 %v125
    %183 = vmatprep.subr.mxu0 0.0
    %184 = vmatpush1.msra.mxu0 0.0
    %185 = vmatprep.subr.mxu0 0.0
    %186 = vmatpush1.msra.mxu0 0.0
    %187 = vmatprep.subr.mxu0 0.0
    %188 = vmatpush1.msra.mxu0 0.0
    %189 = vmatprep.subr.mxu0 0.0
    %190 = vmatpush1.msra.mxu0 0.0
    %191 = vmatprep.subr.mxu0 0.0
    %192 = vmatpush1.msra.mxu0 0.0
    %193 = vmatprep.subr.mxu0 0.0
    %194 = vmatpush1.msra.mxu0 0.0
    %195 = vmatprep.subr.mxu0 0.0
    %196 = vmatpush1.msra.mxu0 0.0
    %197 = vmatprep.subr.mxu0 0.0
    %198 = vmatpush1.msra.mxu0 0.0
    %199 = vmatprep.subr.mxu0 0.0
    %200 = vmatpush1.msra.mxu0 0.0
    %201 = vmatprep.subr.mxu0 0.0
    %202 = vmatpush1.msra.mxu0 0.0
    %203 = vmatprep.subr.mxu0 0.0
    %204 = vmatpush1.msra.mxu0 0.0
    %205 = vmatprep.subr.mxu0 0.0
    %206 = vmatpush1.msra.mxu0 0.0
    %207 = vmatprep.subr.mxu0 0.0
    %208 = vmatpush1.msra.mxu0 0.0
    %209 = vmatprep.subr.mxu0 0.0
    %210 = vmatpush1.msra.mxu0 0.0
    %211 = vmatprep.subr.mxu0 0.0
    %212 = vmatpush1.msra.mxu0 0.0
    %213 = vmatprep.subr.mxu0 0.0
    %214 = vmatpush1.msra.mxu0 0.0
    %215 = vmatprep.mubr.f32.mxu0 0.0
    %216 = vmatmul.mubr.f32.gmra.mrb[0].mxu0 %v64
    %v217 = vpop.f32.mrb[0].mxu0
    %v218 = vadd.f32 %v134, %v217
    %v219 = vpop.f32.mrb[0].mxu0
    %v220 = vadd.f32 %v138, %v219
    %221 = vdwg.mxu0
    %222 = vmatprep.subr.mxu0 %v68
    %223 = vmatpush1.msra.mxu0 %v67
    %224 = vmatprep.subr.mxu0 %v72
    %225 = vmatpush1.msra.mxu0 %v71
    %226 = vmatprep.subr.mxu0 %v76
    %227 = vmatpush1.msra.mxu0 %v75
    %228 = vmatprep.subr.mxu0 %v80
    %229 = vmatpush1.msra.mxu0 %v79
    %230 = vmatprep.subr.mxu0 %v84
    %231 = vmatpush1.msra.mxu0 %v83
    %232 = vmatprep.subr.mxu0 %v88
    %233 = vmatpush1.msra.mxu0 %v87
    %234 = vmatprep.subr.mxu0 %v92
    %235 = vmatpush1.msra.mxu0 %v91
    %236 = vmatprep.subr.mxu0 %v96
    %237 = vmatpush1.msra.mxu0 %v95
    %238 = vmatprep.subr.mxu0 %v100
    %239 = vmatpush1.msra.mxu0 %v99
    %240 = vmatprep.subr.mxu0 %v104
    %241 = vmatpush1.msra.mxu0 %v103
    %242 = vmatprep.subr.mxu0 %v108
    %243 = vmatpush1.msra.mxu0 %v107
    %244 = vmatprep.subr.mxu0 %v112
    %245 = vmatpush1.msra.mxu0 %v111
    %246 = vmatprep.subr.mxu0 %v116
    %247 = vmatpush1.msra.mxu0 %v115
    %248 = vmatprep.subr.mxu0 %v120
    %249 = vmatpush1.msra.mxu0 %v119
    %250 = vmatprep.subr.mxu0 %v124
    %251 = vmatpush1.msra.mxu0 %v123
    %252 = vmatprep.subr.mxu0 %v128
    %253 = vmatpush1.msra.mxu0 %v127
    %254 = vmatprep.subr.mxu0 0.0
    %255 = vmatpush1.msra.mxu0 0.0
    %256 = vmatprep.subr.mxu0 0.0
    %257 = vmatpush1.msra.mxu0 0.0
    %258 = vmatprep.subr.mxu0 0.0
    %259 = vmatpush1.msra.mxu0 0.0
    %260 = vmatprep.subr.mxu0 0.0
    %261 = vmatpush1.msra.mxu0 0.0
    %262 = vmatprep.subr.mxu0 0.0
    %263 = vmatpush1.msra.mxu0 0.0
    %264 = vmatprep.subr.mxu0 0.0
    %265 = vmatpush1.msra.mxu0 0.0
    %266 = vmatprep.subr.mxu0 0.0
    %267 = vmatpush1.msra.mxu0 0.0
    %268 = vmatprep.subr.mxu0 0.0
    %269 = vmatpush1.msra.mxu0 0.0
    %270 = vmatprep.subr.mxu0 0.0
    %271 = vmatpush1.msra.mxu0 0.0
    %272 = vmatprep.subr.mxu0 0.0
    %273 = vmatpush1.msra.mxu0 0.0
    %274 = vmatprep.subr.mxu0 0.0
    %275 = vmatpush1.msra.mxu0 0.0
    %276 = vmatprep.subr.mxu0 0.0
    %277 = vmatpush1.msra.mxu0 0.0
    %278 = vmatprep.subr.mxu0 0.0
    %279 = vmatpush1.msra.mxu0 0.0
    %280 = vmatprep.subr.mxu0 0.0
    %281 = vmatpush1.msra.mxu0 0.0
    %282 = vmatprep.subr.mxu0 0.0
    %283 = vmatpush1.msra.mxu0 0.0
    %284 = vmatprep.subr.mxu0 0.0
    %285 = vmatpush1.msra.mxu0 0.0
    %286 = vmatprep.mubr.f32.mxu0 0.0
    %287 = vmatmul.mubr.f32.gmra.mrb[0].mxu0 %v64
    %v288 = vpop.f32.mrb[0].mxu0
    %v289 = vadd.f32 %v142, %v288
    %v290 = vpop.f32.mrb[0].mxu0
    %v291 = vadd.f32 %v146, %v290
    %292 = vdwg.mxu0
    %v293 = vlaneseq
    %v294 = vand.u32 %v293, 127
    %v295 = vld [vmem:[%s1] sm:$0x3]
    %296 = vset.pattern.permute.xlu0 0
    %297 = vperm.xlu0 %296, %v295
    %v298 = vpop.permute.xlu0 %297
    %vm299 = vcmp.eq.s32.totalorder %v294, %v298
    %v300 = vsel %vm299, 1, 0
    %v301 = vcvt.s32.f32 %v300
    %v302 = vld [vmem:[%s5] sm:$0x3f]
    %vm303 = vcmask 48128
    %v305 = vsel %vm303, %v301, 0
    %vm307 = vcmask 1045504
    %v309 = vsel %vm307, %v302, 0
    %311 = vmatprep.subr.mxu0 0.0
    %312 = vmatpush1.msra.mxu0 %v309
    %313 = vmatprep.subr.mxu0 0.0
    %314 = vmatpush1.msra.mxu0 0.0
    %315 = vmatprep.subr.mxu0 0.0
    %316 = vmatpush1.msra.mxu0 0.0
    %317 = vmatprep.subr.mxu0 0.0
    %318 = vmatpush1.msra.mxu0 0.0
    %319 = vmatprep.subr.mxu0 0.0
    %320 = vmatpush1.msra.mxu0 0.0
    %321 = vmatprep.subr.mxu0 0.0
    %322 = vmatpush1.msra.mxu0 0.0
    %323 = vmatprep.subr.mxu0 0.0
    %324 = vmatpush1.msra.mxu0 0.0
    %325 = vmatprep.subr.mxu0 0.0
    %326 = vmatpush1.msra.mxu0 0.0
    %327 = vmatprep.subr.mxu0 0.0
    %328 = vmatpush1.msra.mxu0 0.0
    %329 = vmatprep.subr.mxu0 0.0
    %330 = vmatpush1.msra.mxu0 0.0
    %331 = vmatprep.subr.mxu0 0.0
    %332 = vmatpush1.msra.mxu0 0.0
    %333 = vmatprep.subr.mxu0 0.0
    %334 = vmatpush1.msra.mxu0 0.0
    %335 = vmatprep.subr.mxu0 0.0
    %336 = vmatpush1.msra.mxu0 0.0
    %337 = vmatprep.subr.mxu0 0.0
    %338 = vmatpush1.msra.mxu0 0.0
    %339 = vmatprep.subr.mxu0 0.0
    %340 = vmatpush1.msra.mxu0 0.0
    %341 = vmatprep.subr.mxu0 0.0
    %342 = vmatpush1.msra.mxu0 0.0
    %343 = vmatprep.subr.mxu0 0.0
    %344 = vmatpush1.msra.mxu0 0.0
    %345 = vmatprep.subr.mxu0 0.0
    %346 = vmatpush1.msra.mxu0 0.0
    %347 = vmatprep.subr.mxu0 0.0
    %348 = vmatpush1.msra.mxu0 0.0
    %349 = vmatprep.subr.mxu0 0.0
    %350 = vmatpush1.msra.mxu0 0.0
    %351 = vmatprep.subr.mxu0 0.0
    %352 = vmatpush1.msra.mxu0 0.0
    %353 = vmatprep.subr.mxu0 0.0
    %354 = vmatpush1.msra.mxu0 0.0
    %355 = vmatprep.subr.mxu0 0.0
    %356 = vmatpush1.msra.mxu0 0.0
    %357 = vmatprep.subr.mxu0 0.0
    %358 = vmatpush1.msra.mxu0 0.0
    %359 = vmatprep.subr.mxu0 0.0
    %360 = vmatpush1.msra.mxu0 0.0
    %361 = vmatprep.subr.mxu0 0.0
    %362 = vmatpush1.msra.mxu0 0.0
    %363 = vmatprep.subr.mxu0 0.0
    %364 = vmatpush1.msra.mxu0 0.0
    %365 = vmatprep.subr.mxu0 0.0
    %366 = vmatpush1.msra.mxu0 0.0
    %367 = vmatprep.subr.mxu0 0.0
    %368 = vmatpush1.msra.mxu0 0.0
    %369 = vmatprep.subr.mxu0 0.0
    %370 = vmatpush1.msra.mxu0 0.0
    %371 = vmatprep.subr.mxu0 0.0
    %372 = vmatpush1.msra.mxu0 0.0
    %373 = vmatprep.subr.mxu0 0.0
    %374 = vmatpush1.msra.mxu0 0.0
    %375 = vmatprep.mubr.f32.mxu0 0.0
    %376 = vmatmul.mubr.f32.gmra.mrb[0].mxu0 %v305
    %v377 = vpop.f32.mrb[0].mxu0
    %v378 = vadd.f32 0.0, %v377
    %v379 = vpop.f32.mrb[0].mxu0
    %380 = vdwg.mxu0
    %v381 = vld [vmem:[%s6] sm:$0xff]
    %v382 = vld [vmem:[%s6 + $0x8] sm:$0xff]
    %v383 = vld [vmem:[%s6 + $0x10] sm:$0xff]
    %v384 = vld [vmem:[%s6 + $0x18] sm:$0xff]
    %v385 = vld [vmem:[%s6 + $0x20] sm:$0xff]
    %v386 = vld [vmem:[%s6 + $0x28] sm:$0xff]
    %v387 = vld [vmem:[%s6 + $0x30] sm:$0xff]
    %v388 = vld [vmem:[%s6 + $0x38] sm:$0xff]
    %v389 = vld [vmem:[%s6 + $0x40] sm:$0xff]
    %v390 = vld [vmem:[%s6 + $0x48] sm:$0xff]
    %v391 = vld [vmem:[%s6 + $0x50] sm:$0xff]
    %v392 = vld [vmem:[%s6 + $0x58] sm:$0xff]
    %v393 = vld [vmem:[%s6 + $0x60] sm:$0xff]
    %v394 = vld [vmem:[%s6 + $0x68] sm:$0xff]
    %v395 = vld [vmem:[%s6 + $0x70] sm:$0xff]
    %v396 = vld [vmem:[%s6 + $0x78] sm:$0xff]
    %v397 = vld [vmem:[%s6 + $0x80] sm:$0xff]
    %v398 = vld [vmem:[%s6 + $0x88] sm:$0xff]
    %v399 = vld [vmem:[%s6 + $0x90] sm:$0xff]
    %v400 = vld [vmem:[%s6 + $0x98] sm:$0xff]
    %v401 = vld [vmem:[%s6 + $0xa0] sm:$0xff]
    %v402 = vld [vmem:[%s6 + $0xa8] sm:$0xff]
    %v403 = vld [vmem:[%s6 + $0xb0] sm:$0xff]
    %v404 = vld [vmem:[%s6 + $0xb8] sm:$0xff]
    %v405 = vld [vmem:[%s6 + $0xc0] sm:$0xff]
    %v406 = vld [vmem:[%s6 + $0xc8] sm:$0xff]
    %v407 = vld [vmem:[%s6 + $0xd0] sm:$0xff]
    %v408 = vld [vmem:[%s6 + $0xd8] sm:$0xff]
    %v409 = vld [vmem:[%s6 + $0xe0] sm:$0xff]
    %v410 = vld [vmem:[%s6 + $0xe8] sm:$0xff]
    %v411 = vld [vmem:[%s6 + $0xf0] sm:$0xff]
    %v412 = vld [vmem:[%s6 + $0xf8] sm:$0xff]
    %v413 = vld [vmem:[%s6 + $0x100] sm:$0xff]
    %v414 = vld [vmem:[%s6 + $0x108] sm:$0xff]
    %v415 = vld [vmem:[%s6 + $0x110] sm:$0xff]
    %v416 = vld [vmem:[%s6 + $0x118] sm:$0xff]
    %v417 = vld [vmem:[%s6 + $0x120] sm:$0xff]
    %v418 = vld [vmem:[%s6 + $0x128] sm:$0xff]
    %v419 = vld [vmem:[%s6 + $0x130] sm:$0xff]
    %v420 = vld [vmem:[%s6 + $0x138] sm:$0xff]
    %v421 = vld [vmem:[%s6 + $0x140] sm:$0xff]
    %v422 = vld [vmem:[%s6 + $0x148] sm:$0xff]
    %v423 = vld [vmem:[%s6 + $0x150] sm:$0xff]
    %v424 = vld [vmem:[%s6 + $0x158] sm:$0xff]
    %v425 = vld [vmem:[%s6 + $0x160] sm:$0xff]
    %v426 = vld [vmem:[%s6 + $0x168] sm:$0xff]
    %v427 = vld [vmem:[%s6 + $0x170] sm:$0xff]
    %v428 = vld [vmem:[%s6 + $0x178] sm:$0xff]
    %v429 = vld [vmem:[%s6 + $0x180] sm:$0xff]
    %v430 = vld [vmem:[%s6 + $0x188] sm:$0xff]
    %v431 = vld [vmem:[%s6 + $0x190] sm:$0xff]
    %v432 = vld [vmem:[%s6 + $0x198] sm:$0xff]
    %v433 = vld [vmem:[%s6 + $0x1a0] sm:$0xff]
    %v434 = vld [vmem:[%s6 + $0x1a8] sm:$0xff]
    %v435 = vld [vmem:[%s6 + $0x1b0] sm:$0xff]
    %v436 = vld [vmem:[%s6 + $0x1b8] sm:$0xff]
    %v437 = vld [vmem:[%s6 + $0x1c0] sm:$0xff]
    %v438 = vld [vmem:[%s6 + $0x1c8] sm:$0xff]
    %v439 = vld [vmem:[%s6 + $0x1d0] sm:$0xff]
    %v440 = vld [vmem:[%s6 + $0x1d8] sm:$0xff]
    %v441 = vld [vmem:[%s6 + $0x1e0] sm:$0xff]
    %v442 = vld [vmem:[%s6 + $0x1e8] sm:$0xff]
    %v443 = vld [vmem:[%s6 + $0x1f0] sm:$0xff]
    %v444 = vld [vmem:[%s6 + $0x1f8] sm:$0xff]
    %v445 = vld [vmem:[%s6 + $0x200] sm:$0xff]
    %v446 = vld [vmem:[%s6 + $0x208] sm:$0xff]
    %v447 = vld [vmem:[%s6 + $0x210] sm:$0xff]
    %v448 = vld [vmem:[%s6 + $0x218] sm:$0xff]
    %v449 = vld [vmem:[%s6 + $0x220] sm:$0xff]
    %v450 = vld [vmem:[%s6 + $0x228] sm:$0xff]
    %v451 = vld [vmem:[%s6 + $0x230] sm:$0xff]
    %v452 = vld [vmem:[%s6 + $0x238] sm:$0xff]
    %v453 = vld [vmem:[%s6 + $0x240] sm:$0xff]
    %v454 = vld [vmem:[%s6 + $0x248] sm:$0xff]
    %v455 = vld [vmem:[%s6 + $0x250] sm:$0xff]
    %v456 = vld [vmem:[%s6 + $0x258] sm:$0xff]
    %v457 = vld [vmem:[%s6 + $0x260] sm:$0xff]
    %v458 = vld [vmem:[%s6 + $0x268] sm:$0xff]
    %v459 = vld [vmem:[%s6 + $0x270] sm:$0xff]
    %v460 = vld [vmem:[%s6 + $0x278] sm:$0xff]
    %v461 = vld [vmem:[%s6 + $0x280] sm:$0xff]
    %v462 = vld [vmem:[%s6 + $0x288] sm:$0xff]
    %v463 = vld [vmem:[%s6 + $0x290] sm:$0xff]
    %v464 = vld [vmem:[%s6 + $0x298] sm:$0xff]
    %v465 = vld [vmem:[%s6 + $0x2a0] sm:$0xff]
    %v466 = vld [vmem:[%s6 + $0x2a8] sm:$0xff]
    %v467 = vld [vmem:[%s6 + $0x2b0] sm:$0xff]
    %v468 = vld [vmem:[%s6 + $0x2b8] sm:$0xff]
    %v469 = vld [vmem:[%s6 + $0x2c0] sm:$0xff]
    %v470 = vld [vmem:[%s6 + $0x2c8] sm:$0xff]
    %v471 = vld [vmem:[%s6 + $0x2d0] sm:$0xff]
    %v472 = vld [vmem:[%s6 + $0x2d8] sm:$0xff]
    %v473 = vld [vmem:[%s6 + $0x2e0] sm:$0xff]
    %v474 = vld [vmem:[%s6 + $0x2e8] sm:$0xff]
    %v475 = vld [vmem:[%s6 + $0x2f0] sm:$0xff]
    %v476 = vld [vmem:[%s6 + $0x2f8] sm:$0xff]
    %v477 = vld [vmem:[%s6 + $0x300] sm:$0xff]
    %v478 = vld [vmem:[%s6 + $0x308] sm:$0xff]
    %v479 = vld [vmem:[%s6 + $0x310] sm:$0xff]
    %v480 = vld [vmem:[%s6 + $0x318] sm:$0xff]
    %v481 = vld [vmem:[%s6 + $0x320] sm:$0xff]
    %v482 = vld [vmem:[%s6 + $0x328] sm:$0xff]
    %v483 = vld [vmem:[%s6 + $0x330] sm:$0xff]
    %v484 = vld [vmem:[%s6 + $0x338] sm:$0xff]
    %v485 = vld [vmem:[%s6 + $0x340] sm:$0xff]
    %v486 = vld [vmem:[%s6 + $0x348] sm:$0xff]
    %v487 = vld [vmem:[%s6 + $0x350] sm:$0xff]
    %v488 = vld [vmem:[%s6 + $0x358] sm:$0xff]
    %v489 = vld [vmem:[%s6 + $0x360] sm:$0xff]
    %v490 = vld [vmem:[%s6 + $0x368] sm:$0xff]
    %v491 = vld [vmem:[%s6 + $0x370] sm:$0xff]
    %v492 = vld [vmem:[%s6 + $0x378] sm:$0xff]
    %v493 = vld [vmem:[%s6 + $0x380] sm:$0xff]
    %v494 = vld [vmem:[%s6 + $0x388] sm:$0xff]
    %v495 = vld [vmem:[%s6 + $0x390] sm:$0xff]
    %v496 = vld [vmem:[%s6 + $0x398] sm:$0xff]
    %v497 = vld [vmem:[%s6 + $0x3a0] sm:$0xff]
    %v498 = vld [vmem:[%s6 + $0x3a8] sm:$0xff]
    %v499 = vld [vmem:[%s6 + $0x3b0] sm:$0xff]
    %v500 = vld [vmem:[%s6 + $0x3b8] sm:$0xff]
    %v501 = vld [vmem:[%s6 + $0x3c0] sm:$0xff]
    %v502 = vld [vmem:[%s6 + $0x3c8] sm:$0xff]
    %v503 = vld [vmem:[%s6 + $0x3d0] sm:$0xff]
    %v504 = vld [vmem:[%s6 + $0x3d8] sm:$0xff]
    %v505 = vld [vmem:[%s6 + $0x3e0] sm:$0xff]
    %v506 = vld [vmem:[%s6 + $0x3e8] sm:$0xff]
    %v507 = vld [vmem:[%s6 + $0x3f0] sm:$0xff]
    %v508 = vld [vmem:[%s6 + $0x3f8] sm:$0xff]
    %v509 = vld [vmem:[%s7] sm:$0xff]
    %v511 = vcombine.high %v509, %v509
    %vm512 = vcmask 31744
    %v514 = vsel %vm512, %v378, 0
    %vm516 = vcmask 1043456
    %v517 = vsel %vm516, %v509, 0
    %v519 = vsel %vm516, %v511, 0
    %521 = vmatprep.subr.mxu0 %v519
    %522 = vmatpush1.msra.mxu0 %v517
    %523 = vmatprep.subr.mxu0 0.0
    %524 = vmatpush1.msra.mxu0 0.0
    %525 = vmatprep.subr.mxu0 0.0
    %526 = vmatpush1.msra.mxu0 0.0
    %527 = vmatprep.subr.mxu0 0.0
    %528 = vmatpush1.msra.mxu0 0.0
    %529 = vmatprep.subr.mxu0 0.0
    %530 = vmatpush1.msra.mxu0 0.0
    %531 = vmatprep.subr.mxu0 0.0
    %532 = vmatpush1.msra.mxu0 0.0
    %533 = vmatprep.subr.mxu0 0.0
    %534 = vmatpush1.msra.mxu0 0.0
    %535 = vmatprep.subr.mxu0 0.0
    %536 = vmatpush1.msra.mxu0 0.0
    %537 = vmatprep.subr.mxu0 0.0
    %538 = vmatpush1.msra.mxu0 0.0
    %539 = vmatprep.subr.mxu0 0.0
    %540 = vmatpush1.msra.mxu0 0.0
    %541 = vmatprep.subr.mxu0 0.0
    %542 = vmatpush1.msra.mxu0 0.0
    %543 = vmatprep.subr.mxu0 0.0
    %544 = vmatpush1.msra.mxu0 0.0
    %545 = vmatprep.subr.mxu0 0.0
    %546 = vmatpush1.msra.mxu0 0.0
    %547 = vmatprep.subr.mxu0 0.0
    %548 = vmatpush1.msra.mxu0 0.0
    %549 = vmatprep.subr.mxu0 0.0
    %550 = vmatpush1.msra.mxu0 0.0
    %551 = vmatprep.subr.mxu0 0.0
    %552 = vmatpush1.msra.mxu0 0.0
    %553 = vmatprep.subr.mxu0 0.0
    %554 = vmatpush1.msra.mxu0 0.0
    %555 = vmatprep.subr.mxu0 0.0
    %556 = vmatpush1.msra.mxu0 0.0
    %557 = vmatprep.subr.mxu0 0.0
    %558 = vmatpush1.msra.mxu0 0.0
    %559 = vmatprep.subr.mxu0 0.0
    %560 = vmatpush1.msra.mxu0 0.0
    %561 = vmatprep.subr.mxu0 0.0
    %562 = vmatpush1.msra.mxu0 0.0
    %563 = vmatprep.subr.mxu0 0.0
    %564 = vmatpush1.msra.mxu0 0.0
    %565 = vmatprep.subr.mxu0 0.0
    %566 = vmatpush1.msra.mxu0 0.0
    %567 = vmatprep.subr.mxu0 0.0
    %568 = vmatpush1.msra.mxu0 0.0
    %569 = vmatprep.subr.mxu0 0.0
    %570 = vmatpush1.msra.mxu0 0.0
    %571 = vmatprep.subr.mxu0 0.0
    %572 = vmatpush1.msra.mxu0 0.0
    %573 = vmatprep.subr.mxu0 0.0
    %574 = vmatpush1.msra.mxu0 0.0
    %575 = vmatprep.subr.mxu0 0.0
    %576 = vmatpush1.msra.mxu0 0.0
    %577 = vmatprep.subr.mxu0 0.0
    %578 = vmatpush1.msra.mxu0 0.0
    %579 = vmatprep.subr.mxu0 0.0
    %580 = vmatpush1.msra.mxu0 0.0
    %581 = vmatprep.subr.mxu0 0.0
    %582 = vmatpush1.msra.mxu0 0.0
    %583 = vmatprep.subr.mxu0 0.0
    %584 = vmatpush1.msra.mxu0 0.0
    %585 = vmatprep.mubr.f32.mxu0 0.0
    %586 = vmatmul.mubr.f32.gmra.mrb[0].mxu0 %v514
    %v587 = vpop.f32.mrb[0].mxu0
    %v588 = vadd.f32 0.0, %v587
    %v589 = vpop.f32.mrb[0].mxu0
    %v590 = vadd.f32 0.0, %v589
    %591 = vdwg.mxu0
    %592 = vmatprep.subr.mxu0 %v382
    %593 = vmatpush1.msra.mxu0 %v381
    %594 = vmatprep.subr.mxu0 %v384
    %595 = vmatpush1.msra.mxu0 %v383
    %596 = vmatprep.subr.mxu0 %v386
    %597 = vmatpush1.msra.mxu0 %v385
    %598 = vmatprep.subr.mxu0 %v388
    %599 = vmatpush1.msra.mxu0 %v387
    %600 = vmatprep.subr.mxu0 %v390
    %601 = vmatpush1.msra.mxu0 %v389
    %602 = vmatprep.subr.mxu0 %v392
    %603 = vmatpush1.msra.mxu0 %v391
    %604 = vmatprep.subr.mxu0 %v394
    %605 = vmatpush1.msra.mxu0 %v393
    %606 = vmatprep.subr.mxu0 %v396
    %607 = vmatpush1.msra.mxu0 %v395
    %608 = vmatprep.subr.mxu0 %v398
    %609 = vmatpush1.msra.mxu0 %v397
    %610 = vmatprep.subr.mxu0 %v400
    %611 = vmatpush1.msra.mxu0 %v399
    %612 = vmatprep.subr.mxu0 %v402
    %613 = vmatpush1.msra.mxu0 %v401
    %614 = vmatprep.subr.mxu0 %v404
    %615 = vmatpush1.msra.mxu0 %v403
    %616 = vmatprep.subr.mxu0 %v406
    %617 = vmatpush1.msra.mxu0 %v405
    %618 = vmatprep.subr.mxu0 %v408
    %619 = vmatpush1.msra.mxu0 %v407
    %620 = vmatprep.subr.mxu0 %v410
    %621 = vmatpush1.msra.mxu0 %v409
    %622 = vmatprep.subr.mxu0 %v412
    %623 = vmatpush1.msra.mxu0 %v411
    %624 = vmatprep.subr.mxu0 %v414
    %625 = vmatpush1.msra.mxu0 %v413
    %626 = vmatprep.subr.mxu0 %v416
    %627 = vmatpush1.msra.mxu0 %v415
    %628 = vmatprep.subr.mxu0 %v418
    %629 = vmatpush1.msra.mxu0 %v417
    %630 = vmatprep.subr.mxu0 %v420
    %631 = vmatpush1.msra.mxu0 %v419
    %632 = vmatprep.subr.mxu0 %v422
    %633 = vmatpush1.msra.mxu0 %v421
    %634 = vmatprep.subr.mxu0 %v424
    %635 = vmatpush1.msra.mxu0 %v423
    %636 = vmatprep.subr.mxu0 %v426
    %637 = vmatpush1.msra.mxu0 %v425
    %638 = vmatprep.subr.mxu0 %v428
    %639 = vmatpush1.msra.mxu0 %v427
    %640 = vmatprep.subr.mxu0 %v430
    %641 = vmatpush1.msra.mxu0 %v429
    %642 = vmatprep.subr.mxu0 %v432
    %643 = vmatpush1.msra.mxu0 %v431
    %644 = vmatprep.subr.mxu0 %v434
    %645 = vmatpush1.msra.mxu0 %v433
    %646 = vmatprep.subr.mxu0 %v436
    %647 = vmatpush1.msra.mxu0 %v435
    %648 = vmatprep.subr.mxu0 %v438
    %649 = vmatpush1.msra.mxu0 %v437
    %650 = vmatprep.subr.mxu0 %v440
    %651 = vmatpush1.msra.mxu0 %v439
    %652 = vmatprep.subr.mxu0 %v442
    %653 = vmatpush1.msra.mxu0 %v441
    %654 = vmatprep.subr.mxu0 %v444
    %655 = vmatpush1.msra.mxu0 %v443
    %656 = vmatprep.mubr.f32.mxu0 %v220
    %657 = vmatmul.mubr.f32.gmra.mrb[0].mxu0 %v218
    %v658 = vpop.f32.mrb[0].mxu0
    %v659 = vadd.f32 %v588, %v658
    %v660 = vpop.f32.mrb[0].mxu0
    %v661 = vadd.f32 %v590, %v660
    %662 = vdwg.mxu0
    %663 = vmatprep.subr.mxu0 %v446
    %664 = vmatpush1.msra.mxu0 %v445
    %665 = vmatprep.subr.mxu0 %v448
    %666 = vmatpush1.msra.mxu0 %v447
    %667 = vmatprep.subr.mxu0 %v450
    %668 = vmatpush1.msra.mxu0 %v449
    %669 = vmatprep.subr.mxu0 %v452
    %670 = vmatpush1.msra.mxu0 %v451
    %671 = vmatprep.subr.mxu0 %v454
    %672 = vmatpush1.msra.mxu0 %v453
    %673 = vmatprep.subr.mxu0 %v456
    %674 = vmatpush1.msra.mxu0 %v455
    %675 = vmatprep.subr.mxu0 %v458
    %676 = vmatpush1.msra.mxu0 %v457
    %677 = vmatprep.subr.mxu0 %v460
    %678 = vmatpush1.msra.mxu0 %v459
    %679 = vmatprep.subr.mxu0 %v462
    %680 = vmatpush1.msra.mxu0 %v461
    %681 = vmatprep.subr.mxu0 %v464
    %682 = vmatpush1.msra.mxu0 %v463
    %683 = vmatprep.subr.mxu0 %v466
    %684 = vmatpush1.msra.mxu0 %v465
    %685 = vmatprep.subr.mxu0 %v468
    %686 = vmatpush1.msra.mxu0 %v467
    %687 = vmatprep.subr.mxu0 %v470
    %688 = vmatpush1.msra.mxu0 %v469
    %689 = vmatprep.subr.mxu0 %v472
    %690 = vmatpush1.msra.mxu0 %v471
    %691 = vmatprep.subr.mxu0 %v474
    %692 = vmatpush1.msra.mxu0 %v473
    %693 = vmatprep.subr.mxu0 %v476
    %694 = vmatpush1.msra.mxu0 %v475
    %695 = vmatprep.subr.mxu0 %v478
    %696 = vmatpush1.msra.mxu0 %v477
    %697 = vmatprep.subr.mxu0 %v480
    %698 = vmatpush1.msra.mxu0 %v479
    %699 = vmatprep.subr.mxu0 %v482
    %700 = vmatpush1.msra.mxu0 %v481
    %701 = vmatprep.subr.mxu0 %v484
    %702 = vmatpush1.msra.mxu0 %v483
    %703 = vmatprep.subr.mxu0 %v486
    %704 = vmatpush1.msra.mxu0 %v485
    %705 = vmatprep.subr.mxu0 %v488
    %706 = vmatpush1.msra.mxu0 %v487
    %707 = vmatprep.subr.mxu0 %v490
    %708 = vmatpush1.msra.mxu0 %v489
    %709 = vmatprep.subr.mxu0 %v492
    %710 = vmatpush1.msra.mxu0 %v491
    %711 = vmatprep.subr.mxu0 %v494
    %712 = vmatpush1.msra.mxu0 %v493
    %713 = vmatprep.subr.mxu0 %v496
    %714 = vmatpush1.msra.mxu0 %v495
    %715 = vmatprep.subr.mxu0 %v498
    %716 = vmatpush1.msra.mxu0 %v497
    %717 = vmatprep.subr.mxu0 %v500
    %718 = vmatpush1.msra.mxu0 %v499
    %719 = vmatprep.subr.mxu0 %v502
    %720 = vmatpush1.msra.mxu0 %v501
    %721 = vmatprep.subr.mxu0 %v504
    %722 = vmatpush1.msra.mxu0 %v503
    %723 = vmatprep.subr.mxu0 %v506
    %724 = vmatpush1.msra.mxu0 %v505
    %725 = vmatprep.subr.mxu0 %v508
    %726 = vmatpush1.msra.mxu0 %v507
    %727 = vmatprep.mubr.f32.mxu0 %v291
    %728 = vmatmul.mubr.f32.gmra.mrb[0].mxu0 %v289
    %v729 = vpop.f32.mrb[0].mxu0
    %v730 = vadd.f32 %v659, %v729
    %v731 = vpop.f32.mrb[0].mxu0
    %v732 = vadd.f32 %v661, %v731
    %733 = vdwg.mxu0
    %v734 = vld [vmem:[%s8] sm:$0x3]
    %v736 = vlaneseq
    %v737 = vshrl.u32 %v736, 7
    %v738 = vsub.s32 0, %v737
    %v739 = vrot.slane %v734, %v738
    %v740 = vlaneseq
    %v741 = vshrl.u32 %v740, 7
    %v742 = vsub.s32 1, %v741
    %v743 = vrot.slane %v734, %v742
    %v746 = vadd.f32 %v730, %v739
    %v747 = vadd.f32 %v732, %v743
    %v748 = vmax.f32 %v746, 0.0
    %v749 = vmax.f32 %v747, 0.0
    %v750 = vld [vmem:[%s9] sm:$0xff]
    %v751 = vld [vmem:[%s9 + $0x8] sm:$0xff]
    %v752 = vld [vmem:[%s9 + $0x10] sm:$0xff]
    %v753 = vld [vmem:[%s9 + $0x18] sm:$0xff]
    %v754 = vld [vmem:[%s9 + $0x20] sm:$0xff]
    %v755 = vld [vmem:[%s9 + $0x28] sm:$0xff]
    %v756 = vld [vmem:[%s9 + $0x30] sm:$0xff]
    %v757 = vld [vmem:[%s9 + $0x38] sm:$0xff]
    %v758 = vld [vmem:[%s9 + $0x40] sm:$0xff]
    %v759 = vld [vmem:[%s9 + $0x48] sm:$0xff]
    %v760 = vld [vmem:[%s9 + $0x50] sm:$0xff]
    %v761 = vld [vmem:[%s9 + $0x58] sm:$0xff]
    %v762 = vld [vmem:[%s9 + $0x60] sm:$0xff]
    %v763 = vld [vmem:[%s9 + $0x68] sm:$0xff]
    %v764 = vld [vmem:[%s9 + $0x70] sm:$0xff]
    %v765 = vld [vmem:[%s9 + $0x78] sm:$0xff]
    %v766 = vld [vmem:[%s9 + $0x80] sm:$0xff]
    %v767 = vld [vmem:[%s9 + $0x88] sm:$0xff]
    %v768 = vld [vmem:[%s9 + $0x90] sm:$0xff]
    %v769 = vld [vmem:[%s9 + $0x98] sm:$0xff]
    %v770 = vld [vmem:[%s9 + $0xa0] sm:$0xff]
    %v771 = vld [vmem:[%s9 + $0xa8] sm:$0xff]
    %v772 = vld [vmem:[%s9 + $0xb0] sm:$0xff]
    %v773 = vld [vmem:[%s9 + $0xb8] sm:$0xff]
    %v774 = vld [vmem:[%s9 + $0xc0] sm:$0xff]
    %v775 = vld [vmem:[%s9 + $0xc8] sm:$0xff]
    %v776 = vld [vmem:[%s9 + $0xd0] sm:$0xff]
    %v777 = vld [vmem:[%s9 + $0xd8] sm:$0xff]
    %v778 = vld [vmem:[%s9 + $0xe0] sm:$0xff]
    %v779 = vld [vmem:[%s9 + $0xe8] sm:$0xff]
    %v780 = vld [vmem:[%s9 + $0xf0] sm:$0xff]
    %v781 = vld [vmem:[%s9 + $0xf8] sm:$0xff]
    %v782 = vld [vmem:[%s9 + $0x100] sm:$0xff]
    %v783 = vld [vmem:[%s9 + $0x108] sm:$0xff]
    %v784 = vld [vmem:[%s9 + $0x110] sm:$0xff]
    %v785 = vld [vmem:[%s9 + $0x118] sm:$0xff]
    %v786 = vld [vmem:[%s9 + $0x120] sm:$0xff]
    %v787 = vld [vmem:[%s9 + $0x128] sm:$0xff]
    %v788 = vld [vmem:[%s9 + $0x130] sm:$0xff]
    %v789 = vld [vmem:[%s9 + $0x138] sm:$0xff]
    %v790 = vld [vmem:[%s9 + $0x140] sm:$0xff]
    %v791 = vld [vmem:[%s9 + $0x148] sm:$0xff]
    %v792 = vld [vmem:[%s9 + $0x150] sm:$0xff]
    %v793 = vld [vmem:[%s9 + $0x158] sm:$0xff]
    %v794 = vld [vmem:[%s9 + $0x160] sm:$0xff]
    %v795 = vld [vmem:[%s9 + $0x168] sm:$0xff]
    %v796 = vld [vmem:[%s9 + $0x170] sm:$0xff]
    %v797 = vld [vmem:[%s9 + $0x178] sm:$0xff]
    %v798 = vld [vmem:[%s9 + $0x180] sm:$0xff]
    %v799 = vld [vmem:[%s9 + $0x188] sm:$0xff]
    %v800 = vld [vmem:[%s9 + $0x190] sm:$0xff]
    %v801 = vld [vmem:[%s9 + $0x198] sm:$0xff]
    %v802 = vld [vmem:[%s9 + $0x1a0] sm:$0xff]
    %v803 = vld [vmem:[%s9 + $0x1a8] sm:$0xff]
    %v804 = vld [vmem:[%s9 + $0x1b0] sm:$0xff]
    %v805 = vld [vmem:[%s9 + $0x1b8] sm:$0xff]
    %v806 = vld [vmem:[%s9 + $0x1c0] sm:$0xff]
    %v807 = vld [vmem:[%s9 + $0x1c8] sm:$0xff]
    %v808 = vld [vmem:[%s9 + $0x1d0] sm:$0xff]
    %v809 = vld [vmem:[%s9 + $0x1d8] sm:$0xff]
    %v810 = vld [vmem:[%s9 + $0x1e0] sm:$0xff]
    %v811 = vld [vmem:[%s9 + $0x1e8] sm:$0xff]
    %v812 = vld [vmem:[%s9 + $0x1f0] sm:$0xff]
    %v813 = vld [vmem:[%s9 + $0x1f8] sm:$0xff]
    %v814 = vld [vmem:[%s9 + $0x200] sm:$0xff]
    %v815 = vld [vmem:[%s9 + $0x208] sm:$0xff]
    %v816 = vld [vmem:[%s9 + $0x210] sm:$0xff]
    %v817 = vld [vmem:[%s9 + $0x218] sm:$0xff]
    %v818 = vld [vmem:[%s9 + $0x220] sm:$0xff]
    %v819 = vld [vmem:[%s9 + $0x228] sm:$0xff]
    %v820 = vld [vmem:[%s9 + $0x230] sm:$0xff]
    %v821 = vld [vmem:[%s9 + $0x238] sm:$0xff]
    %v822 = vld [vmem:[%s9 + $0x240] sm:$0xff]
    %v823 = vld [vmem:[%s9 + $0x248] sm:$0xff]
    %v824 = vld [vmem:[%s9 + $0x250] sm:$0xff]
    %v825 = vld [vmem:[%s9 + $0x258] sm:$0xff]
    %v826 = vld [vmem:[%s9 + $0x260] sm:$0xff]
    %v827 = vld [vmem:[%s9 + $0x268] sm:$0xff]
    %v828 = vld [vmem:[%s9 + $0x270] sm:$0xff]
    %v829 = vld [vmem:[%s9 + $0x278] sm:$0xff]
    %v830 = vld [vmem:[%s9 + $0x280] sm:$0xff]
    %v831 = vld [vmem:[%s9 + $0x288] sm:$0xff]
    %v832 = vld [vmem:[%s9 + $0x290] sm:$0xff]
    %v833 = vld [vmem:[%s9 + $0x298] sm:$0xff]
    %v834 = vld [vmem:[%s9 + $0x2a0] sm:$0xff]
    %v835 = vld [vmem:[%s9 + $0x2a8] sm:$0xff]
    %v836 = vld [vmem:[%s9 + $0x2b0] sm:$0xff]
    %v837 = vld [vmem:[%s9 + $0x2b8] sm:$0xff]
    %v838 = vld [vmem:[%s9 + $0x2c0] sm:$0xff]
    %v839 = vld [vmem:[%s9 + $0x2c8] sm:$0xff]
    %v840 = vld [vmem:[%s9 + $0x2d0] sm:$0xff]
    %v841 = vld [vmem:[%s9 + $0x2d8] sm:$0xff]
    %v842 = vld [vmem:[%s9 + $0x2e0] sm:$0xff]
    %v843 = vld [vmem:[%s9 + $0x2e8] sm:$0xff]
    %v844 = vld [vmem:[%s9 + $0x2f0] sm:$0xff]
    %v845 = vld [vmem:[%s9 + $0x2f8] sm:$0xff]
    %v846 = vld [vmem:[%s9 + $0x300] sm:$0xff]
    %v847 = vld [vmem:[%s9 + $0x308] sm:$0xff]
    %v848 = vld [vmem:[%s9 + $0x310] sm:$0xff]
    %v849 = vld [vmem:[%s9 + $0x318] sm:$0xff]
    %v850 = vld [vmem:[%s9 + $0x320] sm:$0xff]
    %v851 = vld [vmem:[%s9 + $0x328] sm:$0xff]
    %v852 = vld [vmem:[%s9 + $0x330] sm:$0xff]
    %v853 = vld [vmem:[%s9 + $0x338] sm:$0xff]
    %v854 = vld [vmem:[%s9 + $0x340] sm:$0xff]
    %v855 = vld [vmem:[%s9 + $0x348] sm:$0xff]
    %v856 = vld [vmem:[%s9 + $0x350] sm:$0xff]
    %v857 = vld [vmem:[%s9 + $0x358] sm:$0xff]
    %v858 = vld [vmem:[%s9 + $0x360] sm:$0xff]
    %v859 = vld [vmem:[%s9 + $0x368] sm:$0xff]
    %v860 = vld [vmem:[%s9 + $0x370] sm:$0xff]
    %v861 = vld [vmem:[%s9 + $0x378] sm:$0xff]
    %v862 = vld [vmem:[%s9 + $0x380] sm:$0xff]
    %v863 = vld [vmem:[%s9 + $0x388] sm:$0xff]
    %v864 = vld [vmem:[%s9 + $0x390] sm:$0xff]
    %v865 = vld [vmem:[%s9 + $0x398] sm:$0xff]
    %v866 = vld [vmem:[%s9 + $0x3a0] sm:$0xff]
    %v867 = vld [vmem:[%s9 + $0x3a8] sm:$0xff]
    %v868 = vld [vmem:[%s9 + $0x3b0] sm:$0xff]
    %v869 = vld [vmem:[%s9 + $0x3b8] sm:$0xff]
    %v870 = vld [vmem:[%s9 + $0x3c0] sm:$0xff]
    %v871 = vld [vmem:[%s9 + $0x3c8] sm:$0xff]
    %v872 = vld [vmem:[%s9 + $0x3d0] sm:$0xff]
    %v873 = vld [vmem:[%s9 + $0x3d8] sm:$0xff]
    %v874 = vld [vmem:[%s9 + $0x3e0] sm:$0xff]
    %v875 = vld [vmem:[%s9 + $0x3e8] sm:$0xff]
    %v876 = vld [vmem:[%s9 + $0x3f0] sm:$0xff]
    %v877 = vld [vmem:[%s9 + $0x3f8] sm:$0xff]
    %v878 = vld [vmem:[%s10] sm:$0xf]
    %v880 = vlaneseq
    %v881 = vshrl.u32 %v880, 7
    %v882 = vsub.s32 0, %v881
    %v883 = vrot.slane %v878, %v882
    %v884 = vlaneseq
    %v885 = vshrl.u32 %v884, 7
    %v886 = vsub.s32 1, %v885
    %v887 = vrot.slane %v878, %v886
    %v888 = vlaneseq
    %v889 = vshrl.u32 %v888, 7
    %v890 = vsub.s32 2, %v889
    %v891 = vrot.slane %v878, %v890
    %v892 = vlaneseq
    %v893 = vshrl.u32 %v892, 7
    %v894 = vsub.s32 3, %v893
    %v895 = vrot.slane %v878, %v894
    %900 = vmatprep.subr.mxu0 %v751
    %901 = vmatpush1.msra.mxu0 %v750
    %902 = vmatprep.subr.mxu0 %v755
    %903 = vmatpush1.msra.mxu0 %v754
    %904 = vmatprep.subr.mxu0 %v759
    %905 = vmatpush1.msra.mxu0 %v758
    %906 = vmatprep.subr.mxu0 %v763
    %907 = vmatpush1.msra.mxu0 %v762
    %908 = vmatprep.subr.mxu0 %v767
    %909 = vmatpush1.msra.mxu0 %v766
    %910 = vmatprep.subr.mxu0 %v771
    %911 = vmatpush1.msra.mxu0 %v770
    %912 = vmatprep.subr.mxu0 %v775
    %913 = vmatpush1.msra.mxu0 %v774
    %914 = vmatprep.subr.mxu0 %v779
    %915 = vmatpush1.msra.mxu0 %v778
    %916 = vmatprep.subr.mxu0 %v783
    %917 = vmatpush1.msra.mxu0 %v782
    %918 = vmatprep.subr.mxu0 %v787
    %919 = vmatpush1.msra.mxu0 %v786
    %920 = vmatprep.subr.mxu0 %v791
    %921 = vmatpush1.msra.mxu0 %v790
    %922 = vmatprep.subr.mxu0 %v795
    %923 = vmatpush1.msra.mxu0 %v794
    %924 = vmatprep.subr.mxu0 %v799
    %925 = vmatpush1.msra.mxu0 %v798
    %926 = vmatprep.subr.mxu0 %v803
    %927 = vmatpush1.msra.mxu0 %v802
    %928 = vmatprep.subr.mxu0 %v807
    %929 = vmatpush1.msra.mxu0 %v806
    %930 = vmatprep.subr.mxu0 %v811
    %931 = vmatpush1.msra.mxu0 %v810
    %932 = vmatprep.subr.mxu0 %v815
    %933 = vmatpush1.msra.mxu0 %v814
    %934 = vmatprep.subr.mxu0 %v819
    %935 = vmatpush1.msra.mxu0 %v818
    %936 = vmatprep.subr.mxu0 %v823
    %937 = vmatpush1.msra.mxu0 %v822
    %938 = vmatprep.subr.mxu0 %v827
    %939 = vmatpush1.msra.mxu0 %v826
    %940 = vmatprep.subr.mxu0 %v831
    %941 = vmatpush1.msra.mxu0 %v830
    %942 = vmatprep.subr.mxu0 %v835
    %943 = vmatpush1.msra.mxu0 %v834
    %944 = vmatprep.subr.mxu0 %v839
    %945 = vmatpush1.msra.mxu0 %v838
    %946 = vmatprep.subr.mxu0 %v843
    %947 = vmatpush1.msra.mxu0 %v842
    %948 = vmatprep.subr.mxu0 %v847
    %949 = vmatpush1.msra.mxu0 %v846
    %950 = vmatprep.subr.mxu0 %v851
    %951 = vmatpush1.msra.mxu0 %v850
    %952 = vmatprep.subr.mxu0 %v855
    %953 = vmatpush1.msra.mxu0 %v854
    %954 = vmatprep.subr.mxu0 %v859
    %955 = vmatpush1.msra.mxu0 %v858
    %956 = vmatprep.subr.mxu0 %v863
    %957 = vmatpush1.msra.mxu0 %v862
    %958 = vmatprep.subr.mxu0 %v867
    %959 = vmatpush1.msra.mxu0 %v866
    %960 = vmatprep.subr.mxu0 %v871
    %961 = vmatpush1.msra.mxu0 %v870
    %962 = vmatprep.subr.mxu0 %v875
    %963 = vmatpush1.msra.mxu0 %v874
    %964 = vmatprep.mubr.f32.mxu0 %v749
    %965 = vmatmul.mubr.f32.gmra.mrb[0].mxu0 %v748
    %v966 = vpop.f32.mrb[0].mxu0
    %v967 = vadd.f32 %v883, %v966
    %v968 = vpop.f32.mrb[0].mxu0
    %v969 = vadd.f32 %v887, %v968
    %970 = vdwg.mxu0
    %971 = vmatprep.subr.mxu0 %v753
    %972 = vmatpush1.msra.mxu0 %v752
    %973 = vmatprep.subr.mxu0 %v757
    %974 = vmatpush1.msra.mxu0 %v756
    %975 = vmatprep.subr.mxu0 %v761
    %976 = vmatpush1.msra.mxu0 %v760
    %977 = vmatprep.subr.mxu0 %v765
    %978 = vmatpush1.msra.mxu0 %v764
    %979 = vmatprep.subr.mxu0 %v769
    %980 = vmatpush1.msra.mxu0 %v768
    %981 = vmatprep.subr.mxu0 %v773
    %982 = vmatpush1.msra.mxu0 %v772
    %983 = vmatprep.subr.mxu0 %v777
    %984 = vmatpush1.msra.mxu0 %v776
    %985 = vmatprep.subr.mxu0 %v781
    %986 = vmatpush1.msra.mxu0 %v780
    %987 = vmatprep.subr.mxu0 %v785
    %988 = vmatpush1.msra.mxu0 %v784
    %989 = vmatprep.subr.mxu0 %v789
    %990 = vmatpush1.msra.mxu0 %v788
    %991 = vmatprep.subr.mxu0 %v793
    %992 = vmatpush1.msra.mxu0 %v792
    %993 = vmatprep.subr.mxu0 %v797
    %994 = vmatpush1.msra.mxu0 %v796
    %995 = vmatprep.subr.mxu0 %v801
    %996 = vmatpush1.msra.mxu0 %v800
    %997 = vmatprep.subr.mxu0 %v805
    %998 = vmatpush1.msra.mxu0 %v804
    %999 = vmatprep.subr.mxu0 %v809
    %1000 = vmatpush1.msra.mxu0 %v808
    %1001 = vmatprep.subr.mxu0 %v813
    %1002 = vmatpush1.msra.mxu0 %v812
    %1003 = vmatprep.subr.mxu0 %v817
    %1004 = vmatpush1.msra.mxu0 %v816
    %1005 = vmatprep.subr.mxu0 %v821
    %1006 = vmatpush1.msra.mxu0 %v820
    %1007 = vmatprep.subr.mxu0 %v825
    %1008 = vmatpush1.msra.mxu0 %v824
    %1009 = vmatprep.subr.mxu0 %v829
    %1010 = vmatpush1.msra.mxu0 %v828
    %1011 = vmatprep.subr.mxu0 %v833
    %1012 = vmatpush1.msra.mxu0 %v832
    %1013 = vmatprep.subr.mxu0 %v837
    %1014 = vmatpush1.msra.mxu0 %v836
    %1015 = vmatprep.subr.mxu0 %v841
    %1016 = vmatpush1.msra.mxu0 %v840
    %1017 = vmatprep.subr.mxu0 %v845
    %1018 = vmatpush1.msra.mxu0 %v844
    %1019 = vmatprep.subr.mxu0 %v849
    %1020 = vmatpush1.msra.mxu0 %v848
    %1021 = vmatprep.subr.mxu0 %v853
    %1022 = vmatpush1.msra.mxu0 %v852
    %1023 = vmatprep.subr.mxu0 %v857
    %1024 = vmatpush1.msra.mxu0 %v856
    %1025 = vmatprep.subr.mxu0 %v861
    %1026 = vmatpush1.msra.mxu0 %v860
    %1027 = vmatprep.subr.mxu0 %v865
    %1028 = vmatpush1.msra.mxu0 %v864
    %1029 = vmatprep.subr.mxu0 %v869
    %1030 = vmatpush1.msra.mxu0 %v868
    %1031 = vmatprep.subr.mxu0 %v873
    %1032 = vmatpush1.msra.mxu0 %v872
    %1033 = vmatprep.subr.mxu0 %v877
    %1034 = vmatpush1.msra.mxu0 %v876
    %1035 = vmatprep.mubr.f32.mxu0 %v749
    %1036 = vmatmul.mubr.f32.gmra.mrb[0].mxu0 %v748
    %v1037 = vpop.f32.mrb[0].mxu0
    %v1038 = vadd.f32 %v891, %v1037
    %v1039 = vpop.f32.mrb[0].mxu0
    %v1040 = vadd.f32 %v895, %v1039
    %1041 = vdwg.mxu0
    %v1042 = vld [vmem:[%s11] sm:$0xff]
    %v1043 = vld [vmem:[%s11 + $0x8] sm:$0xff]
    %v1044 = vld [vmem:[%s11 + $0x10] sm:$0xff]
    %v1045 = vld [vmem:[%s11 + $0x18] sm:$0xff]
    %v1046 = vld [vmem:[%s11 + $0x20] sm:$0xff]
    %v1047 = vld [vmem:[%s11 + $0x28] sm:$0xff]
    %v1048 = vld [vmem:[%s11 + $0x30] sm:$0xff]
    %v1049 = vld [vmem:[%s11 + $0x38] sm:$0xff]
    %v1050 = vld [vmem:[%s11 + $0x40] sm:$0xff]
    %v1051 = vld [vmem:[%s11 + $0x48] sm:$0xff]
    %v1052 = vld [vmem:[%s11 + $0x50] sm:$0xff]
    %v1053 = vld [vmem:[%s11 + $0x58] sm:$0xff]
    %v1054 = vld [vmem:[%s11 + $0x60] sm:$0xff]
    %v1055 = vld [vmem:[%s11 + $0x68] sm:$0xff]
    %v1056 = vld [vmem:[%s11 + $0x70] sm:$0xff]
    %v1057 = vld [vmem:[%s11 + $0x78] sm:$0xff]
    %v1058 = vld [vmem:[%s11 + $0x80] sm:$0xff]
    %v1059 = vld [vmem:[%s11 + $0x88] sm:$0xff]
    %v1060 = vld [vmem:[%s11 + $0x90] sm:$0xff]
    %v1061 = vld [vmem:[%s11 + $0x98] sm:$0xff]
    %v1062 = vld [vmem:[%s11 + $0xa0] sm:$0xff]
    %v1063 = vld [vmem:[%s11 + $0xa8] sm:$0xff]
    %v1064 = vld [vmem:[%s11 + $0xb0] sm:$0xff]
    %v1065 = vld [vmem:[%s11 + $0xb8] sm:$0xff]
    %v1066 = vld [vmem:[%s11 + $0xc0] sm:$0xff]
    %v1067 = vld [vmem:[%s11 + $0xc8] sm:$0xff]
    %v1068 = vld [vmem:[%s11 + $0xd0] sm:$0xff]
    %v1069 = vld [vmem:[%s11 + $0xd8] sm:$0xff]
    %v1070 = vld [vmem:[%s11 + $0xe0] sm:$0xff]
    %v1071 = vld [vmem:[%s11 + $0xe8] sm:$0xff]
    %v1072 = vld [vmem:[%s11 + $0xf0] sm:$0xff]
    %v1073 = vld [vmem:[%s11 + $0xf8] sm:$0xff]
    %v1074 = vld [vmem:[%s11 + $0x100] sm:$0xff]
    %v1075 = vld [vmem:[%s11 + $0x108] sm:$0xff]
    %v1076 = vld [vmem:[%s11 + $0x110] sm:$0xff]
    %v1077 = vld [vmem:[%s11 + $0x118] sm:$0xff]
    %v1078 = vld [vmem:[%s11 + $0x120] sm:$0xff]
    %v1079 = vld [vmem:[%s11 + $0x128] sm:$0xff]
    %v1080 = vld [vmem:[%s11 + $0x130] sm:$0xff]
    %v1081 = vld [vmem:[%s11 + $0x138] sm:$0xff]
    %v1082 = vld [vmem:[%s11 + $0x140] sm:$0xff]
    %v1083 = vld [vmem:[%s11 + $0x148] sm:$0xff]
    %v1084 = vld [vmem:[%s11 + $0x150] sm:$0xff]
    %v1085 = vld [vmem:[%s11 + $0x158] sm:$0xff]
    %v1086 = vld [vmem:[%s11 + $0x160] sm:$0xff]
    %v1087 = vld [vmem:[%s11 + $0x168] sm:$0xff]
    %v1088 = vld [vmem:[%s11 + $0x170] sm:$0xff]
    %v1089 = vld [vmem:[%s11 + $0x178] sm:$0xff]
    %v1090 = vld [vmem:[%s11 + $0x180] sm:$0xff]
    %v1091 = vld [vmem:[%s11 + $0x188] sm:$0xff]
    %v1092 = vld [vmem:[%s11 + $0x190] sm:$0xff]
    %v1093 = vld [vmem:[%s11 + $0x198] sm:$0xff]
    %v1094 = vld [vmem:[%s11 + $0x1a0] sm:$0xff]
    %v1095 = vld [vmem:[%s11 + $0x1a8] sm:$0xff]
    %v1096 = vld [vmem:[%s11 + $0x1b0] sm:$0xff]
    %v1097 = vld [vmem:[%s11 + $0x1b8] sm:$0xff]
    %v1098 = vld [vmem:[%s11 + $0x1c0] sm:$0xff]
    %v1099 = vld [vmem:[%s11 + $0x1c8] sm:$0xff]
    %v1100 = vld [vmem:[%s11 + $0x1d0] sm:$0xff]
    %v1101 = vld [vmem:[%s11 + $0x1d8] sm:$0xff]
    %v1102 = vld [vmem:[%s11 + $0x1e0] sm:$0xff]
    %v1103 = vld [vmem:[%s11 + $0x1e8] sm:$0xff]
    %v1104 = vld [vmem:[%s11 + $0x1f0] sm:$0xff]
    %v1105 = vld [vmem:[%s11 + $0x1f8] sm:$0xff]
    %v1106 = vld [vmem:[%s11 + $0x200] sm:$0xff]
    %v1107 = vld [vmem:[%s11 + $0x208] sm:$0xff]
    %v1108 = vld [vmem:[%s11 + $0x210] sm:$0xff]
    %v1109 = vld [vmem:[%s11 + $0x218] sm:$0xff]
    %v1110 = vld [vmem:[%s11 + $0x220] sm:$0xff]
    %v1111 = vld [vmem:[%s11 + $0x228] sm:$0xff]
    %v1112 = vld [vmem:[%s11 + $0x230] sm:$0xff]
    %v1113 = vld [vmem:[%s11 + $0x238] sm:$0xff]
    %v1114 = vld [vmem:[%s11 + $0x240] sm:$0xff]
    %v1115 = vld [vmem:[%s11 + $0x248] sm:$0xff]
    %v1116 = vld [vmem:[%s11 + $0x250] sm:$0xff]
    %v1117 = vld [vmem:[%s11 + $0x258] sm:$0xff]
    %v1118 = vld [vmem:[%s11 + $0x260] sm:$0xff]
    %v1119 = vld [vmem:[%s11 + $0x268] sm:$0xff]
    %v1120 = vld [vmem:[%s11 + $0x270] sm:$0xff]
    %v1121 = vld [vmem:[%s11 + $0x278] sm:$0xff]
    %v1122 = vld [vmem:[%s11 + $0x280] sm:$0xff]
    %v1123 = vld [vmem:[%s11 + $0x288] sm:$0xff]
    %v1124 = vld [vmem:[%s11 + $0x290] sm:$0xff]
    %v1125 = vld [vmem:[%s11 + $0x298] sm:$0xff]
    %v1126 = vld [vmem:[%s11 + $0x2a0] sm:$0xff]
    %v1127 = vld [vmem:[%s11 + $0x2a8] sm:$0xff]
    %v1128 = vld [vmem:[%s11 + $0x2b0] sm:$0xff]
    %v1129 = vld [vmem:[%s11 + $0x2b8] sm:$0xff]
    %v1130 = vld [vmem:[%s11 + $0x2c0] sm:$0xff]
    %v1131 = vld [vmem:[%s11 + $0x2c8] sm:$0xff]
    %v1132 = vld [vmem:[%s11 + $0x2d0] sm:$0xff]
    %v1133 = vld [vmem:[%s11 + $0x2d8] sm:$0xff]
    %v1134 = vld [vmem:[%s11 + $0x2e0] sm:$0xff]
    %v1135 = vld [vmem:[%s11 + $0x2e8] sm:$0xff]
    %v1136 = vld [vmem:[%s11 + $0x2f0] sm:$0xff]
    %v1137 = vld [vmem:[%s11 + $0x2f8] sm:$0xff]
    %v1138 = vld [vmem:[%s11 + $0x300] sm:$0xff]
    %v1139 = vld [vmem:[%s11 + $0x308] sm:$0xff]
    %v1140 = vld [vmem:[%s11 + $0x310] sm:$0xff]
    %v1141 = vld [vmem:[%s11 + $0x318] sm:$0xff]
    %v1142 = vld [vmem:[%s11 + $0x320] sm:$0xff]
    %v1143 = vld [vmem:[%s11 + $0x328] sm:$0xff]
    %v1144 = vld [vmem:[%s11 + $0x330] sm:$0xff]
    %v1145 = vld [vmem:[%s11 + $0x338] sm:$0xff]
    %v1146 = vld [vmem:[%s11 + $0x340] sm:$0xff]
    %v1147 = vld [vmem:[%s11 + $0x348] sm:$0xff]
    %v1148 = vld [vmem:[%s11 + $0x350] sm:$0xff]
    %v1149 = vld [vmem:[%s11 + $0x358] sm:$0xff]
    %v1150 = vld [vmem:[%s11 + $0x360] sm:$0xff]
    %v1151 = vld [vmem:[%s11 + $0x368] sm:$0xff]
    %v1152 = vld [vmem:[%s11 + $0x370] sm:$0xff]
    %v1153 = vld [vmem:[%s11 + $0x378] sm:$0xff]
    %v1154 = vld [vmem:[%s11 + $0x380] sm:$0xff]
    %v1155 = vld [vmem:[%s11 + $0x388] sm:$0xff]
    %v1156 = vld [vmem:[%s11 + $0x390] sm:$0xff]
    %v1157 = vld [vmem:[%s11 + $0x398] sm:$0xff]
    %v1158 = vld [vmem:[%s11 + $0x3a0] sm:$0xff]
    %v1159 = vld [vmem:[%s11 + $0x3a8] sm:$0xff]
    %v1160 = vld [vmem:[%s11 + $0x3b0] sm:$0xff]
    %v1161 = vld [vmem:[%s11 + $0x3b8] sm:$0xff]
    %v1162 = vld [vmem:[%s11 + $0x3c0] sm:$0xff]
    %v1163 = vld [vmem:[%s11 + $0x3c8] sm:$0xff]
    %v1164 = vld [vmem:[%s11 + $0x3d0] sm:$0xff]
    %v1165 = vld [vmem:[%s11 + $0x3d8] sm:$0xff]
    %v1166 = vld [vmem:[%s11 + $0x3e0] sm:$0xff]
    %v1167 = vld [vmem:[%s11 + $0x3e8] sm:$0xff]
    %v1168 = vld [vmem:[%s11 + $0x3f0] sm:$0xff]
    %v1169 = vld [vmem:[%s11 + $0x3f8] sm:$0xff]
    %v1170 = vld [vmem:[%s12] sm:$0xff]
    %v1171 = vld [vmem:[%s12 + $0x8] sm:$0xff]
    %v1172 = vld [vmem:[%s12 + $0x10] sm:$0xff]
    %v1173 = vld [vmem:[%s12 + $0x18] sm:$0xff]
    %v1174 = vld [vmem:[%s12 + $0x20] sm:$0xff]
    %v1175 = vld [vmem:[%s12 + $0x28] sm:$0xff]
    %v1176 = vld [vmem:[%s12 + $0x30] sm:$0xff]
    %v1177 = vld [vmem:[%s12 + $0x38] sm:$0xff]
    %v1178 = vld [vmem:[%s12 + $0x40] sm:$0xff]
    %v1179 = vld [vmem:[%s12 + $0x48] sm:$0xff]
    %v1180 = vld [vmem:[%s12 + $0x50] sm:$0xff]
    %v1181 = vld [vmem:[%s12 + $0x58] sm:$0xff]
    %v1182 = vld [vmem:[%s12 + $0x60] sm:$0xff]
    %v1183 = vld [vmem:[%s12 + $0x68] sm:$0xff]
    %v1184 = vld [vmem:[%s12 + $0x70] sm:$0xff]
    %v1185 = vld [vmem:[%s12 + $0x78] sm:$0xff]
    %v1186 = vld [vmem:[%s12 + $0x80] sm:$0xff]
    %v1187 = vld [vmem:[%s12 + $0x88] sm:$0xff]
    %v1188 = vld [vmem:[%s12 + $0x90] sm:$0xff]
    %v1189 = vld [vmem:[%s12 + $0x98] sm:$0xff]
    %v1190 = vld [vmem:[%s12 + $0xa0] sm:$0xff]
    %v1191 = vld [vmem:[%s12 + $0xa8] sm:$0xff]
    %v1192 = vld [vmem:[%s12 + $0xb0] sm:$0xff]
    %v1193 = vld [vmem:[%s12 + $0xb8] sm:$0xff]
    %v1194 = vld [vmem:[%s12 + $0xc0] sm:$0xff]
    %v1195 = vld [vmem:[%s12 + $0xc8] sm:$0xff]
    %v1196 = vld [vmem:[%s12 + $0xd0] sm:$0xff]
    %v1197 = vld [vmem:[%s12 + $0xd8] sm:$0xff]
    %v1198 = vld [vmem:[%s12 + $0xe0] sm:$0xff]
    %v1199 = vld [vmem:[%s12 + $0xe8] sm:$0xff]
    %v1200 = vld [vmem:[%s12 + $0xf0] sm:$0xff]
    %v1201 = vld [vmem:[%s12 + $0xf8] sm:$0xff]
    %v1202 = vld [vmem:[%s12 + $0x100] sm:$0xff]
    %v1203 = vld [vmem:[%s12 + $0x108] sm:$0xff]
    %v1204 = vld [vmem:[%s12 + $0x110] sm:$0xff]
    %v1205 = vld [vmem:[%s12 + $0x118] sm:$0xff]
    %v1206 = vld [vmem:[%s12 + $0x120] sm:$0xff]
    %v1207 = vld [vmem:[%s12 + $0x128] sm:$0xff]
    %v1208 = vld [vmem:[%s12 + $0x130] sm:$0xff]
    %v1209 = vld [vmem:[%s12 + $0x138] sm:$0xff]
    %v1210 = vld [vmem:[%s12 + $0x140] sm:$0xff]
    %v1211 = vld [vmem:[%s12 + $0x148] sm:$0xff]
    %v1212 = vld [vmem:[%s12 + $0x150] sm:$0xff]
    %v1213 = vld [vmem:[%s12 + $0x158] sm:$0xff]
    %v1214 = vld [vmem:[%s12 + $0x160] sm:$0xff]
    %v1215 = vld [vmem:[%s12 + $0x168] sm:$0xff]
    %v1216 = vld [vmem:[%s12 + $0x170] sm:$0xff]
    %v1217 = vld [vmem:[%s12 + $0x178] sm:$0xff]
    %v1218 = vld [vmem:[%s12 + $0x180] sm:$0xff]
    %v1219 = vld [vmem:[%s12 + $0x188] sm:$0xff]
    %v1220 = vld [vmem:[%s12 + $0x190] sm:$0xff]
    %v1221 = vld [vmem:[%s12 + $0x198] sm:$0xff]
    %v1222 = vld [vmem:[%s12 + $0x1a0] sm:$0xff]
    %v1223 = vld [vmem:[%s12 + $0x1a8] sm:$0xff]
    %v1224 = vld [vmem:[%s12 + $0x1b0] sm:$0xff]
    %v1225 = vld [vmem:[%s12 + $0x1b8] sm:$0xff]
    %v1226 = vld [vmem:[%s12 + $0x1c0] sm:$0xff]
    %v1227 = vld [vmem:[%s12 + $0x1c8] sm:$0xff]
    %v1228 = vld [vmem:[%s12 + $0x1d0] sm:$0xff]
    %v1229 = vld [vmem:[%s12 + $0x1d8] sm:$0xff]
    %v1230 = vld [vmem:[%s12 + $0x1e0] sm:$0xff]
    %v1231 = vld [vmem:[%s12 + $0x1e8] sm:$0xff]
    %v1232 = vld [vmem:[%s12 + $0x1f0] sm:$0xff]
    %v1233 = vld [vmem:[%s12 + $0x1f8] sm:$0xff]
    %v1234 = vld [vmem:[%s12 + $0x200] sm:$0xff]
    %v1235 = vld [vmem:[%s12 + $0x208] sm:$0xff]
    %v1236 = vld [vmem:[%s12 + $0x210] sm:$0xff]
    %v1237 = vld [vmem:[%s12 + $0x218] sm:$0xff]
    %v1238 = vld [vmem:[%s12 + $0x220] sm:$0xff]
    %v1239 = vld [vmem:[%s12 + $0x228] sm:$0xff]
    %v1240 = vld [vmem:[%s12 + $0x230] sm:$0xff]
    %v1241 = vld [vmem:[%s12 + $0x238] sm:$0xff]
    %v1242 = vld [vmem:[%s12 + $0x240] sm:$0xff]
    %v1243 = vld [vmem:[%s12 + $0x248] sm:$0xff]
    %v1244 = vld [vmem:[%s12 + $0x250] sm:$0xff]
    %v1245 = vld [vmem:[%s12 + $0x258] sm:$0xff]
    %v1246 = vld [vmem:[%s12 + $0x260] sm:$0xff]
    %v1247 = vld [vmem:[%s12 + $0x268] sm:$0xff]
    %v1248 = vld [vmem:[%s12 + $0x270] sm:$0xff]
    %v1249 = vld [vmem:[%s12 + $0x278] sm:$0xff]
    %v1250 = vld [vmem:[%s12 + $0x280] sm:$0xff]
    %v1251 = vld [vmem:[%s12 + $0x288] sm:$0xff]
    %v1252 = vld [vmem:[%s12 + $0x290] sm:$0xff]
    %v1253 = vld [vmem:[%s12 + $0x298] sm:$0xff]
    %v1254 = vld [vmem:[%s12 + $0x2a0] sm:$0xff]
    %v1255 = vld [vmem:[%s12 + $0x2a8] sm:$0xff]
    %v1256 = vld [vmem:[%s12 + $0x2b0] sm:$0xff]
    %v1257 = vld [vmem:[%s12 + $0x2b8] sm:$0xff]
    %v1258 = vld [vmem:[%s12 + $0x2c0] sm:$0xff]
    %v1259 = vld [vmem:[%s12 + $0x2c8] sm:$0xff]
    %v1260 = vld [vmem:[%s12 + $0x2d0] sm:$0xff]
    %v1261 = vld [vmem:[%s12 + $0x2d8] sm:$0xff]
    %v1262 = vld [vmem:[%s12 + $0x2e0] sm:$0xff]
    %v1263 = vld [vmem:[%s12 + $0x2e8] sm:$0xff]
    %v1264 = vld [vmem:[%s12 + $0x2f0] sm:$0xff]
    %v1265 = vld [vmem:[%s12 + $0x2f8] sm:$0xff]
    %v1266 = vld [vmem:[%s12 + $0x300] sm:$0xff]
    %v1267 = vld [vmem:[%s12 + $0x308] sm:$0xff]
    %v1268 = vld [vmem:[%s12 + $0x310] sm:$0xff]
    %v1269 = vld [vmem:[%s12 + $0x318] sm:$0xff]
    %v1270 = vld [vmem:[%s12 + $0x320] sm:$0xff]
    %v1271 = vld [vmem:[%s12 + $0x328] sm:$0xff]
    %v1272 = vld [vmem:[%s12 + $0x330] sm:$0xff]
    %v1273 = vld [vmem:[%s12 + $0x338] sm:$0xff]
    %v1274 = vld [vmem:[%s12 + $0x340] sm:$0xff]
    %v1275 = vld [vmem:[%s12 + $0x348] sm:$0xff]
    %v1276 = vld [vmem:[%s12 + $0x350] sm:$0xff]
    %v1277 = vld [vmem:[%s12 + $0x358] sm:$0xff]
    %v1278 = vld [vmem:[%s12 + $0x360] sm:$0xff]
    %v1279 = vld [vmem:[%s12 + $0x368] sm:$0xff]
    %v1280 = vld [vmem:[%s12 + $0x370] sm:$0xff]
    %v1281 = vld [vmem:[%s12 + $0x378] sm:$0xff]
    %v1282 = vld [vmem:[%s12 + $0x380] sm:$0xff]
    %v1283 = vld [vmem:[%s12 + $0x388] sm:$0xff]
    %v1284 = vld [vmem:[%s12 + $0x390] sm:$0xff]
    %v1285 = vld [vmem:[%s12 + $0x398] sm:$0xff]
    %v1286 = vld [vmem:[%s12 + $0x3a0] sm:$0xff]
    %v1287 = vld [vmem:[%s12 + $0x3a8] sm:$0xff]
    %v1288 = vld [vmem:[%s12 + $0x3b0] sm:$0xff]
    %v1289 = vld [vmem:[%s12 + $0x3b8] sm:$0xff]
    %v1290 = vld [vmem:[%s12 + $0x3c0] sm:$0xff]
    %v1291 = vld [vmem:[%s12 + $0x3c8] sm:$0xff]
    %v1292 = vld [vmem:[%s12 + $0x3d0] sm:$0xff]
    %v1293 = vld [vmem:[%s12 + $0x3d8] sm:$0xff]
    %v1294 = vld [vmem:[%s12 + $0x3e0] sm:$0xff]
    %v1295 = vld [vmem:[%s12 + $0x3e8] sm:$0xff]
    %v1296 = vld [vmem:[%s12 + $0x3f0] sm:$0xff]
    %v1297 = vld [vmem:[%s12 + $0x3f8] sm:$0xff]
    %v1302 = vrot.slane %v218, 2
    %v1303 = vrot.slane %v220, 2
    %v1304 = vrot.slane %v289, 2
    %v1305 = vrot.slane %v291, 2
    %1310 = vmatprep.subr.mxu0 %v1171
    %1311 = vmatpush1.msra.mxu0 %v1170
    %1312 = vmatprep.subr.mxu0 %v1173
    %1313 = vmatpush1.msra.mxu0 %v1172
    %1314 = vmatprep.subr.mxu0 %v1175
    %1315 = vmatpush1.msra.mxu0 %v1174
    %1316 = vmatprep.subr.mxu0 %v1177
    %1317 = vmatpush1.msra.mxu0 %v1176
    %1318 = vmatprep.subr.mxu0 %v1179
    %1319 = vmatpush1.msra.mxu0 %v1178
    %1320 = vmatprep.subr.mxu0 %v1181
    %1321 = vmatpush1.msra.mxu0 %v1180
    %1322 = vmatprep.subr.mxu0 %v1183
    %1323 = vmatpush1.msra.mxu0 %v1182
    %1324 = vmatprep.subr.mxu0 %v1185
    %1325 = vmatpush1.msra.mxu0 %v1184
    %1326 = vmatprep.subr.mxu0 %v1187
    %1327 = vmatpush1.msra.mxu0 %v1186
    %1328 = vmatprep.subr.mxu0 %v1189
    %1329 = vmatpush1.msra.mxu0 %v1188
    %1330 = vmatprep.subr.mxu0 %v1191
    %1331 = vmatpush1.msra.mxu0 %v1190
    %1332 = vmatprep.subr.mxu0 %v1193
    %1333 = vmatpush1.msra.mxu0 %v1192
    %1334 = vmatprep.subr.mxu0 %v1195
    %1335 = vmatpush1.msra.mxu0 %v1194
    %1336 = vmatprep.subr.mxu0 %v1197
    %1337 = vmatpush1.msra.mxu0 %v1196
    %1338 = vmatprep.subr.mxu0 %v1199
    %1339 = vmatpush1.msra.mxu0 %v1198
    %1340 = vmatprep.subr.mxu0 %v1201
    %1341 = vmatpush1.msra.mxu0 %v1200
    %1342 = vmatprep.subr.mxu0 %v1203
    %1343 = vmatpush1.msra.mxu0 %v1202
    %1344 = vmatprep.subr.mxu0 %v1205
    %1345 = vmatpush1.msra.mxu0 %v1204
    %1346 = vmatprep.subr.mxu0 %v1207
    %1347 = vmatpush1.msra.mxu0 %v1206
    %1348 = vmatprep.subr.mxu0 %v1209
    %1349 = vmatpush1.msra.mxu0 %v1208
    %1350 = vmatprep.subr.mxu0 %v1211
    %1351 = vmatpush1.msra.mxu0 %v1210
    %1352 = vmatprep.subr.mxu0 %v1213
    %1353 = vmatpush1.msra.mxu0 %v1212
    %1354 = vmatprep.subr.mxu0 %v1215
    %1355 = vmatpush1.msra.mxu0 %v1214
    %1356 = vmatprep.subr.mxu0 %v1217
    %1357 = vmatpush1.msra.mxu0 %v1216
    %1358 = vmatprep.subr.mxu0 %v1219
    %1359 = vmatpush1.msra.mxu0 %v1218
    %1360 = vmatprep.subr.mxu0 %v1221
    %1361 = vmatpush1.msra.mxu0 %v1220
    %1362 = vmatprep.subr.mxu0 %v1223
    %1363 = vmatpush1.msra.mxu0 %v1222
    %1364 = vmatprep.subr.mxu0 %v1225
    %1365 = vmatpush1.msra.mxu0 %v1224
    %1366 = vmatprep.subr.mxu0 %v1227
    %1367 = vmatpush1.msra.mxu0 %v1226
    %1368 = vmatprep.subr.mxu0 %v1229
    %1369 = vmatpush1.msra.mxu0 %v1228
    %1370 = vmatprep.subr.mxu0 %v1231
    %1371 = vmatpush1.msra.mxu0 %v1230
    %1372 = vmatprep.subr.mxu0 %v1233
    %1373 = vmatpush1.msra.mxu0 %v1232
    %1374 = vmatprep.mubr.f32.mxu0 %v1303
    %1375 = vmatmul.mubr.f32.gmra.mrb[0].mxu0 %v1302
    %v1376 = vpop.f32.mrb[0].mxu0
    %v1377 = vadd.f32 0.0, %v1376
    %v1378 = vpop.f32.mrb[0].mxu0
    %v1379 = vadd.f32 0.0, %v1378
    %1380 = vdwg.mxu0
    %1381 = vmatprep.subr.mxu0 %v1235
    %1382 = vmatpush1.msra.mxu0 %v1234
    %1383 = vmatprep.subr.mxu0 %v1237
    %1384 = vmatpush1.msra.mxu0 %v1236
    %1385 = vmatprep.subr.mxu0 %v1239
    %1386 = vmatpush1.msra.mxu0 %v1238
    %1387 = vmatprep.subr.mxu0 %v1241
    %1388 = vmatpush1.msra.mxu0 %v1240
    %1389 = vmatprep.subr.mxu0 %v1243
    %1390 = vmatpush1.msra.mxu0 %v1242
    %1391 = vmatprep.subr.mxu0 %v1245
    %1392 = vmatpush1.msra.mxu0 %v1244
    %1393 = vmatprep.subr.mxu0 %v1247
    %1394 = vmatpush1.msra.mxu0 %v1246
    %1395 = vmatprep.subr.mxu0 %v1249
    %1396 = vmatpush1.msra.mxu0 %v1248
    %1397 = vmatprep.subr.mxu0 %v1251
    %1398 = vmatpush1.msra.mxu0 %v1250
    %1399 = vmatprep.subr.mxu0 %v1253
    %1400 = vmatpush1.msra.mxu0 %v1252
    %1401 = vmatprep.subr.mxu0 %v1255
    %1402 = vmatpush1.msra.mxu0 %v1254
    %1403 = vmatprep.subr.mxu0 %v1257
    %1404 = vmatpush1.msra.mxu0 %v1256
    %1405 = vmatprep.subr.mxu0 %v1259
    %1406 = vmatpush1.msra.mxu0 %v1258
    %1407 = vmatprep.subr.mxu0 %v1261
    %1408 = vmatpush1.msra.mxu0 %v1260
    %1409 = vmatprep.subr.mxu0 %v1263
    %1410 = vmatpush1.msra.mxu0 %v1262
    %1411 = vmatprep.subr.mxu0 %v1265
    %1412 = vmatpush1.msra.mxu0 %v1264
    %1413 = vmatprep.subr.mxu0 %v1267
    %1414 = vmatpush1.msra.mxu0 %v1266
    %1415 = vmatprep.subr.mxu0 %v1269
    %1416 = vmatpush1.msra.mxu0 %v1268
    %1417 = vmatprep.subr.mxu0 %v1271
    %1418 = vmatpush1.msra.mxu0 %v1270
    %1419 = vmatprep.subr.mxu0 %v1273
    %1420 = vmatpush1.msra.mxu0 %v1272
    %1421 = vmatprep.subr.mxu0 %v1275
    %1422 = vmatpush1.msra.mxu0 %v1274
    %1423 = vmatprep.subr.mxu0 %v1277
    %1424 = vmatpush1.msra.mxu0 %v1276
    %1425 = vmatprep.subr.mxu0 %v1279
    %1426 = vmatpush1.msra.mxu0 %v1278
    %1427 = vmatprep.subr.mxu0 %v1281
    %1428 = vmatpush1.msra.mxu0 %v1280
    %1429 = vmatprep.subr.mxu0 %v1283
    %1430 = vmatpush1.msra.mxu0 %v1282
    %1431 = vmatprep.subr.mxu0 %v1285
    %1432 = vmatpush1.msra.mxu0 %v1284
    %1433 = vmatprep.subr.mxu0 %v1287
    %1434 = vmatpush1.msra.mxu0 %v1286
    %1435 = vmatprep.subr.mxu0 %v1289
    %1436 = vmatpush1.msra.mxu0 %v1288
    %1437 = vmatprep.subr.mxu0 %v1291
    %1438 = vmatpush1.msra.mxu0 %v1290
    %1439 = vmatprep.subr.mxu0 %v1293
    %1440 = vmatpush1.msra.mxu0 %v1292
    %1441 = vmatprep.subr.mxu0 %v1295
    %1442 = vmatpush1.msra.mxu0 %v1294
    %1443 = vmatprep.subr.mxu0 %v1297
    %1444 = vmatpush1.msra.mxu0 %v1296
    %1445 = vmatprep.mubr.f32.mxu0 %v1305
    %1446 = vmatmul.mubr.f32.gmra.mrb[0].mxu0 %v1304
    %v1447 = vpop.f32.mrb[0].mxu0
    %v1448 = vadd.f32 %v1377, %v1447
    %v1449 = vpop.f32.mrb[0].mxu0
    %v1450 = vadd.f32 %v1379, %v1449
    %1451 = vdwg.mxu0
    %1452 = vmatprep.subr.mxu0 %v1043
    %1453 = vmatpush1.msra.mxu0 %v1042
    %1454 = vmatprep.subr.mxu0 %v1045
    %1455 = vmatpush1.msra.mxu0 %v1044
    %1456 = vmatprep.subr.mxu0 %v1047
    %1457 = vmatpush1.msra.mxu0 %v1046
    %1458 = vmatprep.subr.mxu0 %v1049
    %1459 = vmatpush1.msra.mxu0 %v1048
    %1460 = vmatprep.subr.mxu0 %v1051
    %1461 = vmatpush1.msra.mxu0 %v1050
    %1462 = vmatprep.subr.mxu0 %v1053
    %1463 = vmatpush1.msra.mxu0 %v1052
    %1464 = vmatprep.subr.mxu0 %v1055
    %1465 = vmatpush1.msra.mxu0 %v1054
    %1466 = vmatprep.subr.mxu0 %v1057
    %1467 = vmatpush1.msra.mxu0 %v1056
    %1468 = vmatprep.subr.mxu0 %v1059
    %1469 = vmatpush1.msra.mxu0 %v1058
    %1470 = vmatprep.subr.mxu0 %v1061
    %1471 = vmatpush1.msra.mxu0 %v1060
    %1472 = vmatprep.subr.mxu0 %v1063
    %1473 = vmatpush1.msra.mxu0 %v1062
    %1474 = vmatprep.subr.mxu0 %v1065
    %1475 = vmatpush1.msra.mxu0 %v1064
    %1476 = vmatprep.subr.mxu0 %v1067
    %1477 = vmatpush1.msra.mxu0 %v1066
    %1478 = vmatprep.subr.mxu0 %v1069
    %1479 = vmatpush1.msra.mxu0 %v1068
    %1480 = vmatprep.subr.mxu0 %v1071
    %1481 = vmatpush1.msra.mxu0 %v1070
    %1482 = vmatprep.subr.mxu0 %v1073
    %1483 = vmatpush1.msra.mxu0 %v1072
    %1484 = vmatprep.subr.mxu0 %v1075
    %1485 = vmatpush1.msra.mxu0 %v1074
    %1486 = vmatprep.subr.mxu0 %v1077
    %1487 = vmatpush1.msra.mxu0 %v1076
    %1488 = vmatprep.subr.mxu0 %v1079
    %1489 = vmatpush1.msra.mxu0 %v1078
    %1490 = vmatprep.subr.mxu0 %v1081
    %1491 = vmatpush1.msra.mxu0 %v1080
    %1492 = vmatprep.subr.mxu0 %v1083
    %1493 = vmatpush1.msra.mxu0 %v1082
    %1494 = vmatprep.subr.mxu0 %v1085
    %1495 = vmatpush1.msra.mxu0 %v1084
    %1496 = vmatprep.subr.mxu0 %v1087
    %1497 = vmatpush1.msra.mxu0 %v1086
    %1498 = vmatprep.subr.mxu0 %v1089
    %1499 = vmatpush1.msra.mxu0 %v1088
    %1500 = vmatprep.subr.mxu0 %v1091
    %1501 = vmatpush1.msra.mxu0 %v1090
    %1502 = vmatprep.subr.mxu0 %v1093
    %1503 = vmatpush1.msra.mxu0 %v1092
    %1504 = vmatprep.subr.mxu0 %v1095
    %1505 = vmatpush1.msra.mxu0 %v1094
    %1506 = vmatprep.subr.mxu0 %v1097
    %1507 = vmatpush1.msra.mxu0 %v1096
    %1508 = vmatprep.subr.mxu0 %v1099
    %1509 = vmatpush1.msra.mxu0 %v1098
    %1510 = vmatprep.subr.mxu0 %v1101
    %1511 = vmatpush1.msra.mxu0 %v1100
    %1512 = vmatprep.subr.mxu0 %v1103
    %1513 = vmatpush1.msra.mxu0 %v1102
    %1514 = vmatprep.subr.mxu0 %v1105
    %1515 = vmatpush1.msra.mxu0 %v1104
    %1516 = vmatprep.mubr.f32.mxu0 %v220
    %1517 = vmatmul.mubr.f32.gmra.mrb[0].mxu0 %v218
    %v1518 = vpop.f32.mrb[0].mxu0
    %v1519 = vadd.f32 %v1448, %v1518
    %v1520 = vpop.f32.mrb[0].mxu0
    %v1521 = vadd.f32 %v1450, %v1520
    %1522 = vdwg.mxu0
    %1523 = vmatprep.subr.mxu0 %v1107
    %1524 = vmatpush1.msra.mxu0 %v1106
    %1525 = vmatprep.subr.mxu0 %v1109
    %1526 = vmatpush1.msra.mxu0 %v1108
    %1527 = vmatprep.subr.mxu0 %v1111
    %1528 = vmatpush1.msra.mxu0 %v1110
    %1529 = vmatprep.subr.mxu0 %v1113
    %1530 = vmatpush1.msra.mxu0 %v1112
    %1531 = vmatprep.subr.mxu0 %v1115
    %1532 = vmatpush1.msra.mxu0 %v1114
    %1533 = vmatprep.subr.mxu0 %v1117
    %1534 = vmatpush1.msra.mxu0 %v1116
    %1535 = vmatprep.subr.mxu0 %v1119
    %1536 = vmatpush1.msra.mxu0 %v1118
    %1537 = vmatprep.subr.mxu0 %v1121
    %1538 = vmatpush1.msra.mxu0 %v1120
    %1539 = vmatprep.subr.mxu0 %v1123
    %1540 = vmatpush1.msra.mxu0 %v1122
    %1541 = vmatprep.subr.mxu0 %v1125
    %1542 = vmatpush1.msra.mxu0 %v1124
    %1543 = vmatprep.subr.mxu0 %v1127
    %1544 = vmatpush1.msra.mxu0 %v1126
    %1545 = vmatprep.subr.mxu0 %v1129
    %1546 = vmatpush1.msra.mxu0 %v1128
    %1547 = vmatprep.subr.mxu0 %v1131
    %1548 = vmatpush1.msra.mxu0 %v1130
    %1549 = vmatprep.subr.mxu0 %v1133
    %1550 = vmatpush1.msra.mxu0 %v1132
    %1551 = vmatprep.subr.mxu0 %v1135
    %1552 = vmatpush1.msra.mxu0 %v1134
    %1553 = vmatprep.subr.mxu0 %v1137
    %1554 = vmatpush1.msra.mxu0 %v1136
    %1555 = vmatprep.subr.mxu0 %v1139
    %1556 = vmatpush1.msra.mxu0 %v1138
    %1557 = vmatprep.subr.mxu0 %v1141
    %1558 = vmatpush1.msra.mxu0 %v1140
    %1559 = vmatprep.subr.mxu0 %v1143
    %1560 = vmatpush1.msra.mxu0 %v1142
    %1561 = vmatprep.subr.mxu0 %v1145
    %1562 = vmatpush1.msra.mxu0 %v1144
    %1563 = vmatprep.subr.mxu0 %v1147
    %1564 = vmatpush1.msra.mxu0 %v1146
    %1565 = vmatprep.subr.mxu0 %v1149
    %1566 = vmatpush1.msra.mxu0 %v1148
    %1567 = vmatprep.subr.mxu0 %v1151
    %1568 = vmatpush1.msra.mxu0 %v1150
    %1569 = vmatprep.subr.mxu0 %v1153
    %1570 = vmatpush1.msra.mxu0 %v1152
    %1571 = vmatprep.subr.mxu0 %v1155
    %1572 = vmatpush1.msra.mxu0 %v1154
    %1573 = vmatprep.subr.mxu0 %v1157
    %1574 = vmatpush1.msra.mxu0 %v1156
    %1575 = vmatprep.subr.mxu0 %v1159
    %1576 = vmatpush1.msra.mxu0 %v1158
    %1577 = vmatprep.subr.mxu0 %v1161
    %1578 = vmatpush1.msra.mxu0 %v1160
    %1579 = vmatprep.subr.mxu0 %v1163
    %1580 = vmatpush1.msra.mxu0 %v1162
    %1581 = vmatprep.subr.mxu0 %v1165
    %1582 = vmatpush1.msra.mxu0 %v1164
    %1583 = vmatprep.subr.mxu0 %v1167
    %1584 = vmatpush1.msra.mxu0 %v1166
    %1585 = vmatprep.subr.mxu0 %v1169
    %1586 = vmatpush1.msra.mxu0 %v1168
    %1587 = vmatprep.mubr.f32.mxu0 %v291
    %1588 = vmatmul.mubr.f32.gmra.mrb[0].mxu0 %v289
    %v1589 = vpop.f32.mrb[0].mxu0
    %v1590 = vadd.f32 %v1519, %v1589
    %v1591 = vpop.f32.mrb[0].mxu0
    %v1592 = vadd.f32 %v1521, %v1591
    %1593 = vdwg.mxu0
    %v1594 = vld [vmem:[%s13] sm:$0x3]
    %v1596 = vlaneseq
    %v1597 = vshrl.u32 %v1596, 7
    %v1598 = vsub.s32 0, %v1597
    %v1599 = vrot.slane %v1594, %v1598
    %v1600 = vlaneseq
    %v1601 = vshrl.u32 %v1600, 7
    %v1602 = vsub.s32 1, %v1601
    %v1603 = vrot.slane %v1594, %v1602
    %v1606 = vadd.f32 %v1590, %v1599
    %v1607 = vadd.f32 %v1592, %v1603
    %v1608 = vmax.f32 %v1606, 0.0
    %v1609 = vmax.f32 %v1607, 0.0
    %v1610 = vld [vmem:[%s14] sm:$0xff]
    %v1611 = vld [vmem:[%s14 + $0x8] sm:$0xff]
    %v1612 = vld [vmem:[%s14 + $0x10] sm:$0xff]
    %v1613 = vld [vmem:[%s14 + $0x18] sm:$0xff]
    %v1614 = vld [vmem:[%s14 + $0x20] sm:$0xff]
    %v1615 = vld [vmem:[%s14 + $0x28] sm:$0xff]
    %v1616 = vld [vmem:[%s14 + $0x30] sm:$0xff]
    %v1617 = vld [vmem:[%s14 + $0x38] sm:$0xff]
    %v1618 = vld [vmem:[%s14 + $0x40] sm:$0xff]
    %v1619 = vld [vmem:[%s14 + $0x48] sm:$0xff]
    %v1620 = vld [vmem:[%s14 + $0x50] sm:$0xff]
    %v1621 = vld [vmem:[%s14 + $0x58] sm:$0xff]
    %v1622 = vld [vmem:[%s14 + $0x60] sm:$0xff]
    %v1623 = vld [vmem:[%s14 + $0x68] sm:$0xff]
    %v1624 = vld [vmem:[%s14 + $0x70] sm:$0xff]
    %v1625 = vld [vmem:[%s14 + $0x78] sm:$0xff]
    %v1626 = vld [vmem:[%s14 + $0x80] sm:$0xff]
    %v1627 = vld [vmem:[%s14 + $0x88] sm:$0xff]
    %v1628 = vld [vmem:[%s14 + $0x90] sm:$0xff]
    %v1629 = vld [vmem:[%s14 + $0x98] sm:$0xff]
    %v1630 = vld [vmem:[%s14 + $0xa0] sm:$0xff]
    %v1631 = vld [vmem:[%s14 + $0xa8] sm:$0xff]
    %v1632 = vld [vmem:[%s14 + $0xb0] sm:$0xff]
    %v1633 = vld [vmem:[%s14 + $0xb8] sm:$0xff]
    %v1634 = vld [vmem:[%s14 + $0xc0] sm:$0xff]
    %v1635 = vld [vmem:[%s14 + $0xc8] sm:$0xff]
    %v1636 = vld [vmem:[%s14 + $0xd0] sm:$0xff]
    %v1637 = vld [vmem:[%s14 + $0xd8] sm:$0xff]
    %v1638 = vld [vmem:[%s14 + $0xe0] sm:$0xff]
    %v1639 = vld [vmem:[%s14 + $0xe8] sm:$0xff]
    %v1640 = vld [vmem:[%s14 + $0xf0] sm:$0xff]
    %v1641 = vld [vmem:[%s14 + $0xf8] sm:$0xff]
    %v1642 = vld [vmem:[%s14 + $0x100] sm:$0xff]
    %v1643 = vld [vmem:[%s14 + $0x108] sm:$0xff]
    %v1644 = vld [vmem:[%s14 + $0x110] sm:$0xff]
    %v1645 = vld [vmem:[%s14 + $0x118] sm:$0xff]
    %v1646 = vld [vmem:[%s14 + $0x120] sm:$0xff]
    %v1647 = vld [vmem:[%s14 + $0x128] sm:$0xff]
    %v1648 = vld [vmem:[%s14 + $0x130] sm:$0xff]
    %v1649 = vld [vmem:[%s14 + $0x138] sm:$0xff]
    %v1650 = vld [vmem:[%s14 + $0x140] sm:$0xff]
    %v1651 = vld [vmem:[%s14 + $0x148] sm:$0xff]
    %v1652 = vld [vmem:[%s14 + $0x150] sm:$0xff]
    %v1653 = vld [vmem:[%s14 + $0x158] sm:$0xff]
    %v1654 = vld [vmem:[%s14 + $0x160] sm:$0xff]
    %v1655 = vld [vmem:[%s14 + $0x168] sm:$0xff]
    %v1656 = vld [vmem:[%s14 + $0x170] sm:$0xff]
    %v1657 = vld [vmem:[%s14 + $0x178] sm:$0xff]
    %v1658 = vld [vmem:[%s14 + $0x180] sm:$0xff]
    %v1659 = vld [vmem:[%s14 + $0x188] sm:$0xff]
    %v1660 = vld [vmem:[%s14 + $0x190] sm:$0xff]
    %v1661 = vld [vmem:[%s14 + $0x198] sm:$0xff]
    %v1662 = vld [vmem:[%s14 + $0x1a0] sm:$0xff]
    %v1663 = vld [vmem:[%s14 + $0x1a8] sm:$0xff]
    %v1664 = vld [vmem:[%s14 + $0x1b0] sm:$0xff]
    %v1665 = vld [vmem:[%s14 + $0x1b8] sm:$0xff]
    %v1666 = vld [vmem:[%s14 + $0x1c0] sm:$0xff]
    %v1667 = vld [vmem:[%s14 + $0x1c8] sm:$0xff]
    %v1668 = vld [vmem:[%s14 + $0x1d0] sm:$0xff]
    %v1669 = vld [vmem:[%s14 + $0x1d8] sm:$0xff]
    %v1670 = vld [vmem:[%s14 + $0x1e0] sm:$0xff]
    %v1671 = vld [vmem:[%s14 + $0x1e8] sm:$0xff]
    %v1672 = vld [vmem:[%s14 + $0x1f0] sm:$0xff]
    %v1673 = vld [vmem:[%s14 + $0x1f8] sm:$0xff]
    %v1674 = vld [vmem:[%s15] sm:$0x3]
    %v1676 = vlaneseq
    %v1677 = vshrl.u32 %v1676, 7
    %v1678 = vsub.s32 0, %v1677
    %v1679 = vrot.slane %v1674, %v1678
    %v1680 = vlaneseq
    %v1681 = vshrl.u32 %v1680, 7
    %v1682 = vsub.s32 1, %v1681
    %v1683 = vrot.slane %v1674, %v1682
    %1686 = vmatprep.subr.mxu0 %v1611
    %1687 = vmatpush1.msra.mxu0 %v1610
    %1688 = vmatprep.subr.mxu0 %v1613
    %1689 = vmatpush1.msra.mxu0 %v1612
    %1690 = vmatprep.subr.mxu0 %v1615
    %1691 = vmatpush1.msra.mxu0 %v1614
    %1692 = vmatprep.subr.mxu0 %v1617
    %1693 = vmatpush1.msra.mxu0 %v1616
    %1694 = vmatprep.subr.mxu0 %v1619
    %1695 = vmatpush1.msra.mxu0 %v1618
    %1696 = vmatprep.subr.mxu0 %v1621
    %1697 = vmatpush1.msra.mxu0 %v1620
    %1698 = vmatprep.subr.mxu0 %v1623
    %1699 = vmatpush1.msra.mxu0 %v1622
    %1700 = vmatprep.subr.mxu0 %v1625
    %1701 = vmatpush1.msra.mxu0 %v1624
    %1702 = vmatprep.subr.mxu0 %v1627
    %1703 = vmatpush1.msra.mxu0 %v1626
    %1704 = vmatprep.subr.mxu0 %v1629
    %1705 = vmatpush1.msra.mxu0 %v1628
    %1706 = vmatprep.subr.mxu0 %v1631
    %1707 = vmatpush1.msra.mxu0 %v1630
    %1708 = vmatprep.subr.mxu0 %v1633
    %1709 = vmatpush1.msra.mxu0 %v1632
    %1710 = vmatprep.subr.mxu0 %v1635
    %1711 = vmatpush1.msra.mxu0 %v1634
    %1712 = vmatprep.subr.mxu0 %v1637
    %1713 = vmatpush1.msra.mxu0 %v1636
    %1714 = vmatprep.subr.mxu0 %v1639
    %1715 = vmatpush1.msra.mxu0 %v1638
    %1716 = vmatprep.subr.mxu0 %v1641
    %1717 = vmatpush1.msra.mxu0 %v1640
    %1718 = vmatprep.subr.mxu0 %v1643
    %1719 = vmatpush1.msra.mxu0 %v1642
    %1720 = vmatprep.subr.mxu0 %v1645
    %1721 = vmatpush1.msra.mxu0 %v1644
    %1722 = vmatprep.subr.mxu0 %v1647
    %1723 = vmatpush1.msra.mxu0 %v1646
    %1724 = vmatprep.subr.mxu0 %v1649
    %1725 = vmatpush1.msra.mxu0 %v1648
    %1726 = vmatprep.subr.mxu0 %v1651
    %1727 = vmatpush1.msra.mxu0 %v1650
    %1728 = vmatprep.subr.mxu0 %v1653
    %1729 = vmatpush1.msra.mxu0 %v1652
    %1730 = vmatprep.subr.mxu0 %v1655
    %1731 = vmatpush1.msra.mxu0 %v1654
    %1732 = vmatprep.subr.mxu0 %v1657
    %1733 = vmatpush1.msra.mxu0 %v1656
    %1734 = vmatprep.subr.mxu0 %v1659
    %1735 = vmatpush1.msra.mxu0 %v1658
    %1736 = vmatprep.subr.mxu0 %v1661
    %1737 = vmatpush1.msra.mxu0 %v1660
    %1738 = vmatprep.subr.mxu0 %v1663
    %1739 = vmatpush1.msra.mxu0 %v1662
    %1740 = vmatprep.subr.mxu0 %v1665
    %1741 = vmatpush1.msra.mxu0 %v1664
    %1742 = vmatprep.subr.mxu0 %v1667
    %1743 = vmatpush1.msra.mxu0 %v1666
    %1744 = vmatprep.subr.mxu0 %v1669
    %1745 = vmatpush1.msra.mxu0 %v1668
    %1746 = vmatprep.subr.mxu0 %v1671
    %1747 = vmatpush1.msra.mxu0 %v1670
    %1748 = vmatprep.subr.mxu0 %v1673
    %1749 = vmatpush1.msra.mxu0 %v1672
    %1750 = vmatprep.mubr.f32.mxu0 %v1609
    %1751 = vmatmul.mubr.f32.gmra.mrb[0].mxu0 %v1608
    %v1752 = vpop.f32.mrb[0].mxu0
    %v1753 = vadd.f32 %v1679, %v1752
    %v1754 = vpop.f32.mrb[0].mxu0
    %v1755 = vadd.f32 %v1683, %v1754
    %1756 = vdwg.mxu0
    %v1757 = vmax.f32 %v1753, 0.0
    %v1758 = vmax.f32 %v1755, 0.0
    %v1759 = vld [vmem:[%s16] sm:$0xff]
    %v1760 = vld [vmem:[%s16 + $0x8] sm:$0xff]
    %v1761 = vld [vmem:[%s16 + $0x10] sm:$0xff]
    %v1762 = vld [vmem:[%s16 + $0x18] sm:$0xff]
    %v1763 = vld [vmem:[%s16 + $0x20] sm:$0xff]
    %v1764 = vld [vmem:[%s16 + $0x28] sm:$0xff]
    %v1765 = vld [vmem:[%s16 + $0x30] sm:$0xff]
    %v1766 = vld [vmem:[%s16 + $0x38] sm:$0xff]
    %v1767 = vld [vmem:[%s16 + $0x40] sm:$0xff]
    %v1768 = vld [vmem:[%s16 + $0x48] sm:$0xff]
    %v1769 = vld [vmem:[%s16 + $0x50] sm:$0xff]
    %v1770 = vld [vmem:[%s16 + $0x58] sm:$0xff]
    %v1771 = vld [vmem:[%s16 + $0x60] sm:$0xff]
    %v1772 = vld [vmem:[%s16 + $0x68] sm:$0xff]
    %v1773 = vld [vmem:[%s16 + $0x70] sm:$0xff]
    %v1774 = vld [vmem:[%s16 + $0x78] sm:$0xff]
    %v1775 = vld [vmem:[%s16 + $0x80] sm:$0xff]
    %v1776 = vld [vmem:[%s16 + $0x88] sm:$0xff]
    %v1777 = vld [vmem:[%s16 + $0x90] sm:$0xff]
    %v1778 = vld [vmem:[%s16 + $0x98] sm:$0xff]
    %v1779 = vld [vmem:[%s16 + $0xa0] sm:$0xff]
    %v1780 = vld [vmem:[%s16 + $0xa8] sm:$0xff]
    %v1781 = vld [vmem:[%s16 + $0xb0] sm:$0xff]
    %v1782 = vld [vmem:[%s16 + $0xb8] sm:$0xff]
    %v1783 = vld [vmem:[%s16 + $0xc0] sm:$0xff]
    %v1784 = vld [vmem:[%s16 + $0xc8] sm:$0xff]
    %v1785 = vld [vmem:[%s16 + $0xd0] sm:$0xff]
    %v1786 = vld [vmem:[%s16 + $0xd8] sm:$0xff]
    %v1787 = vld [vmem:[%s16 + $0xe0] sm:$0xff]
    %v1788 = vld [vmem:[%s16 + $0xe8] sm:$0xff]
    %v1789 = vld [vmem:[%s16 + $0xf0] sm:$0xff]
    %v1790 = vld [vmem:[%s16 + $0xf8] sm:$0xff]
    %v1791 = vld [vmem:[%s17] sm:$0x1]
    %v1793 = vlaneseq
    %v1794 = vshrl.u32 %v1793, 7
    %v1795 = vsub.s32 0, %v1794
    %v1796 = vrot.slane %v1791, %v1795
    %1798 = vmatprep.subr.mxu0 0.0
    %1799 = vmatpush1.msra.mxu0 %v1759
    %1800 = vmatprep.subr.mxu0 0.0
    %1801 = vmatpush1.msra.mxu0 %v1760
    %1802 = vmatprep.subr.mxu0 0.0
    %1803 = vmatpush1.msra.mxu0 %v1761
    %1804 = vmatprep.subr.mxu0 0.0
    %1805 = vmatpush1.msra.mxu0 %v1762
    %1806 = vmatprep.subr.mxu0 0.0
    %1807 = vmatpush1.msra.mxu0 %v1763
    %1808 = vmatprep.subr.mxu0 0.0
    %1809 = vmatpush1.msra.mxu0 %v1764
    %1810 = vmatprep.subr.mxu0 0.0
    %1811 = vmatpush1.msra.mxu0 %v1765
    %1812 = vmatprep.subr.mxu0 0.0
    %1813 = vmatpush1.msra.mxu0 %v1766
    %1814 = vmatprep.subr.mxu0 0.0
    %1815 = vmatpush1.msra.mxu0 %v1767
    %1816 = vmatprep.subr.mxu0 0.0
    %1817 = vmatpush1.msra.mxu0 %v1768
    %1818 = vmatprep.subr.mxu0 0.0
    %1819 = vmatpush1.msra.mxu0 %v1769
    %1820 = vmatprep.subr.mxu0 0.0
    %1821 = vmatpush1.msra.mxu0 %v1770
    %1822 = vmatprep.subr.mxu0 0.0
    %1823 = vmatpush1.msra.mxu0 %v1771
    %1824 = vmatprep.subr.mxu0 0.0
    %1825 = vmatpush1.msra.mxu0 %v1772
    %1826 = vmatprep.subr.mxu0 0.0
    %1827 = vmatpush1.msra.mxu0 %v1773
    %1828 = vmatprep.subr.mxu0 0.0
    %1829 = vmatpush1.msra.mxu0 %v1774
    %1830 = vmatprep.subr.mxu0 0.0
    %1831 = vmatpush1.msra.mxu0 %v1775
    %1832 = vmatprep.subr.mxu0 0.0
    %1833 = vmatpush1.msra.mxu0 %v1776
    %1834 = vmatprep.subr.mxu0 0.0
    %1835 = vmatpush1.msra.mxu0 %v1777
    %1836 = vmatprep.subr.mxu0 0.0
    %1837 = vmatpush1.msra.mxu0 %v1778
    %1838 = vmatprep.subr.mxu0 0.0
    %1839 = vmatpush1.msra.mxu0 %v1779
    %1840 = vmatprep.subr.mxu0 0.0
    %1841 = vmatpush1.msra.mxu0 %v1780
    %1842 = vmatprep.subr.mxu0 0.0
    %1843 = vmatpush1.msra.mxu0 %v1781
    %1844 = vmatprep.subr.mxu0 0.0
    %1845 = vmatpush1.msra.mxu0 %v1782
    %1846 = vmatprep.subr.mxu0 0.0
    %1847 = vmatpush1.msra.mxu0 %v1783
    %1848 = vmatprep.subr.mxu0 0.0
    %1849 = vmatpush1.msra.mxu0 %v1784
    %1850 = vmatprep.subr.mxu0 0.0
    %1851 = vmatpush1.msra.mxu0 %v1785
    %1852 = vmatprep.subr.mxu0 0.0
    %1853 = vmatpush1.msra.mxu0 %v1786
    %1854 = vmatprep.subr.mxu0 0.0
    %1855 = vmatpush1.msra.mxu0 %v1787
    %1856 = vmatprep.subr.mxu0 0.0
    %1857 = vmatpush1.msra.mxu0 %v1788
    %1858 = vmatprep.subr.mxu0 0.0
    %1859 = vmatpush1.msra.mxu0 %v1789
    %1860 = vmatprep.subr.mxu0 0.0
    %1861 = vmatpush1.msra.mxu0 %v1790
    %1862 = vmatprep.mubr.f32.mxu0 %v1758
    %1863 = vmatmul.mubr.f32.gmra.mrb[0].mxu0 %v1757
    %v1864 = vpop.f32.mrb[0].mxu0
    %v1865 = vadd.f32 %v1796, %v1864
    %v1866 = vpop.f32.mrb[0].mxu0
    %1867 = vdwg.mxu0
    %v1868 = vld [vmem:[%s2] sm:$0x3]
    %v1869 = vsub.f32 %v967, %v1302
    %v1870 = vsub.f32 %v969, %v1303
    %v1871 = vsub.f32 %v1038, %v1304
    %v1872 = vsub.f32 %v1040, %v1305
    %v1873 = vmul.f32 %v1869, %v1869
    %v1874 = vmul.f32 %v1870, %v1870
    %v1875 = vmul.f32 %v1871, %v1871
    %v1876 = vmul.f32 %v1872, %v1872
    %vm1877 = vcmask 1041408
    %v1878 = vsel %vm1877, %v1873, 0.0
    %v1879 = vsel %vm1877, %v1874, 0.0
    %v1880 = vadd.f32 %v1878, %v1879
    %v1881 = vsel %vm1877, %v1875, 0.0
    %v1882 = vadd.f32 %v1880, %v1881
    %v1883 = vsel %vm1877, %v1876, 0.0
    %v1884 = vadd.f32 %v1882, %v1883
    %1885 = vadd.xlane.f32.xlu0 %v1884
    %v1886 = vpop.xlane.xlu0 %1885
    %v1887 = vmul.f32 %v1886, 0.0009765625
    %v1888 = vmul.f32 %v1887, %v1868
    %vm1889 = vcmask 1024
    %1890 = vst.msk [vmem:[%s18] sm:$0x3] %vm1889, %v1888
    %v1891 = vsel %vm1889, %v1888, 0.0
    %v1892 = vrot.slane %v1891, 4
    %v1893 = vadd.f32 %v1891, %v1892
    %v1894 = vrot.slane %v1893, 2
    %v1895 = vadd.f32 %v1893, %v1894
    %v1896 = vrot.slane %v1895, 1
    %v1897 = vadd.f32 %v1895, %v1896
    %v1898 = vrcp.pop 2.0
    %v1899 = vmul.f32 %v1897, %v1898
    %vm1900 = vcmask 0
    %1901 = vst.msk [vmem:[#allocation4] sm:$0x1] %vm1900, %v1899
    %vm1902 = vcmask 41984
    %v1903 = vsel %vm1902, %v1865, -inf
    %1904 = vmax.xlane.f32.xlu0 %v1903
    %v1905 = vpop.xlane.xlu0 %1904
    %v1906 = vsub.f32 %v1865, %v1905
    %v1907 = vmul.f32 %v1906, 1.442695
    %v1908 = vpow.pop %v1907
    %v1909 = vsel %vm1902, %v1908, 0.0
    %1910 = vadd.xlane.f32.xlu0 %v1909
    %v1911 = vpop.xlane.xlu0 %1910
    %v1912 = vlog2.pop %v1911
    %v1913 = vmul.f32 %v1912, 0.6931472
    %v1914 = vadd.f32 %v1905, %v1913
    %v1915 = vmul.f32 %v1865, %v301
    %v1916 = vsel %vm1902, %v1915, 0.0
    %1917 = vadd.xlane.f32.xlu0 %v1916
    %v1918 = vpop.xlane.xlu0 %1917
    %v1919 = vsub.f32 %v1914, %v1918
    %v1920 = vmul.f32 %v1919, %v1868
    %v1921 = vsel %vm1889, %v1920, 0.0
    %v1922 = vrot.slane %v1921, 4
    %v1923 = vadd.f32 %v1921, %v1922
    %v1924 = vrot.slane %v1923, 2
    %v1925 = vadd.f32 %v1923, %v1924
    %v1926 = vrot.slane %v1925, 1
    %v1927 = vadd.f32 %v1925, %v1926
    %v1928 = vmul.f32 %v1927, %v1898
    %1929 = vst.msk [vmem:[#allocation2] sm:$0x1] %vm1900, %v1928
    // Predicated region
    $region74: #{cnn_icm_forward.7} parent=1 // pred_check
      _
    $region75: #{cnn_icm_forward.7} parent=1 // pred_check_branch
      %1931 = sbr.rel (0) target = $region77
    $region76: #{cnn_icm_forward.7} parent=1 // pred_region
      _
    $region77: #{cnn_icm_forward.7} parent=1 // pred_fallthru
      _
    // Predicated region
    $region78: #{cnn_icm_forward.7} parent=1 // pred_check
      _
    $region79: #{cnn_icm_forward.7} parent=1 // pred_check_branch
      %1933 = sbr.rel (0) target = $region81
    $region80: #{cnn_icm_forward.7} parent=1 // pred_region
      %s1935 = ssub.s32 16, 16
      %1936 = vsyncadd [#allocation3], %s1935
      %s1938 = sshll.u32 [#allocation2], 4
      %s1939 = int_to_ptr.vmem [resolvable:$true] %s1938
      %1941 = dma.vmem_to_hbm [thread:$0]  %s1939, 16, %s19, [#allocation3]
    $region81: #{cnn_icm_forward.7} parent=1 // pred_fallthru
      _
    // Predicated region
    $region82: #{cnn_icm_forward.7} parent=1 // pred_check
      _
    $region83: #{cnn_icm_forward.7} parent=1 // pred_check_branch
      %1943 = sbr.rel (0) target = $region85
    $region84: #{cnn_icm_forward.7} parent=1 // pred_region
      %s1945 = ssub.s32 16, 16
      %1946 = vsyncadd [#allocation5], %s1945
      %s1948 = sshll.u32 [#allocation4], 4
      %s1949 = int_to_ptr.vmem [resolvable:$true] %s1948
      %1951 = dma.vmem_to_hbm [thread:$0]  %s1949, 16, %s20, [#allocation5]
    $region85: #{cnn_icm_forward.7} parent=1 // pred_fallthru
      _
    // Predicated region
    $region86: #{cnn_icm_forward.7} parent=1 // pred_check
      _
    $region87: #{cnn_icm_forward.7} parent=1 // pred_check_branch
      %1953 = sbr.rel (0) target = $region89
    $region88: #{cnn_icm_forward.7} parent=1 // pred_region
      _
    $region89: #{cnn_icm_forward.7} parent=1 // pred_fallthru
      _
    // Predicated region
    $region90: #{cnn_icm_forward.7} parent=1 // pred_check
      _
    $region91: #{cnn_icm_forward.7} parent=1 // pred_check_branch
      %1955 = sbr.rel (0) target = $region93
    $region92: #{cnn_icm_forward.7} parent=1 // pred_region
      %1956 = dma.done [#allocation3], 16
    $region93: #{cnn_icm_forward.7} parent=1 // pred_fallthru
      _
    // Predicated region
    $region94: #{cnn_icm_forward.7} parent=1 // pred_check
      _
    $region95: #{cnn_icm_forward.7} parent=1 // pred_check_branch
      %1958 = sbr.rel (0) target = $region97
    $region96: #{cnn_icm_forward.7} parent=1 // pred_region
      %1959 = dma.done [#allocation5], 16
    $region97: #{cnn_icm_forward.7} parent=1 // pred_fallthru
      _
    %1960 = vsyncpa [#allocation3], 1
    %1961 = vsyncpa [#allocation5], 1

</llo_original>
